<compile_context>
chip_gen: v6e
topology: v6e:2x2x1
jax: 0.10.0
libtpu: 0.0.40
codegen_flags: <defaults>
</compile_context>

<pallas_src>
import numpy as np
import jax
import jax.numpy as jnp
from jax.experimental import pallas as pl
from jax.experimental.pallas import tpu as pltpu


def _round_up(n, m):
    return ((n + m - 1) // m) * m


def _vmem_limit_bytes():
    # Half of physical VMEM: ~64 MiB on v5e/v6e (128 MiB), 32 MiB on v7x (64 MiB).
    try:
        cap = int(pltpu.get_tpu_info().vmem_capacity_bytes)
    except Exception:
        cap = 64 << 20
    return max(32 << 20, min(96 << 20, cap // 2))


def _pick_tb(B, tb_max=512):
    """Sublane-aligned batch tile: big tiles for big B, tiny pad for tiny B,
    and >= 2 grid tiles when B allows (v7x 2-TensorCore sharding)."""
    if B >= 2 * tb_max:
        return tb_max
    tb = _round_up(max(pl.cdiv(B, 2), 1), 16)   # 16 = bf16 sublane packing
    return max(16, min(tb, tb_max))


# ----------------------------------------------------------------------------
# Pallas kernel: one batch tile end-to-end (5 MXU matmuls, LeakyReLU, softmax).
# Weights are bf16 and VMEM-resident (single-buffered) across the batch grid.
# ----------------------------------------------------------------------------
def selfattn_roi_kernel(
    x_ref,                    # (TB, Dp)   bf16 activations (Din lane-padded)
    wenc_ref, benc_ref,       # (Dp, Ep) bf16, (1, Ep) f32   block-diag enc, BN folded
    wattn_ref, battn_ref,     # (Ep, Ep) bf16, (1, Ep) f32   fused v_proj @ out_proj
    w1_ref, b1_ref,           # (Ep, 1024) bf16, (1, 1024) f32  regressor lin1, BN folded
    w2_ref, b2_ref,           # (1024, 384) bf16, (1, 384) f32  regressor lin2 (lane-padded)
    w3_ref, b3_ref,           # (384, 256) bf16, (1, 256) f32   classifier (pad bias -1e30)
    reg_ref,                  # out: (TB, 384) f32
    ypred_ref,                # out: (TB, 256) f32
):
    x = x_ref[...]                                            # already bf16

    # --- per-ROI encoders as one block-diagonal matmul (BN folded) -----------
    h = jnp.dot(x, wenc_ref[...], preferred_element_type=jnp.float32) + benc_ref[...]
    h = jnp.maximum(h, 0.3 * h)                               # LeakyReLU(0.3); pad lanes stay 0

    # --- MultiheadAttention, seq_len == 1 => out_proj(v_proj(.)), fused ------
    a = jnp.dot(h.astype(jnp.bfloat16), wattn_ref[...],
                preferred_element_type=jnp.float32) + battn_ref[...]

    # --- dropout (eval) = identity; regressor (BN folded) --------------------
    r = jnp.dot(a.astype(jnp.bfloat16), w1_ref[...],
                preferred_element_type=jnp.float32) + b1_ref[...]
    r = jnp.maximum(r, 0.1 * r)                               # LeakyReLU(0.1)

    reg = jnp.dot(r.astype(jnp.bfloat16), w2_ref[...],
                  preferred_element_type=jnp.float32) + b2_ref[...]
    reg_ref[...] = reg.astype(reg_ref.dtype)                  # lane-dense (TB, 384) store

    # --- classifier + softmax(dim=-1); padded logits have bias -1e30 ---------
    logits = jnp.dot(reg.astype(jnp.bfloat16), w3_ref[...],
                     preferred_element_type=jnp.float32) + b3_ref[...]
    m = jnp.max(logits, axis=-1, keepdims=True)
    e = jnp.exp(logits - m)                                   # exp(-1e30 - m) == 0 exactly
    denom = jnp.sum(e, axis=-1, keepdims=True)
    # approx reciprocal (EUP): ~1e-4 relative error, probabilities may not sum
    # to exactly 1; swap to e / denom if exact normalization is ever required.
    ypred_ref[...] = (e * pl.reciprocal(denom, approx=True)).astype(ypred_ref.dtype)


def _build_call(tb, b_pad, d_in_pad, reg_pad, cls_pad, weights, single_buffer):
    def const_spec(a):
        # Whole array as one block, constant index_map -> VMEM-resident.
        if single_buffer:
            return pl.BlockSpec(a.shape, lambda i: (0,) * a.ndim,
                                pipeline_mode=pl.Buffered(1))
        return pl.BlockSpec(a.shape, lambda i: (0,) * a.ndim)

    in_specs = [pl.BlockSpec((tb, d_in_pad), lambda i: (i, 0))] + \
               [const_spec(a) for a in weights]
    out_specs = (pl.BlockSpec((tb, reg_pad), lambda i: (i, 0)),
                 pl.BlockSpec((tb, cls_pad), lambda i: (i, 0)))

    return pl.pallas_call(
        selfattn_roi_kernel,
        grid=(b_pad // tb,),
        out_shape=(jax.ShapeDtypeStruct((b_pad, reg_pad), jnp.float32),
                   jax.ShapeDtypeStruct((b_pad, cls_pad), jnp.float32)),
        in_specs=in_specs,
        out_specs=out_specs,
        compiler_params=pltpu.CompilerParams(
            dimension_semantics=("parallel",),
            vmem_limit_bytes=_vmem_limit_bytes()),
    )


def selfattn_roi_forward(x, fused, *, tb_max=512):
    """Batch-tiled pallas_call. Pads batch to a multiple of the chosen tile and
    the feature/output lanes to multiples of 128; slices all padding off."""
    B, d_in = x.shape
    d_in_pad = fused["wenc"].shape[0]
    reg_pad = fused["w2"].shape[1]     # 384
    cls_pad = fused["w3"].shape[1]     # 256

    tb = _pick_tb(B, tb_max)
    b_pad = pl.cdiv(B, tb) * tb
    xp = jnp.pad(x, ((0, b_pad - B), (0, d_in_pad - d_in))).astype(jnp.bfloat16)

    weights = (fused["wenc"], fused["benc"], fused["wattn"], fused["battn"],
               fused["w1"], fused["b1"], fused["w2"], fused["b2"],
               fused["w3"], fused["b3"])

    try:
        call = _build_call(tb, b_pad, d_in_pad, reg_pad, cls_pad, weights,
                           single_buffer=True)
        reg_p, yp_p = call(xp, *weights)
    except Exception:
        # Fallback for JAX versions that reject pl.Buffered(1).
        call = _build_call(tb, b_pad, d_in_pad, reg_pad, cls_pad, weights,
                           single_buffer=False)
        reg_p, yp_p = call(xp, *weights)

    return reg_p[:B, :300], yp_p[:B, :180]


# ----------------------------------------------------------------------------
# Deterministic parameter construction (synthetic stand-in for the .npy lookups)
# ----------------------------------------------------------------------------
def make_params(key, sizes, reduced):
    n = len(sizes)
    d_in = int(np.sum(sizes))
    c_dim = int(np.sum(reduced))
    e_dim = c_dim + 3                     # F.pad(concat, (1, 2))
    keys = jax.random.split(key, 8)

    def lin(k, din, dout, scale=0.05):
        kw, kb = jax.random.split(k)
        return (scale * jax.random.normal(kw, (din, dout), jnp.float32),
                scale * jax.random.normal(kb, (1, dout), jnp.float32))

    def bn_fold(k, dim, eps=1e-5):
        kg, kb, km, kv = jax.random.split(k, 4)
        gamma = 1.0 + 0.1 * jax.random.normal(kg, (1, dim), jnp.float32)
        beta = 0.1 * jax.random.normal(kb, (1, dim), jnp.float32)
        mean = 0.1 * jax.random.normal(km, (1, dim), jnp.float32)
        var = jnp.abs(1.0 + 0.1 * jax.random.normal(kv, (1, dim), jnp.float32))
        scale = gamma / jnp.sqrt(var + eps)
        return scale, beta - mean * scale

    roi_w, roi_b = [], []
    for i in range(n):
        w_i, b_i = lin(jax.random.fold_in(keys[0], i), int(sizes[i]), int(reduced[i]))
        roi_w.append(w_i)
        roi_b.append(b_i)
    s1, t1 = bn_fold(keys[1], c_dim)
    wv, bv = lin(keys[2], e_dim, e_dim)           # v_proj (x @ W layout)
    wo, bo = lin(keys[3], e_dim, e_dim)           # out_proj
    w1, b1 = lin(keys[4], e_dim, 1024)
    s2, t2 = bn_fold(keys[5], 1024)
    w2, b2 = lin(keys[6], 1024, 300)
    w3, b3 = lin(keys[7], 300, 180)

    raw = dict(roi_w=roi_w, roi_b=roi_b, s1=s1, t1=t1, wv=wv, bv=bv, wo=wo, bo=bo,
               w1=w1, b1=b1, s2=s2, t2=t2, w2=w2, b2=b2, w3=w3, b3=b3)

    # --- offline fold / fuse / lane-pad / bf16-quantize for the kernel -------
    d_in_pad = _round_up(d_in, 128)   # 128 : lane-dense x loads
    e_pad = _round_up(e_dim, 128)     # 128 : lane-dense h / a intermediates
    reg_pad = _round_up(300, 128)     # 384
    cls_pad = _round_up(180, 128)     # 256

    wenc = jnp.zeros((d_in_pad, e_pad), jnp.float32)
    benc = jnp.zeros((1, e_pad), jnp.float32)
    in_off, out_off, c_off = 0, 1, 0              # column 0 = F.pad left zero
    for i in range(n):
        s, r = int(sizes[i]), int(reduced[i])
        sc = s1[:, c_off:c_off + r]
        sh = t1[:, c_off:c_off + r]
        wenc = wenc.at[in_off:in_off + s, out_off:out_off + r].set(roi_w[i] * sc)
        benc = benc.at[:, out_off:out_off + r].set(roi_b[i] * sc + sh)
        in_off += s
        out_off += r
        c_off += r
    # columns e_dim-2 .. e_pad-1 stay zero = F.pad right zeros + lane padding

    wattn = jnp.zeros((e_pad, e_pad), jnp.float32).at[:e_dim, :e_dim].set(wv @ wo)
    battn = jnp.zeros((1, e_pad), jnp.float32).at[:, :e_dim].set(bv @ wo + bo)
    w1p = jnp.zeros((e_pad, 1024), jnp.float32).at[:e_dim, :].set(w1 * s2)
    b1f = b1 * s2 + t2
    w2p = jnp.zeros((1024, reg_pad), jnp.float32).at[:, :300].set(w2)
    b2p = jnp.zeros((1, reg_pad), jnp.float32).at[:, :300].set(b2)
    w3p = jnp.zeros((reg_pad, cls_pad), jnp.float32).at[:300, :180].set(w3)
    b3p = jnp.full((1, cls_pad), -1e30, jnp.float32).at[:, :180].set(b3)

    bf16 = lambda a: a.astype(jnp.bfloat16)
    fused = dict(wenc=bf16(wenc), benc=benc,
                 wattn=bf16(wattn), battn=battn,
                 w1=bf16(w1p), b1=b1f,
                 w2=bf16(w2p), b2=b2p,
                 w3=bf16(w3p), b3=b3p)
    return raw, fused, d_in, e_dim


def ref_forward(x, raw, sizes, reduced):
    """Pure-JAX f32 reference following the PyTorch module structure."""
    def lrelu(v, slope):
        return jnp.where(v > 0, v, slope * v)

    outs = []
    idx, off = 0, 0
    for i in range(len(sizes)):
        s, r = int(sizes[i]), int(reduced[i])
        h = x[:, idx:idx + s] @ raw["roi_w"][i] + raw["roi_b"][i]
        h = h * raw["s1"][:, off:off + r] + raw["t1"][:, off:off + r]
        outs.append(lrelu(h, 0.3))
        idx += s
        off += r
    cat = jnp.concatenate(outs, axis=-1)
    cat = jnp.pad(cat, ((0, 0), (1, 2)))                       # F.pad(..., (1, 2))
    # MultiheadAttention with seq_len == 1: attention weight is exactly 1,
    # so attn_output = out_proj(v_proj(cat)).
    v = cat @ raw["wv"] + raw["bv"]
    attn = v @ raw["wo"] + raw["bo"]
    r1 = lrelu((attn @ raw["w1"] + raw["b1"]) * raw["s2"] + raw["t2"], 0.1)
    reg = r1 @ raw["w2"] + raw["b2"]
    logits = reg @ raw["w3"] + raw["b3"]
    ypred = jax.nn.softmax(logits, axis=-1)
    return reg, ypred


if __name__ == "__main__":
    # Synthetic stand-ins for sizes.npy / reduced_sizes.npy (small num_rois).
    SIZES = [5, 7, 3, 9, 4, 6, 8, 5]            # sum = 47
    REDUCED = [s // 2 for s in SIZES]           # sum = 21 -> E = 24 (divisible by 8 heads)
    BATCH = 2

    key = jax.random.PRNGKey(0)
    raw, fused, d_in, e_dim = make_params(key, SIZES, REDUCED)

    x = jax.random.normal(jax.random.fold_in(key, 999), (BATCH, d_in), jnp.float32)

    reg_out, y_pred = selfattn_roi_forward(x, fused)
    jax.block_until_ready((reg_out, y_pred))

    # correctness check against the pure-JAX f32 module-structure reference
    # (kernel uses bf16 weights/activations with f32 accumulation -> looser tol)
    reg_ref, y_ref = ref_forward(x, raw, SIZES, REDUCED)
    np.testing.assert_allclose(np.asarray(reg_out), np.asarray(reg_ref),
                               rtol=5e-2, atol=5e-3)
    np.testing.assert_allclose(np.asarray(y_pred), np.asarray(y_ref),
                               rtol=5e-2, atol=1e-3)
    assert reg_out.shape == (BATCH, 300) and y_pred.shape == (BATCH, 180)
    assert bool(jnp.all(jnp.isfinite(y_pred)))

    print("KERNEL_OK")
</pallas_src>

<mosaic_0001>
module attributes {stable_mosaic.version = 11 : i64} {
  func.func @selfattn_roi_kernel(%arg0: i32, %arg1: memref<16x128xbf16, #tpu.memory_space<vmem>>, %arg2: memref<128x128xbf16, #tpu.memory_space<vmem>>, %arg3: memref<1x128xf32, #tpu.memory_space<vmem>>, %arg4: memref<128x128xbf16, #tpu.memory_space<vmem>>, %arg5: memref<1x128xf32, #tpu.memory_space<vmem>>, %arg6: memref<128x1024xbf16, #tpu.memory_space<vmem>>, %arg7: memref<1x1024xf32, #tpu.memory_space<vmem>>, %arg8: memref<1024x384xbf16, #tpu.memory_space<vmem>>, %arg9: memref<1x384xf32, #tpu.memory_space<vmem>>, %arg10: memref<384x256xbf16, #tpu.memory_space<vmem>>, %arg11: memref<1x256xf32, #tpu.memory_space<vmem>>, %arg12: memref<16x384xf32, #tpu.memory_space<vmem>>, %arg13: memref<16x256xf32, #tpu.memory_space<vmem>>) attributes {dimension_semantics = [#tpu.dimension_semantics<parallel>], iteration_bounds = array<i64: 1>, scalar_prefetch = 0 : i64, scratch_operands = 0 : i64, tpu.core_type = #tpu.core_type<tc>, window_params = [{transform_indices = @transform_0, window_bounds = array<i64: 16, 128>}, {pipeline_mode = #tpu.pipeline_mode<synchronous>, transform_indices = @transform_1, window_bounds = array<i64: 128, 128>}, {pipeline_mode = #tpu.pipeline_mode<synchronous>, transform_indices = @transform_2, window_bounds = array<i64: 1, 128>}, {pipeline_mode = #tpu.pipeline_mode<synchronous>, transform_indices = @transform_3, window_bounds = array<i64: 128, 128>}, {pipeline_mode = #tpu.pipeline_mode<synchronous>, transform_indices = @transform_4, window_bounds = array<i64: 1, 128>}, {pipeline_mode = #tpu.pipeline_mode<synchronous>, transform_indices = @transform_5, window_bounds = array<i64: 128, 1024>}, {pipeline_mode = #tpu.pipeline_mode<synchronous>, transform_indices = @transform_6, window_bounds = array<i64: 1, 1024>}, {pipeline_mode = #tpu.pipeline_mode<synchronous>, transform_indices = @transform_7, window_bounds = array<i64: 1024, 384>}, {pipeline_mode = #tpu.pipeline_mode<synchronous>, transform_indices = @transform_8, window_bounds = array<i64: 1, 384>}, {pipeline_mode = #tpu.pipeline_mode<synchronous>, transform_indices = @transform_9, window_bounds = array<i64: 384, 256>}, {pipeline_mode = #tpu.pipeline_mode<synchronous>, transform_indices = @transform_10, window_bounds = array<i64: 1, 256>}, {transform_indices = @transform_11, window_bounds = array<i64: 16, 384>}, {transform_indices = @transform_12, window_bounds = array<i64: 16, 256>}]} {
    %c0 = arith.constant 0 : index
    %c0_0 = arith.constant 0 : index
    %0 = vector.load %arg1[%c0, %c0_0] : memref<16x128xbf16, #tpu.memory_space<vmem>>, vector<16x128xbf16>
    %c0_1 = arith.constant 0 : index
    %c0_2 = arith.constant 0 : index
    %1 = vector.load %arg2[%c0_1, %c0_2] : memref<128x128xbf16, #tpu.memory_space<vmem>>, vector<128x128xbf16>
    %cst = arith.constant dense<0.000000e+00> : vector<16x128xf32>
    %2 = tpu.matmul %0, %1, %cst {dimension_numbers = #tpu.dot_dimension_numbers<[1], [0], [0], [1], [0, 0, 1, 1], [], []>} : vector<16x128xbf16>, vector<128x128xbf16>, vector<16x128xf32> -> vector<16x128xf32>
    %c0_3 = arith.constant 0 : index
    %c0_4 = arith.constant 0 : index
    %3 = vector.load %arg3[%c0_3, %c0_4] : memref<1x128xf32, #tpu.memory_space<vmem>>, vector<1x128xf32>
    %4 = vector.broadcast %3 : vector<1x128xf32> to vector<16x128xf32>
    %5 = arith.addf %2, %4 : vector<16x128xf32>
    %cst_5 = arith.constant 3.000000e-01 : f32
    %6 = vector.broadcast %cst_5 : f32 to vector<16x128xf32>
    %7 = arith.mulf %6, %5 : vector<16x128xf32>
    %8 = arith.maximumf %5, %7 : vector<16x128xf32>
    %9 = arith.truncf %8 : vector<16x128xf32> to vector<16x128xbf16>
    %c0_6 = arith.constant 0 : index
    %c0_7 = arith.constant 0 : index
    %10 = vector.load %arg4[%c0_6, %c0_7] : memref<128x128xbf16, #tpu.memory_space<vmem>>, vector<128x128xbf16>
    %cst_8 = arith.constant dense<0.000000e+00> : vector<16x128xf32>
    %11 = tpu.matmul %9, %10, %cst_8 {dimension_numbers = #tpu.dot_dimension_numbers<[1], [0], [0], [1], [0, 0, 1, 1], [], []>} : vector<16x128xbf16>, vector<128x128xbf16>, vector<16x128xf32> -> vector<16x128xf32>
    %c0_9 = arith.constant 0 : index
    %c0_10 = arith.constant 0 : index
    %12 = vector.load %arg5[%c0_9, %c0_10] : memref<1x128xf32, #tpu.memory_space<vmem>>, vector<1x128xf32>
    %13 = vector.broadcast %12 : vector<1x128xf32> to vector<16x128xf32>
    %14 = arith.addf %11, %13 : vector<16x128xf32>
    %15 = arith.truncf %14 : vector<16x128xf32> to vector<16x128xbf16>
    %c0_11 = arith.constant 0 : index
    %c0_12 = arith.constant 0 : index
    %16 = vector.load %arg6[%c0_11, %c0_12] : memref<128x1024xbf16, #tpu.memory_space<vmem>>, vector<128x1024xbf16>
    %cst_13 = arith.constant dense<0.000000e+00> : vector<16x1024xf32>
    %17 = tpu.matmul %15, %16, %cst_13 {dimension_numbers = #tpu.dot_dimension_numbers<[1], [0], [0], [1], [0, 0, 1, 1], [], []>} : vector<16x128xbf16>, vector<128x1024xbf16>, vector<16x1024xf32> -> vector<16x1024xf32>
    %c0_14 = arith.constant 0 : index
    %c0_15 = arith.constant 0 : index
    %18 = vector.load %arg7[%c0_14, %c0_15] : memref<1x1024xf32, #tpu.memory_space<vmem>>, vector<1x1024xf32>
    %19 = vector.broadcast %18 : vector<1x1024xf32> to vector<16x1024xf32>
    %20 = arith.addf %17, %19 : vector<16x1024xf32>
    %cst_16 = arith.constant 1.000000e-01 : f32
    %21 = vector.broadcast %cst_16 : f32 to vector<16x1024xf32>
    %22 = arith.mulf %21, %20 : vector<16x1024xf32>
    %23 = arith.maximumf %20, %22 : vector<16x1024xf32>
    %24 = arith.truncf %23 : vector<16x1024xf32> to vector<16x1024xbf16>
    %c0_17 = arith.constant 0 : index
    %c0_18 = arith.constant 0 : index
    %25 = vector.load %arg8[%c0_17, %c0_18] : memref<1024x384xbf16, #tpu.memory_space<vmem>>, vector<1024x384xbf16>
    %cst_19 = arith.constant dense<0.000000e+00> : vector<16x384xf32>
    %26 = tpu.matmul %24, %25, %cst_19 {dimension_numbers = #tpu.dot_dimension_numbers<[1], [0], [0], [1], [0, 0, 1, 1], [], []>} : vector<16x1024xbf16>, vector<1024x384xbf16>, vector<16x384xf32> -> vector<16x384xf32>
    %c0_20 = arith.constant 0 : index
    %c0_21 = arith.constant 0 : index
    %27 = vector.load %arg9[%c0_20, %c0_21] : memref<1x384xf32, #tpu.memory_space<vmem>>, vector<1x384xf32>
    %28 = vector.broadcast %27 : vector<1x384xf32> to vector<16x384xf32>
    %29 = arith.addf %26, %28 : vector<16x384xf32>
    %c0_22 = arith.constant 0 : index
    %c0_23 = arith.constant 0 : index
    %30 = vector.load %arg12[%c0_22, %c0_23] : memref<16x384xf32, #tpu.memory_space<vmem>>, vector<16x384xf32>
    tpu.vector_store %arg12[%c0_22, %c0_23], %29 {strides = array<i32>} : memref<16x384xf32, #tpu.memory_space<vmem>>, vector<16x384xf32>,
    %31 = arith.truncf %29 : vector<16x384xf32> to vector<16x384xbf16>
    %c0_24 = arith.constant 0 : index
    %c0_25 = arith.constant 0 : index
    %32 = vector.load %arg10[%c0_24, %c0_25] : memref<384x256xbf16, #tpu.memory_space<vmem>>, vector<384x256xbf16>
    %cst_26 = arith.constant dense<0.000000e+00> : vector<16x256xf32>
    %33 = tpu.matmul %31, %32, %cst_26 {dimension_numbers = #tpu.dot_dimension_numbers<[1], [0], [0], [1], [0, 0, 1, 1], [], []>} : vector<16x384xbf16>, vector<384x256xbf16>, vector<16x256xf32> -> vector<16x256xf32>
    %c0_27 = arith.constant 0 : index
    %c0_28 = arith.constant 0 : index
    %34 = vector.load %arg11[%c0_27, %c0_28] : memref<1x256xf32, #tpu.memory_space<vmem>>, vector<1x256xf32>
    %35 = vector.broadcast %34 : vector<1x256xf32> to vector<16x256xf32>
    %36 = arith.addf %33, %35 : vector<16x256xf32>
    %cst_29 = arith.constant dense<0xFF800000> : vector<16xf32>
    %37 = vector.multi_reduction <maximumf>, %36, %cst_29 [1] : vector<16x256xf32> to vector<16xf32>
    %38 = vector.shape_cast %37 : vector<16xf32> to vector<16x1xf32>
    %39 = vector.broadcast %38 : vector<16x1xf32> to vector<16x256xf32>
    %40 = arith.subf %36, %39 : vector<16x256xf32>
    %41 = math.exp %40 : vector<16x256xf32>
    %cst_30 = arith.constant dense<0.000000e+00> : vector<16xf32>
    %42 = vector.multi_reduction <add>, %41, %cst_30 [1] : vector<16x256xf32> to vector<16xf32>
    %43 = vector.shape_cast %42 : vector<16xf32> to vector<16x1xf32>
    %44 = tpu.reciprocal %43 {approx = true} : vector<16x1xf32> -> vector<16x1xf32>
    %45 = vector.broadcast %44 : vector<16x1xf32> to vector<16x256xf32>
    %46 = arith.mulf %41, %45 : vector<16x256xf32>
    %c0_31 = arith.constant 0 : index
    %c0_32 = arith.constant 0 : index
    %47 = vector.load %arg13[%c0_31, %c0_32] : memref<16x256xf32, #tpu.memory_space<vmem>>, vector<16x256xf32>
    tpu.vector_store %arg13[%c0_31, %c0_32], %46 {strides = array<i32>} : memref<16x256xf32, #tpu.memory_space<vmem>>, vector<16x256xf32>,
    return
  }
  func.func @transform_0(%arg0: i32) -> (i32, i32) {
    %c0_i32 = arith.constant 0 : i32
    %c0_i32_0 = arith.constant 0 : i32
    return %arg0, %c0_i32 : i32, i32
  }
  func.func @transform_1(%arg0: i32) -> (i32, i32) {
    %c0_i32 = arith.constant 0 : i32
    %c0_i32_0 = arith.constant 0 : i32
    %c0_i32_1 = arith.constant 0 : i32
    return %c0_i32, %c0_i32_0 : i32, i32
  }
  func.func @transform_2(%arg0: i32) -> (i32, i32) {
    %c0_i32 = arith.constant 0 : i32
    %c0_i32_0 = arith.constant 0 : i32
    %c0_i32_1 = arith.constant 0 : i32
    return %c0_i32, %c0_i32_0 : i32, i32
  }
  func.func @transform_3(%arg0: i32) -> (i32, i32) {
    %c0_i32 = arith.constant 0 : i32
    %c0_i32_0 = arith.constant 0 : i32
    %c0_i32_1 = arith.constant 0 : i32
    return %c0_i32, %c0_i32_0 : i32, i32
  }
  func.func @transform_4(%arg0: i32) -> (i32, i32) {
    %c0_i32 = arith.constant 0 : i32
    %c0_i32_0 = arith.constant 0 : i32
    %c0_i32_1 = arith.constant 0 : i32
    return %c0_i32, %c0_i32_0 : i32, i32
  }
  func.func @transform_5(%arg0: i32) -> (i32, i32) {
    %c0_i32 = arith.constant 0 : i32
    %c0_i32_0 = arith.constant 0 : i32
    %c0_i32_1 = arith.constant 0 : i32
    return %c0_i32, %c0_i32_0 : i32, i32
  }
  func.func @transform_6(%arg0: i32) -> (i32, i32) {
    %c0_i32 = arith.constant 0 : i32
    %c0_i32_0 = arith.constant 0 : i32
    %c0_i32_1 = arith.constant 0 : i32
    return %c0_i32, %c0_i32_0 : i32, i32
  }
  func.func @transform_7(%arg0: i32) -> (i32, i32) {
    %c0_i32 = arith.constant 0 : i32
    %c0_i32_0 = arith.constant 0 : i32
    %c0_i32_1 = arith.constant 0 : i32
    return %c0_i32, %c0_i32_0 : i32, i32
  }
  func.func @transform_8(%arg0: i32) -> (i32, i32) {
    %c0_i32 = arith.constant 0 : i32
    %c0_i32_0 = arith.constant 0 : i32
    %c0_i32_1 = arith.constant 0 : i32
    return %c0_i32, %c0_i32_0 : i32, i32
  }
  func.func @transform_9(%arg0: i32) -> (i32, i32) {
    %c0_i32 = arith.constant 0 : i32
    %c0_i32_0 = arith.constant 0 : i32
    %c0_i32_1 = arith.constant 0 : i32
    return %c0_i32, %c0_i32_0 : i32, i32
  }
  func.func @transform_10(%arg0: i32) -> (i32, i32) {
    %c0_i32 = arith.constant 0 : i32
    %c0_i32_0 = arith.constant 0 : i32
    %c0_i32_1 = arith.constant 0 : i32
    return %c0_i32, %c0_i32_0 : i32, i32
  }
  func.func @transform_11(%arg0: i32) -> (i32, i32) {
    %c0_i32 = arith.constant 0 : i32
    %c0_i32_0 = arith.constant 0 : i32
    return %arg0, %c0_i32 : i32, i32
  }
  func.func @transform_12(%arg0: i32) -> (i32, i32) {
    %c0_i32 = arith.constant 0 : i32
    %c0_i32_0 = arith.constant 0 : i32
    return %arg0, %c0_i32 : i32, i32
  }
}

module attributes {stable_mosaic.version = 11 : i64} {
  func.func @selfattn_roi_kernel(%arg0: i32, %arg1: memref<16x128xbf16, #tpu.memory_space<vmem>>, %arg2: memref<128x128xbf16, #tpu.memory_space<vmem>>, %arg3: memref<1x128xf32, #tpu.memory_space<vmem>>, %arg4: memref<128x128xbf16, #tpu.memory_space<vmem>>, %arg5: memref<1x128xf32, #tpu.memory_space<vmem>>, %arg6: memref<128x1024xbf16, #tpu.memory_space<vmem>>, %arg7: memref<1x1024xf32, #tpu.memory_space<vmem>>, %arg8: memref<1024x384xbf16, #tpu.memory_space<vmem>>, %arg9: memref<1x384xf32, #tpu.memory_space<vmem>>, %arg10: memref<384x256xbf16, #tpu.memory_space<vmem>>, %arg11: memref<1x256xf32, #tpu.memory_space<vmem>>, %arg12: memref<16x384xf32, #tpu.memory_space<vmem>>, %arg13: memref<16x256xf32, #tpu.memory_space<vmem>>) attributes {dimension_semantics = [#tpu.dimension_semantics<parallel>], iteration_bounds = array<i64: 1>, scalar_prefetch = 0 : i64, scratch_operands = 0 : i64, tpu.core_type = #tpu.core_type<tc>, window_params = [{transform_indices = @transform_0, window_bounds = array<i64: 16, 128>}, {pipeline_mode = #tpu.pipeline_mode<synchronous>, transform_indices = @transform_1, window_bounds = array<i64: 128, 128>}, {pipeline_mode = #tpu.pipeline_mode<synchronous>, transform_indices = @transform_2, window_bounds = array<i64: 1, 128>}, {pipeline_mode = #tpu.pipeline_mode<synchronous>, transform_indices = @transform_3, window_bounds = array<i64: 128, 128>}, {pipeline_mode = #tpu.pipeline_mode<synchronous>, transform_indices = @transform_4, window_bounds = array<i64: 1, 128>}, {pipeline_mode = #tpu.pipeline_mode<synchronous>, transform_indices = @transform_5, window_bounds = array<i64: 128, 1024>}, {pipeline_mode = #tpu.pipeline_mode<synchronous>, transform_indices = @transform_6, window_bounds = array<i64: 1, 1024>}, {pipeline_mode = #tpu.pipeline_mode<synchronous>, transform_indices = @transform_7, window_bounds = array<i64: 1024, 384>}, {pipeline_mode = #tpu.pipeline_mode<synchronous>, transform_indices = @transform_8, window_bounds = array<i64: 1, 384>}, {pipeline_mode = #tpu.pipeline_mode<synchronous>, transform_indices = @transform_9, window_bounds = array<i64: 384, 256>}, {pipeline_mode = #tpu.pipeline_mode<synchronous>, transform_indices = @transform_10, window_bounds = array<i64: 1, 256>}, {transform_indices = @transform_11, window_bounds = array<i64: 16, 384>}, {transform_indices = @transform_12, window_bounds = array<i64: 16, 256>}]} {
    %c0 = arith.constant 0 : index
    %c0_0 = arith.constant 0 : index
    %0 = vector.load %arg1[%c0, %c0_0] : memref<16x128xbf16, #tpu.memory_space<vmem>>, vector<16x128xbf16>
    %c0_1 = arith.constant 0 : index
    %c0_2 = arith.constant 0 : index
    %1 = vector.load %arg2[%c0_1, %c0_2] : memref<128x128xbf16, #tpu.memory_space<vmem>>, vector<128x128xbf16>
    %cst = arith.constant dense<0.000000e+00> : vector<16x128xf32>
    %2 = tpu.matmul %0, %1, %cst {dimension_numbers = #tpu.dot_dimension_numbers<[1], [0], [0], [1], [0, 0, 1, 1], [], []>} : vector<16x128xbf16>, vector<128x128xbf16>, vector<16x128xf32> -> vector<16x128xf32>
    %c0_3 = arith.constant 0 : index
    %c0_4 = arith.constant 0 : index
    %3 = vector.load %arg3[%c0_3, %c0_4] : memref<1x128xf32, #tpu.memory_space<vmem>>, vector<1x128xf32>
    %4 = vector.broadcast %3 : vector<1x128xf32> to vector<16x128xf32>
    %5 = arith.addf %2, %4 : vector<16x128xf32>
    %cst_5 = arith.constant 3.000000e-01 : f32
    %6 = vector.broadcast %cst_5 : f32 to vector<16x128xf32>
    %7 = arith.mulf %6, %5 : vector<16x128xf32>
    %8 = arith.maximumf %5, %7 : vector<16x128xf32>
    %9 = arith.truncf %8 : vector<16x128xf32> to vector<16x128xbf16>
    %c0_6 = arith.constant 0 : index
    %c0_7 = arith.constant 0 : index
    %10 = vector.load %arg4[%c0_6, %c0_7] : memref<128x128xbf16, #tpu.memory_space<vmem>>, vector<128x128xbf16>
    %cst_8 = arith.constant dense<0.000000e+00> : vector<16x128xf32>
    %11 = tpu.matmul %9, %10, %cst_8 {dimension_numbers = #tpu.dot_dimension_numbers<[1], [0], [0], [1], [0, 0, 1, 1], [], []>} : vector<16x128xbf16>, vector<128x128xbf16>, vector<16x128xf32> -> vector<16x128xf32>
    %c0_9 = arith.constant 0 : index
    %c0_10 = arith.constant 0 : index
    %12 = vector.load %arg5[%c0_9, %c0_10] : memref<1x128xf32, #tpu.memory_space<vmem>>, vector<1x128xf32>
    %13 = vector.broadcast %12 : vector<1x128xf32> to vector<16x128xf32>
    %14 = arith.addf %11, %13 : vector<16x128xf32>
    %15 = arith.truncf %14 : vector<16x128xf32> to vector<16x128xbf16>
    %c0_11 = arith.constant 0 : index
    %c0_12 = arith.constant 0 : index
    %16 = vector.load %arg6[%c0_11, %c0_12] : memref<128x1024xbf16, #tpu.memory_space<vmem>>, vector<128x1024xbf16>
    %cst_13 = arith.constant dense<0.000000e+00> : vector<16x1024xf32>
    %17 = tpu.matmul %15, %16, %cst_13 {dimension_numbers = #tpu.dot_dimension_numbers<[1], [0], [0], [1], [0, 0, 1, 1], [], []>} : vector<16x128xbf16>, vector<128x1024xbf16>, vector<16x1024xf32> -> vector<16x1024xf32>
    %c0_14 = arith.constant 0 : index
    %c0_15 = arith.constant 0 : index
    %18 = vector.load %arg7[%c0_14, %c0_15] : memref<1x1024xf32, #tpu.memory_space<vmem>>, vector<1x1024xf32>
    %19 = vector.broadcast %18 : vector<1x1024xf32> to vector<16x1024xf32>
    %20 = arith.addf %17, %19 : vector<16x1024xf32>
    %cst_16 = arith.constant 1.000000e-01 : f32
    %21 = vector.broadcast %cst_16 : f32 to vector<16x1024xf32>
    %22 = arith.mulf %21, %20 : vector<16x1024xf32>
    %23 = arith.maximumf %20, %22 : vector<16x1024xf32>
    %24 = arith.truncf %23 : vector<16x1024xf32> to vector<16x1024xbf16>
    %c0_17 = arith.constant 0 : index
    %c0_18 = arith.constant 0 : index
    %25 = vector.load %arg8[%c0_17, %c0_18] : memref<1024x384xbf16, #tpu.memory_space<vmem>>, vector<1024x384xbf16>
    %cst_19 = arith.constant dense<0.000000e+00> : vector<16x384xf32>
    %26 = tpu.matmul %24, %25, %cst_19 {dimension_numbers = #tpu.dot_dimension_numbers<[1], [0], [0], [1], [0, 0, 1, 1], [], []>} : vector<16x1024xbf16>, vector<1024x384xbf16>, vector<16x384xf32> -> vector<16x384xf32>
    %c0_20 = arith.constant 0 : index
    %c0_21 = arith.constant 0 : index
    %27 = vector.load %arg9[%c0_20, %c0_21] : memref<1x384xf32, #tpu.memory_space<vmem>>, vector<1x384xf32>
    %28 = vector.broadcast %27 : vector<1x384xf32> to vector<16x384xf32>
    %29 = arith.addf %26, %28 : vector<16x384xf32>
    %c0_22 = arith.constant 0 : index
    %c0_23 = arith.constant 0 : index
    %30 = vector.load %arg12[%c0_22, %c0_23] : memref<16x384xf32, #tpu.memory_space<vmem>>, vector<16x384xf32>
    tpu.vector_store %arg12[%c0_22, %c0_23], %29 {strides = array<i32>} : memref<16x384xf32, #tpu.memory_space<vmem>>, vector<16x384xf32>,
    %31 = arith.truncf %29 : vector<16x384xf32> to vector<16x384xbf16>
    %c0_24 = arith.constant 0 : index
    %c0_25 = arith.constant 0 : index
    %32 = vector.load %arg10[%c0_24, %c0_25] : memref<384x256xbf16, #tpu.memory_space<vmem>>, vector<384x256xbf16>
    %cst_26 = arith.constant dense<0.000000e+00> : vector<16x256xf32>
    %33 = tpu.matmul %31, %32, %cst_26 {dimension_numbers = #tpu.dot_dimension_numbers<[1], [0], [0], [1], [0, 0, 1, 1], [], []>} : vector<16x384xbf16>, vector<384x256xbf16>, vector<16x256xf32> -> vector<16x256xf32>
    %c0_27 = arith.constant 0 : index
    %c0_28 = arith.constant 0 : index
    %34 = vector.load %arg11[%c0_27, %c0_28] : memref<1x256xf32, #tpu.memory_space<vmem>>, vector<1x256xf32>
    %35 = vector.broadcast %34 : vector<1x256xf32> to vector<16x256xf32>
    %36 = arith.addf %33, %35 : vector<16x256xf32>
    %cst_29 = arith.constant dense<0xFF800000> : vector<16xf32>
    %37 = vector.multi_reduction <maximumf>, %36, %cst_29 [1] : vector<16x256xf32> to vector<16xf32>
    %38 = vector.shape_cast %37 : vector<16xf32> to vector<16x1xf32>
    %39 = vector.broadcast %38 : vector<16x1xf32> to vector<16x256xf32>
    %40 = arith.subf %36, %39 : vector<16x256xf32>
    %41 = math.exp %40 : vector<16x256xf32>
    %cst_30 = arith.constant dense<0.000000e+00> : vector<16xf32>
    %42 = vector.multi_reduction <add>, %41, %cst_30 [1] : vector<16x256xf32> to vector<16xf32>
    %43 = vector.shape_cast %42 : vector<16xf32> to vector<16x1xf32>
    %44 = tpu.reciprocal %43 {approx = true} : vector<16x1xf32> -> vector<16x1xf32>
    %45 = vector.broadcast %44 : vector<16x1xf32> to vector<16x256xf32>
    %46 = arith.mulf %41, %45 : vector<16x256xf32>
    %c0_31 = arith.constant 0 : index
    %c0_32 = arith.constant 0 : index
    %47 = vector.load %arg13[%c0_31, %c0_32] : memref<16x256xf32, #tpu.memory_space<vmem>>, vector<16x256xf32>
    tpu.vector_store %arg13[%c0_31, %c0_32], %46 {strides = array<i32>} : memref<16x256xf32, #tpu.memory_space<vmem>>, vector<16x256xf32>,
    return
  }
  func.func @transform_0(%arg0: i32) -> (i32, i32) {
    %c0_i32 = arith.constant 0 : i32
    %c0_i32_0 = arith.constant 0 : i32
    return %arg0, %c0_i32 : i32, i32
  }
  func.func @transform_1(%arg0: i32) -> (i32, i32) {
    %c0_i32 = arith.constant 0 : i32
    %c0_i32_0 = arith.constant 0 : i32
    %c0_i32_1 = arith.constant 0 : i32
    return %c0_i32, %c0_i32_0 : i32, i32
  }
  func.func @transform_2(%arg0: i32) -> (i32, i32) {
    %c0_i32 = arith.constant 0 : i32
    %c0_i32_0 = arith.constant 0 : i32
    %c0_i32_1 = arith.constant 0 : i32
    return %c0_i32, %c0_i32_0 : i32, i32
  }
  func.func @transform_3(%arg0: i32) -> (i32, i32) {
    %c0_i32 = arith.constant 0 : i32
    %c0_i32_0 = arith.constant 0 : i32
    %c0_i32_1 = arith.constant 0 : i32
    return %c0_i32, %c0_i32_0 : i32, i32
  }
  func.func @transform_4(%arg0: i32) -> (i32, i32) {
    %c0_i32 = arith.constant 0 : i32
    %c0_i32_0 = arith.constant 0 : i32
    %c0_i32_1 = arith.constant 0 : i32
    return %c0_i32, %c0_i32_0 : i32, i32
  }
  func.func @transform_5(%arg0: i32) -> (i32, i32) {
    %c0_i32 = arith.constant 0 : i32
    %c0_i32_0 = arith.constant 0 : i32
    %c0_i32_1 = arith.constant 0 : i32
    return %c0_i32, %c0_i32_0 : i32, i32
  }
  func.func @transform_6(%arg0: i32) -> (i32, i32) {
    %c0_i32 = arith.constant 0 : i32
    %c0_i32_0 = arith.constant 0 : i32
    %c0_i32_1 = arith.constant 0 : i32
    return %c0_i32, %c0_i32_0 : i32, i32
  }
  func.func @transform_7(%arg0: i32) -> (i32, i32) {
    %c0_i32 = arith.constant 0 : i32
    %c0_i32_0 = arith.constant 0 : i32
    %c0_i32_1 = arith.constant 0 : i32
    return %c0_i32, %c0_i32_0 : i32, i32
  }
  func.func @transform_8(%arg0: i32) -> (i32, i32) {
    %c0_i32 = arith.constant 0 : i32
    %c0_i32_0 = arith.constant 0 : i32
    %c0_i32_1 = arith.constant 0 : i32
    return %c0_i32, %c0_i32_0 : i32, i32
  }
  func.func @transform_9(%arg0: i32) -> (i32, i32) {
    %c0_i32 = arith.constant 0 : i32
    %c0_i32_0 = arith.constant 0 : i32
    %c0_i32_1 = arith.constant 0 : i32
    return %c0_i32, %c0_i32_0 : i32, i32
  }
  func.func @transform_10(%arg0: i32) -> (i32, i32) {
    %c0_i32 = arith.constant 0 : i32
    %c0_i32_0 = arith.constant 0 : i32
    %c0_i32_1 = arith.constant 0 : i32
    return %c0_i32, %c0_i32_0 : i32, i32
  }
  func.func @transform_11(%arg0: i32) -> (i32, i32) {
    %c0_i32 = arith.constant 0 : i32
    %c0_i32_0 = arith.constant 0 : i32
    return %arg0, %c0_i32 : i32, i32
  }
  func.func @transform_12(%arg0: i32) -> (i32, i32) {
    %c0_i32 = arith.constant 0 : i32
    %c0_i32_0 = arith.constant 0 : i32
    return %arg0, %c0_i32 : i32, i32
  }
}

</mosaic_0001>

<llo_original>
// kernel: tpu_custom_call.1
$region0: #{tpu_custom_call.1}
  #allocation0 [shape = 'u32[]', space=smem, size = 0x4, offset = 0x4, fixed_abs, tag = 'smem constant byte address 0x4 - core index']
  #allocation1 [shape = 'u32[144,128]{1,0:T(1,128)}', space=vmem, size = 0x12000, scoped, tag = 'internal scratch']
  %s0 = inlined_call_operand.hbm [shape: bf16[16,128], index: 0, kind: input, shape index: {}]
  %s1 = inlined_call_operand.hbm [shape: bf16[128,128], index: 1, kind: input, shape index: {}]
  %s2 = inlined_call_operand.vmem [shape: f32[1,128], index: 2, kind: input, shape index: {}]
  %s3 = inlined_call_operand.hbm [shape: bf16[128,128], index: 3, kind: input, shape index: {}]
  %s4 = inlined_call_operand.hbm [shape: f32[1,128], index: 4, kind: input, shape index: {}]
  %s5 = inlined_call_operand.hbm [shape: bf16[128,1024], index: 5, kind: input, shape index: {}]
  %s6 = inlined_call_operand.vmem [shape: f32[1,1024], index: 6, kind: input, shape index: {}]
  %s7 = inlined_call_operand.hbm [shape: bf16[1024,384], index: 7, kind: input, shape index: {}]
  %s8 = inlined_call_operand.vmem [shape: f32[1,384], index: 8, kind: input, shape index: {}]
  %s9 = inlined_call_operand.hbm [shape: bf16[384,256], index: 9, kind: input, shape index: {}]
  %s10 = inlined_call_operand.vmem [shape: f32[1,256], index: 10, kind: input, shape index: {}]
  %s11 = inlined_call_operand.hbm [shape: f32[16,384], index: 11, kind: output, shape index: {0}]
  %s12 = inlined_call_operand.hbm [shape: f32[16,256], index: 12, kind: output, shape index: {1}]
  %13 = xla_tuple %s11, %s12
  %s14 = sld [smem:[#allocation0]]
  $region90: #{tpu_custom_call.1} parent=0
    _
  %s16 = ssub.s32 1, %s14
  %s17 = scalar_select 0, %s16, %s14
  $region1: #{tpu_custom_call.1} parent=0
    #allocation2 [shape = 'u8[4096]{0}', space=vmem, size = 0x1000, scoped, tag = 'input window, operand 0, single buffered']
    #allocation3 [shape = 's32[1]{0}', space=sflag, size = 0x4, scoped, tag = 'scoped memory for tpu_custom_call.1']
    #allocation4 [shape = 's32[1]{0}', space=sflag, size = 0x4, scoped, tag = 'scoped memory for tpu_custom_call.1']
    #allocation5 [shape = 'u8[32768]{0}', space=vmem, size = 0x8000, scoped, tag = 'input window, operand 1, single buffered']
    #allocation6 [shape = 's32[1]{0}', space=sflag, size = 0x4, scoped, tag = 'scoped memory for tpu_custom_call.1']
    #allocation7 [shape = 'u8[32768]{0}', space=vmem, size = 0x8000, scoped, tag = 'input window, operand 3, single buffered']
    #allocation8 [shape = 'u8[512]{0}', space=vmem, size = 0x400, scoped, tag = 'input window, operand 4, single buffered']
    #allocation9 [shape = 's32[1]{0}', space=sflag, size = 0x4, scoped, tag = 'scoped memory for tpu_custom_call.1']
    #allocation10 [shape = 'u8[262144]{0}', space=vmem, size = 0x40000, scoped, tag = 'input window, operand 5, single buffered']
    #allocation11 [shape = 'u8[786432]{0}', space=vmem, size = 0xc0000, scoped, tag = 'input window, operand 7, single buffered']
    #allocation12 [shape = 's32[1]{0}', space=sflag, size = 0x4, scoped, tag = 'scoped memory for tpu_custom_call.1']
    #allocation13 [shape = 'u8[196608]{0}', space=vmem, size = 0x30000, scoped, tag = 'input window, operand 9, single buffered']
    #allocation14 [shape = 'u8[24576]{0}', space=vmem, size = 0x6000, scoped, tag = 'output window, operand 0, single buffered']
    #allocation15 [shape = 'u8[16384]{0}', space=vmem, size = 0x4000, scoped, tag = 'output window, operand 1, single buffered']
    #allocation16 [shape = 's32[1]{0}', space=sflag, size = 0x4, scoped, tag = 'scoped memory for tpu_custom_call.1']
    %18 = vsyncpa [#allocation3], 0
    %19 = vsyncpa [#allocation6], 0
    %20 = vsyncpa [#allocation9], 0
    %21 = vsyncpa [#allocation12], 0
    %22 = vsyncpa [#allocation4], 0
    %23 = vsyncpa [#allocation16], 0
    // Predicated region
    $region2: #{tpu_custom_call.1} parent=1 // pred_check
      _
    $region3: #{tpu_custom_call.1} parent=1 // pred_check_branch
      %25 = sbr.rel (0) target = $region5
    $region4: #{tpu_custom_call.1} parent=1 // pred_region
      %s27 = ssub.s32 128, 128
      %28 = vsyncadd [#allocation3], %s27
      %s29 = sshll.u32 [#allocation2], 4
      %s30 = int_to_ptr.vmem [resolvable:$true] %s29
      %35 = dma.hbm_to_vmem [thread:$0]  %s0, 128, %s30, [#allocation3], 64, 64, 4
    $region5: #{tpu_custom_call.1} parent=1 // pred_fallthru
      _
    // Predicated region
    $region6: #{tpu_custom_call.1} parent=1 // pred_check
      _
    $region7: #{tpu_custom_call.1} parent=1 // pred_check_branch
      %37 = sbr.rel (0) target = $region9
    $region8: #{tpu_custom_call.1} parent=1 // pred_region
      %s39 = ssub.s32 1024, 1024
      %40 = vsyncadd [#allocation6], %s39
      %s41 = sshll.u32 [#allocation5], 4
      %s42 = int_to_ptr.vmem [resolvable:$true] %s41
      %47 = dma.hbm_to_vmem [thread:$0]  %s1, 1024, %s42, [#allocation6], 64, 64, 4
    $region9: #{tpu_custom_call.1} parent=1 // pred_fallthru
      _
    // Predicated region
    $region10: #{tpu_custom_call.1} parent=1 // pred_check
      _
    $region11: #{tpu_custom_call.1} parent=1 // pred_check_branch
      %49 = sbr.rel (0) target = $region13
    $region12: #{tpu_custom_call.1} parent=1 // pred_region
      _
    $region13: #{tpu_custom_call.1} parent=1 // pred_fallthru
      _
    // Predicated region
    $region14: #{tpu_custom_call.1} parent=1 // pred_check
      _
    $region15: #{tpu_custom_call.1} parent=1 // pred_check_branch
      %51 = sbr.rel (0) target = $region17
    $region16: #{tpu_custom_call.1} parent=1 // pred_region
      %s53 = ssub.s32 1024, 1024
      %54 = vsyncadd [#allocation6], %s53
      %s55 = sshll.u32 [#allocation7], 4
      %s56 = int_to_ptr.vmem [resolvable:$true] %s55
      %61 = dma.hbm_to_vmem [thread:$0]  %s3, 1024, %s56, [#allocation6], 64, 64, 4
    $region17: #{tpu_custom_call.1} parent=1 // pred_fallthru
      _
    // Predicated region
    $region18: #{tpu_custom_call.1} parent=1 // pred_check
      _
    $region19: #{tpu_custom_call.1} parent=1 // pred_check_branch
      %63 = sbr.rel (0) target = $region21
    $region20: #{tpu_custom_call.1} parent=1 // pred_region
      %s65 = ssub.s32 16, 16
      %66 = vsyncadd [#allocation9], %s65
      %s68 = sshll.u32 [#allocation8], 4
      %s69 = int_to_ptr.vmem [resolvable:$true] %s68
      %71 = dma.hbm_to_vmem [thread:$0]  %s4, 16, %s69, [#allocation9]
    $region21: #{tpu_custom_call.1} parent=1 // pred_fallthru
      _
    // Predicated region
    $region22: #{tpu_custom_call.1} parent=1 // pred_check
      _
    $region23: #{tpu_custom_call.1} parent=1 // pred_check_branch
      %73 = sbr.rel (0) target = $region25
    $region24: #{tpu_custom_call.1} parent=1 // pred_region
      %s75 = ssub.s32 8192, 8192
      %76 = vsyncadd [#allocation9], %s75
      %s77 = sshll.u32 [#allocation10], 4
      %s78 = int_to_ptr.vmem [resolvable:$true] %s77
      %83 = dma.hbm_to_vmem [thread:$0]  %s5, 8192, %s78, [#allocation9], 512, 512, 32
    $region25: #{tpu_custom_call.1} parent=1 // pred_fallthru
      _
    // Predicated region
    $region26: #{tpu_custom_call.1} parent=1 // pred_check
      _
    $region27: #{tpu_custom_call.1} parent=1 // pred_check_branch
      %85 = sbr.rel (0) target = $region29
    $region28: #{tpu_custom_call.1} parent=1 // pred_region
      _
    $region29: #{tpu_custom_call.1} parent=1 // pred_fallthru
      _
    // Predicated region
    $region30: #{tpu_custom_call.1} parent=1 // pred_check
      _
    $region31: #{tpu_custom_call.1} parent=1 // pred_check_branch
      %87 = sbr.rel (0) target = $region33
    $region32: #{tpu_custom_call.1} parent=1 // pred_region
      %s89 = ssub.s32 24576, 24576
      %90 = vsyncadd [#allocation12], %s89
      %s91 = sshll.u32 [#allocation11], 4
      %s92 = int_to_ptr.vmem [resolvable:$true] %s91
      %97 = dma.hbm_to_vmem [thread:$0]  %s7, 24576, %s92, [#allocation12], 192, 192, 12
    $region33: #{tpu_custom_call.1} parent=1 // pred_fallthru
      _
    // Predicated region
    $region34: #{tpu_custom_call.1} parent=1 // pred_check
      _
    $region35: #{tpu_custom_call.1} parent=1 // pred_check_branch
      %99 = sbr.rel (0) target = $region37
    $region36: #{tpu_custom_call.1} parent=1 // pred_region
      _
    $region37: #{tpu_custom_call.1} parent=1 // pred_fallthru
      _
    // Predicated region
    $region38: #{tpu_custom_call.1} parent=1 // pred_check
      _
    $region39: #{tpu_custom_call.1} parent=1 // pred_check_branch
      %101 = sbr.rel (0) target = $region41
    $region40: #{tpu_custom_call.1} parent=1 // pred_region
      %s103 = ssub.s32 6144, 6144
      %104 = vsyncadd [#allocation12], %s103
      %s105 = sshll.u32 [#allocation13], 4
      %s106 = int_to_ptr.vmem [resolvable:$true] %s105
      %111 = dma.hbm_to_vmem [thread:$0]  %s9, 6144, %s106, [#allocation12], 128, 128, 8
    $region41: #{tpu_custom_call.1} parent=1 // pred_fallthru
      _
    // Predicated region
    $region42: #{tpu_custom_call.1} parent=1 // pred_check
      _
    $region43: #{tpu_custom_call.1} parent=1 // pred_check_branch
      %113 = sbr.rel (0) target = $region45
    $region44: #{tpu_custom_call.1} parent=1 // pred_region
      _
    $region45: #{tpu_custom_call.1} parent=1 // pred_fallthru
      _
    // Predicated region
    $region46: #{tpu_custom_call.1} parent=1 // pred_check
      _
    $region47: #{tpu_custom_call.1} parent=1 // pred_check_branch
      %115 = sbr.rel (0) target = $region49
    $region48: #{tpu_custom_call.1} parent=1 // pred_region
      %116 = dma.done [#allocation3], 128
    $region49: #{tpu_custom_call.1} parent=1 // pred_fallthru
      _
    // Predicated region
    $region50: #{tpu_custom_call.1} parent=1 // pred_check
      _
    $region51: #{tpu_custom_call.1} parent=1 // pred_check_branch
      %118 = sbr.rel (0) target = $region53
    $region52: #{tpu_custom_call.1} parent=1 // pred_region
      %119 = dma.done [#allocation6], 1024
    $region53: #{tpu_custom_call.1} parent=1 // pred_fallthru
      _
    // Predicated region
    $region54: #{tpu_custom_call.1} parent=1 // pred_check
      _
    $region55: #{tpu_custom_call.1} parent=1 // pred_check_branch
      %121 = sbr.rel (0) target = $region57
    $region56: #{tpu_custom_call.1} parent=1 // pred_region
      %122 = dma.done [#allocation6], 1024
    $region57: #{tpu_custom_call.1} parent=1 // pred_fallthru
      _
    // Predicated region
    $region58: #{tpu_custom_call.1} parent=1 // pred_check
      _
    $region59: #{tpu_custom_call.1} parent=1 // pred_check_branch
      %124 = sbr.rel (0) target = $region61
    $region60: #{tpu_custom_call.1} parent=1 // pred_region
      %125 = dma.done [#allocation9], 16
    $region61: #{tpu_custom_call.1} parent=1 // pred_fallthru
      _
    // Predicated region
    $region62: #{tpu_custom_call.1} parent=1 // pred_check
      _
    $region63: #{tpu_custom_call.1} parent=1 // pred_check_branch
      %127 = sbr.rel (0) target = $region65
    $region64: #{tpu_custom_call.1} parent=1 // pred_region
      %128 = dma.done [#allocation9], 8192
    $region65: #{tpu_custom_call.1} parent=1 // pred_fallthru
      _
    // Predicated region
    $region66: #{tpu_custom_call.1} parent=1 // pred_check
      _
    $region67: #{tpu_custom_call.1} parent=1 // pred_check_branch
      %130 = sbr.rel (0) target = $region69
    $region68: #{tpu_custom_call.1} parent=1 // pred_region
      %131 = dma.done [#allocation12], 24576
    $region69: #{tpu_custom_call.1} parent=1 // pred_fallthru
      _
    // Predicated region
    $region70: #{tpu_custom_call.1} parent=1 // pred_check
      _
    $region71: #{tpu_custom_call.1} parent=1 // pred_check_branch
      %133 = sbr.rel (0) target = $region73
    $region72: #{tpu_custom_call.1} parent=1 // pred_region
      %134 = dma.done [#allocation12], 6144
    $region73: #{tpu_custom_call.1} parent=1 // pred_fallthru
      _
    %v136 = vld [vmem:[#allocation2] sm:$0xf]
    %v137 = vld [vmem:[#allocation2 + $0x4] sm:$0xf]
    %v138 = vld [vmem:[#allocation5] sm:$0xf]
    %v139 = vld [vmem:[#allocation5 + $0x4] sm:$0xf]
    %v140 = vld [vmem:[#allocation5 + $0x8] sm:$0xf]
    %v141 = vld [vmem:[#allocation5 + $0xc] sm:$0xf]
    %v142 = vld [vmem:[#allocation5 + $0x10] sm:$0xf]
    %v143 = vld [vmem:[#allocation5 + $0x14] sm:$0xf]
    %v144 = vld [vmem:[#allocation5 + $0x18] sm:$0xf]
    %v145 = vld [vmem:[#allocation5 + $0x1c] sm:$0xf]
    %v146 = vld [vmem:[#allocation5 + $0x20] sm:$0xf]
    %v147 = vld [vmem:[#allocation5 + $0x24] sm:$0xf]
    %v148 = vld [vmem:[#allocation5 + $0x28] sm:$0xf]
    %v149 = vld [vmem:[#allocation5 + $0x2c] sm:$0xf]
    %v150 = vld [vmem:[#allocation5 + $0x30] sm:$0xf]
    %v151 = vld [vmem:[#allocation5 + $0x34] sm:$0xf]
    %v152 = vld [vmem:[#allocation5 + $0x38] sm:$0xf]
    %v153 = vld [vmem:[#allocation5 + $0x3c] sm:$0xf]
    %v154 = vld [vmem:[%s2] sm:$0x1]
    %v156 = vlaneseq
    %v157 = vshrl.u32 %v156, 7
    %v158 = vsub.s32 0, %v157
    %v159 = vrot.slane %v154, %v158
    %v163 = vunpack.c.l.b16 %v136
    %v164 = vunpack.c.l.b16 %v137
    %v165 = vpack.c.b16 %v164, %v163
    %v183 = vunpack.c.l.b16 %v138
    %v184 = vunpack.c.l.b16 %v139
    %v185 = vunpack.c.l.b16 %v140
    %v186 = vunpack.c.l.b16 %v141
    %v187 = vunpack.c.l.b16 %v142
    %v188 = vunpack.c.l.b16 %v143
    %v189 = vunpack.c.l.b16 %v144
    %v190 = vunpack.c.l.b16 %v145
    %v191 = vunpack.c.l.b16 %v146
    %v192 = vunpack.c.l.b16 %v147
    %v193 = vunpack.c.l.b16 %v148
    %v194 = vunpack.c.l.b16 %v149
    %v195 = vunpack.c.l.b16 %v150
    %v196 = vunpack.c.l.b16 %v151
    %v197 = vunpack.c.l.b16 %v152
    %v198 = vunpack.c.l.b16 %v153
    %v199 = vpack.c.b16 %v184, %v183
    %v200 = vpack.c.b16 %v186, %v185
    %v201 = vpack.c.b16 %v188, %v187
    %v202 = vpack.c.b16 %v190, %v189
    %v203 = vpack.c.b16 %v192, %v191
    %v204 = vpack.c.b16 %v194, %v193
    %v205 = vpack.c.b16 %v196, %v195
    %v206 = vpack.c.b16 %v198, %v197
    %215 = vmatprep.subr.bf16.mxu0 0
    %216 = vmatpush1.bf16.msra.mxu0 %v206
    %217 = vmatprep.subr.bf16.mxu0 0
    %218 = vmatpush1.bf16.msra.mxu0 %v205
    %219 = vmatprep.subr.bf16.mxu0 0
    %220 = vmatpush1.bf16.msra.mxu0 %v204
    %221 = vmatprep.subr.bf16.mxu0 0
    %222 = vmatpush1.bf16.msra.mxu0 %v203
    %223 = vmatprep.subr.bf16.mxu0 0
    %224 = vmatpush1.bf16.msra.mxu0 %v202
    %225 = vmatprep.subr.bf16.mxu0 0
    %226 = vmatpush1.bf16.msra.mxu0 %v201
    %227 = vmatprep.subr.bf16.mxu0 0
    %228 = vmatpush1.bf16.msra.mxu0 %v200
    %229 = vmatprep.subr.bf16.mxu0 0
    %230 = vmatpush1.bf16.msra.mxu0 %v199
    %231 = vmatprep.subr.bf16.mxu0 0
    %232 = vmatpush2.bf16.msra.mxu0 0
    %233 = vmatprep.subr.bf16.mxu0 0
    %234 = vmatpush2.bf16.msra.mxu0 0
    %235 = vmatprep.subr.bf16.mxu0 0
    %236 = vmatpush2.bf16.msra.mxu0 0
    %237 = vmatprep.subr.bf16.mxu0 0
    %238 = vmatpush2.bf16.msra.mxu0 0
    %239 = vmatprep.subr.bf16.mxu0 0
    %240 = vmatpush2.bf16.msra.mxu0 0
    %241 = vmatprep.subr.bf16.mxu0 0
    %242 = vmatpush2.bf16.msra.mxu0 0
    %243 = vmatprep.subr.bf16.mxu0 0
    %244 = vmatpush2.bf16.msra.mxu0 0
    %245 = vmatprep.subr.bf16.mxu0 0
    %246 = vmatpush2.bf16.msra.mxu0 0
    %247 = vmatprep.mubr.bf16.mxu0 0
    %248 = vmatmul.mubr.bf16.gmra.mxu0 %v165
    %v249 = vpop.f32.mrf.mxu0
    %v250 = vadd.f32 %v159, %v249
    %v251 = vpop.f32.mrf.mxu0
    %v252 = vpop.f32.mrf.mxu0
    %v253 = vadd.f32 %v159, %v252
    %v254 = vpop.f32.mrf.mxu0
    %255 = vdwg.mxu0
    %v256 = vmul.f32 %v250, 0.3
    %v257 = vmul.f32 %v253, 0.3
    %v258 = vmax.f32 %v250, %v256
    %v259 = vmax.f32 %v253, %v257
    %v260 = vpack.c.bf16 %v259, %v258
    %v261 = vld [vmem:[#allocation7] sm:$0xf]
    %v262 = vld [vmem:[#allocation7 + $0x4] sm:$0xf]
    %v263 = vld [vmem:[#allocation7 + $0x8] sm:$0xf]
    %v264 = vld [vmem:[#allocation7 + $0xc] sm:$0xf]
    %v265 = vld [vmem:[#allocation7 + $0x10] sm:$0xf]
    %v266 = vld [vmem:[#allocation7 + $0x14] sm:$0xf]
    %v267 = vld [vmem:[#allocation7 + $0x18] sm:$0xf]
    %v268 = vld [vmem:[#allocation7 + $0x1c] sm:$0xf]
    %v269 = vld [vmem:[#allocation7 + $0x20] sm:$0xf]
    %v270 = vld [vmem:[#allocation7 + $0x24] sm:$0xf]
    %v271 = vld [vmem:[#allocation7 + $0x28] sm:$0xf]
    %v272 = vld [vmem:[#allocation7 + $0x2c] sm:$0xf]
    %v273 = vld [vmem:[#allocation7 + $0x30] sm:$0xf]
    %v274 = vld [vmem:[#allocation7 + $0x34] sm:$0xf]
    %v275 = vld [vmem:[#allocation7 + $0x38] sm:$0xf]
    %v276 = vld [vmem:[#allocation7 + $0x3c] sm:$0xf]
    %v277 = vld [vmem:[#allocation8] sm:$0x1]
    %v279 = vlaneseq
    %v280 = vshrl.u32 %v279, 7
    %v281 = vsub.s32 0, %v280
    %v282 = vrot.slane %v277, %v281
    %v300 = vunpack.c.l.b16 %v261
    %v301 = vunpack.c.l.b16 %v262
    %v302 = vunpack.c.l.b16 %v263
    %v303 = vunpack.c.l.b16 %v264
    %v304 = vunpack.c.l.b16 %v265
    %v305 = vunpack.c.l.b16 %v266
    %v306 = vunpack.c.l.b16 %v267
    %v307 = vunpack.c.l.b16 %v268
    %v308 = vunpack.c.l.b16 %v269
    %v309 = vunpack.c.l.b16 %v270
    %v310 = vunpack.c.l.b16 %v271
    %v311 = vunpack.c.l.b16 %v272
    %v312 = vunpack.c.l.b16 %v273
    %v313 = vunpack.c.l.b16 %v274
    %v314 = vunpack.c.l.b16 %v275
    %v315 = vunpack.c.l.b16 %v276
    %v316 = vpack.c.b16 %v301, %v300
    %v317 = vpack.c.b16 %v303, %v302
    %v318 = vpack.c.b16 %v305, %v304
    %v319 = vpack.c.b16 %v307, %v306
    %v320 = vpack.c.b16 %v309, %v308
    %v321 = vpack.c.b16 %v311, %v310
    %v322 = vpack.c.b16 %v313, %v312
    %v323 = vpack.c.b16 %v315, %v314
    %332 = vmatprep.subr.bf16.mxu0 0
    %333 = vmatpush1.bf16.msra.mxu0 %v323
    %334 = vmatprep.subr.bf16.mxu0 0
    %335 = vmatpush1.bf16.msra.mxu0 %v322
    %336 = vmatprep.subr.bf16.mxu0 0
    %337 = vmatpush1.bf16.msra.mxu0 %v321
    %338 = vmatprep.subr.bf16.mxu0 0
    %339 = vmatpush1.bf16.msra.mxu0 %v320
    %340 = vmatprep.subr.bf16.mxu0 0
    %341 = vmatpush1.bf16.msra.mxu0 %v319
    %342 = vmatprep.subr.bf16.mxu0 0
    %343 = vmatpush1.bf16.msra.mxu0 %v318
    %344 = vmatprep.subr.bf16.mxu0 0
    %345 = vmatpush1.bf16.msra.mxu0 %v317
    %346 = vmatprep.subr.bf16.mxu0 0
    %347 = vmatpush1.bf16.msra.mxu0 %v316
    %348 = vmatprep.subr.bf16.mxu0 0
    %349 = vmatpush2.bf16.msra.mxu0 0
    %350 = vmatprep.subr.bf16.mxu0 0
    %351 = vmatpush2.bf16.msra.mxu0 0
    %352 = vmatprep.subr.bf16.mxu0 0
    %353 = vmatpush2.bf16.msra.mxu0 0
    %354 = vmatprep.subr.bf16.mxu0 0
    %355 = vmatpush2.bf16.msra.mxu0 0
    %356 = vmatprep.subr.bf16.mxu0 0
    %357 = vmatpush2.bf16.msra.mxu0 0
    %358 = vmatprep.subr.bf16.mxu0 0
    %359 = vmatpush2.bf16.msra.mxu0 0
    %360 = vmatprep.subr.bf16.mxu0 0
    %361 = vmatpush2.bf16.msra.mxu0 0
    %362 = vmatprep.subr.bf16.mxu0 0
    %363 = vmatpush2.bf16.msra.mxu0 0
    %364 = vmatprep.mubr.bf16.mxu0 0
    %365 = vmatmul.mubr.bf16.gmra.mxu0 %v260
    %v366 = vpop.f32.mrf.mxu0
    %v367 = vadd.f32 %v282, %v366
    %v368 = vpop.f32.mrf.mxu0
    %v369 = vpop.f32.mrf.mxu0
    %v370 = vadd.f32 %v282, %v369
    %v371 = vpop.f32.mrf.mxu0
    %372 = vdwg.mxu0
    %v373 = vpack.c.bf16 %v370, %v367
    %v374 = vld [vmem:[#allocation10] sm:$0xff]
    %v375 = vld [vmem:[#allocation10 + $0x8] sm:$0xff]
    %v376 = vld [vmem:[#allocation10 + $0x10] sm:$0xff]
    %v377 = vld [vmem:[#allocation10 + $0x18] sm:$0xff]
    %v378 = vld [vmem:[#allocation10 + $0x20] sm:$0xff]
    %v379 = vld [vmem:[#allocation10 + $0x28] sm:$0xff]
    %v380 = vld [vmem:[#allocation10 + $0x30] sm:$0xff]
    %v381 = vld [vmem:[#allocation10 + $0x38] sm:$0xff]
    %v382 = vld [vmem:[#allocation10 + $0x40] sm:$0xff]
    %v383 = vld [vmem:[#allocation10 + $0x48] sm:$0xff]
    %v384 = vld [vmem:[#allocation10 + $0x50] sm:$0xff]
    %v385 = vld [vmem:[#allocation10 + $0x58] sm:$0xff]
    %v386 = vld [vmem:[#allocation10 + $0x60] sm:$0xff]
    %v387 = vld [vmem:[#allocation10 + $0x68] sm:$0xff]
    %v388 = vld [vmem:[#allocation10 + $0x70] sm:$0xff]
    %v389 = vld [vmem:[#allocation10 + $0x78] sm:$0xff]
    %v390 = vld [vmem:[#allocation10 + $0x80] sm:$0xff]
    %v391 = vld [vmem:[#allocation10 + $0x88] sm:$0xff]
    %v392 = vld [vmem:[#allocation10 + $0x90] sm:$0xff]
    %v393 = vld [vmem:[#allocation10 + $0x98] sm:$0xff]
    %v394 = vld [vmem:[#allocation10 + $0xa0] sm:$0xff]
    %v395 = vld [vmem:[#allocation10 + $0xa8] sm:$0xff]
    %v396 = vld [vmem:[#allocation10 + $0xb0] sm:$0xff]
    %v397 = vld [vmem:[#allocation10 + $0xb8] sm:$0xff]
    %v398 = vld [vmem:[#allocation10 + $0xc0] sm:$0xff]
    %v399 = vld [vmem:[#allocation10 + $0xc8] sm:$0xff]
    %v400 = vld [vmem:[#allocation10 + $0xd0] sm:$0xff]
    %v401 = vld [vmem:[#allocation10 + $0xd8] sm:$0xff]
    %v402 = vld [vmem:[#allocation10 + $0xe0] sm:$0xff]
    %v403 = vld [vmem:[#allocation10 + $0xe8] sm:$0xff]
    %v404 = vld [vmem:[#allocation10 + $0xf0] sm:$0xff]
    %v405 = vld [vmem:[#allocation10 + $0xf8] sm:$0xff]
    %v406 = vld [vmem:[#allocation10 + $0x100] sm:$0xff]
    %v407 = vld [vmem:[#allocation10 + $0x108] sm:$0xff]
    %v408 = vld [vmem:[#allocation10 + $0x110] sm:$0xff]
    %v409 = vld [vmem:[#allocation10 + $0x118] sm:$0xff]
    %v410 = vld [vmem:[#allocation10 + $0x120] sm:$0xff]
    %v411 = vld [vmem:[#allocation10 + $0x128] sm:$0xff]
    %v412 = vld [vmem:[#allocation10 + $0x130] sm:$0xff]
    %v413 = vld [vmem:[#allocation10 + $0x138] sm:$0xff]
    %v414 = vld [vmem:[#allocation10 + $0x140] sm:$0xff]
    %v415 = vld [vmem:[#allocation10 + $0x148] sm:$0xff]
    %v416 = vld [vmem:[#allocation10 + $0x150] sm:$0xff]
    %v417 = vld [vmem:[#allocation10 + $0x158] sm:$0xff]
    %v418 = vld [vmem:[#allocation10 + $0x160] sm:$0xff]
    %v419 = vld [vmem:[#allocation10 + $0x168] sm:$0xff]
    %v420 = vld [vmem:[#allocation10 + $0x170] sm:$0xff]
    %v421 = vld [vmem:[#allocation10 + $0x178] sm:$0xff]
    %v422 = vld [vmem:[#allocation10 + $0x180] sm:$0xff]
    %v423 = vld [vmem:[#allocation10 + $0x188] sm:$0xff]
    %v424 = vld [vmem:[#allocation10 + $0x190] sm:$0xff]
    %v425 = vld [vmem:[#allocation10 + $0x198] sm:$0xff]
    %v426 = vld [vmem:[#allocation10 + $0x1a0] sm:$0xff]
    %v427 = vld [vmem:[#allocation10 + $0x1a8] sm:$0xff]
    %v428 = vld [vmem:[#allocation10 + $0x1b0] sm:$0xff]
    %v429 = vld [vmem:[#allocation10 + $0x1b8] sm:$0xff]
    %v430 = vld [vmem:[#allocation10 + $0x1c0] sm:$0xff]
    %v431 = vld [vmem:[#allocation10 + $0x1c8] sm:$0xff]
    %v432 = vld [vmem:[#allocation10 + $0x1d0] sm:$0xff]
    %v433 = vld [vmem:[#allocation10 + $0x1d8] sm:$0xff]
    %v434 = vld [vmem:[#allocation10 + $0x1e0] sm:$0xff]
    %v435 = vld [vmem:[#allocation10 + $0x1e8] sm:$0xff]
    %v436 = vld [vmem:[#allocation10 + $0x1f0] sm:$0xff]
    %v437 = vld [vmem:[#allocation10 + $0x1f8] sm:$0xff]
    %v438 = vld [vmem:[%s6] sm:$0xff]
    %v440 = vlaneseq
    %v441 = vshrl.u32 %v440, 7
    %v442 = vsub.s32 0, %v441
    %v443 = vrot.slane %v438, %v442
    %v444 = vlaneseq
    %v445 = vshrl.u32 %v444, 7
    %v446 = vsub.s32 1, %v445
    %v447 = vrot.slane %v438, %v446
    %v448 = vlaneseq
    %v449 = vshrl.u32 %v448, 7
    %v450 = vsub.s32 2, %v449
    %v451 = vrot.slane %v438, %v450
    %v452 = vlaneseq
    %v453 = vshrl.u32 %v452, 7
    %v454 = vsub.s32 3, %v453
    %v455 = vrot.slane %v438, %v454
    %v456 = vlaneseq
    %v457 = vshrl.u32 %v456, 7
    %v458 = vsub.s32 4, %v457
    %v459 = vrot.slane %v438, %v458
    %v460 = vlaneseq
    %v461 = vshrl.u32 %v460, 7
    %v462 = vsub.s32 5, %v461
    %v463 = vrot.slane %v438, %v462
    %v464 = vlaneseq
    %v465 = vshrl.u32 %v464, 7
    %v466 = vsub.s32 6, %v465
    %v467 = vrot.slane %v438, %v466
    %v468 = vlaneseq
    %v469 = vshrl.u32 %v468, 7
    %v470 = vsub.s32 7, %v469
    %v471 = vrot.slane %v438, %v470
    %v544 = vunpack.c.l.b16 %v374
    %v545 = vunpack.c.h.b16 %v374
    %v546 = vunpack.c.l.b16 %v375
    %v547 = vunpack.c.h.b16 %v375
    %v548 = vunpack.c.l.b16 %v376
    %v549 = vunpack.c.h.b16 %v376
    %v550 = vunpack.c.l.b16 %v377
    %v551 = vunpack.c.h.b16 %v377
    %v552 = vunpack.c.l.b16 %v378
    %v553 = vunpack.c.h.b16 %v378
    %v554 = vunpack.c.l.b16 %v379
    %v555 = vunpack.c.h.b16 %v379
    %v556 = vunpack.c.l.b16 %v380
    %v557 = vunpack.c.h.b16 %v380
    %v558 = vunpack.c.l.b16 %v381
    %v559 = vunpack.c.h.b16 %v381
    %v560 = vunpack.c.l.b16 %v382
    %v561 = vunpack.c.h.b16 %v382
    %v562 = vunpack.c.l.b16 %v383
    %v563 = vunpack.c.h.b16 %v383
    %v564 = vunpack.c.l.b16 %v384
    %v565 = vunpack.c.h.b16 %v384
    %v566 = vunpack.c.l.b16 %v385
    %v567 = vunpack.c.h.b16 %v385
    %v568 = vunpack.c.l.b16 %v386
    %v569 = vunpack.c.h.b16 %v386
    %v570 = vunpack.c.l.b16 %v387
    %v571 = vunpack.c.h.b16 %v387
    %v572 = vunpack.c.l.b16 %v388
    %v573 = vunpack.c.h.b16 %v388
    %v574 = vunpack.c.l.b16 %v389
    %v575 = vunpack.c.h.b16 %v389
    %v576 = vunpack.c.l.b16 %v390
    %v577 = vunpack.c.h.b16 %v390
    %v578 = vunpack.c.l.b16 %v391
    %v579 = vunpack.c.h.b16 %v391
    %v580 = vunpack.c.l.b16 %v392
    %v581 = vunpack.c.h.b16 %v392
    %v582 = vunpack.c.l.b16 %v393
    %v583 = vunpack.c.h.b16 %v393
    %v584 = vunpack.c.l.b16 %v394
    %v585 = vunpack.c.h.b16 %v394
    %v586 = vunpack.c.l.b16 %v395
    %v587 = vunpack.c.h.b16 %v395
    %v588 = vunpack.c.l.b16 %v396
    %v589 = vunpack.c.h.b16 %v396
    %v590 = vunpack.c.l.b16 %v397
    %v591 = vunpack.c.h.b16 %v397
    %v592 = vunpack.c.l.b16 %v398
    %v593 = vunpack.c.h.b16 %v398
    %v594 = vunpack.c.l.b16 %v399
    %v595 = vunpack.c.h.b16 %v399
    %v596 = vunpack.c.l.b16 %v400
    %v597 = vunpack.c.h.b16 %v400
    %v598 = vunpack.c.l.b16 %v401
    %v599 = vunpack.c.h.b16 %v401
    %v600 = vunpack.c.l.b16 %v402
    %v601 = vunpack.c.h.b16 %v402
    %v602 = vunpack.c.l.b16 %v403
    %v603 = vunpack.c.h.b16 %v403
    %v604 = vunpack.c.l.b16 %v404
    %v605 = vunpack.c.h.b16 %v404
    %v606 = vunpack.c.l.b16 %v405
    %v607 = vunpack.c.h.b16 %v405
    %v608 = vunpack.c.l.b16 %v406
    %v609 = vunpack.c.h.b16 %v406
    %v610 = vunpack.c.l.b16 %v407
    %v611 = vunpack.c.h.b16 %v407
    %v612 = vunpack.c.l.b16 %v408
    %v613 = vunpack.c.h.b16 %v408
    %v614 = vunpack.c.l.b16 %v409
    %v615 = vunpack.c.h.b16 %v409
    %v616 = vunpack.c.l.b16 %v410
    %v617 = vunpack.c.h.b16 %v410
    %v618 = vunpack.c.l.b16 %v411
    %v619 = vunpack.c.h.b16 %v411
    %v620 = vunpack.c.l.b16 %v412
    %v621 = vunpack.c.h.b16 %v412
    %v622 = vunpack.c.l.b16 %v413
    %v623 = vunpack.c.h.b16 %v413
    %v624 = vunpack.c.l.b16 %v414
    %v625 = vunpack.c.h.b16 %v414
    %v626 = vunpack.c.l.b16 %v415
    %v627 = vunpack.c.h.b16 %v415
    %v628 = vunpack.c.l.b16 %v416
    %v629 = vunpack.c.h.b16 %v416
    %v630 = vunpack.c.l.b16 %v417
    %v631 = vunpack.c.h.b16 %v417
    %v632 = vunpack.c.l.b16 %v418
    %v633 = vunpack.c.h.b16 %v418
    %v634 = vunpack.c.l.b16 %v419
    %v635 = vunpack.c.h.b16 %v419
    %v636 = vunpack.c.l.b16 %v420
    %v637 = vunpack.c.h.b16 %v420
    %v638 = vunpack.c.l.b16 %v421
    %v639 = vunpack.c.h.b16 %v421
    %v640 = vunpack.c.l.b16 %v422
    %v641 = vunpack.c.h.b16 %v422
    %v642 = vunpack.c.l.b16 %v423
    %v643 = vunpack.c.h.b16 %v423
    %v644 = vunpack.c.l.b16 %v424
    %v645 = vunpack.c.h.b16 %v424
    %v646 = vunpack.c.l.b16 %v425
    %v647 = vunpack.c.h.b16 %v425
    %v648 = vunpack.c.l.b16 %v426
    %v649 = vunpack.c.h.b16 %v426
    %v650 = vunpack.c.l.b16 %v427
    %v651 = vunpack.c.h.b16 %v427
    %v652 = vunpack.c.l.b16 %v428
    %v653 = vunpack.c.h.b16 %v428
    %v654 = vunpack.c.l.b16 %v429
    %v655 = vunpack.c.h.b16 %v429
    %v656 = vunpack.c.l.b16 %v430
    %v657 = vunpack.c.h.b16 %v430
    %v658 = vunpack.c.l.b16 %v431
    %v659 = vunpack.c.h.b16 %v431
    %v660 = vunpack.c.l.b16 %v432
    %v661 = vunpack.c.h.b16 %v432
    %v662 = vunpack.c.l.b16 %v433
    %v663 = vunpack.c.h.b16 %v433
    %v664 = vunpack.c.l.b16 %v434
    %v665 = vunpack.c.h.b16 %v434
    %v666 = vunpack.c.l.b16 %v435
    %v667 = vunpack.c.h.b16 %v435
    %v668 = vunpack.c.l.b16 %v436
    %v669 = vunpack.c.h.b16 %v436
    %v670 = vunpack.c.l.b16 %v437
    %v671 = vunpack.c.h.b16 %v437
    %v672 = vpack.c.b16 %v552, %v544
    %v673 = vpack.c.b16 %v553, %v545
    %v674 = vpack.c.b16 %v554, %v546
    %v675 = vpack.c.b16 %v555, %v547
    %v676 = vpack.c.b16 %v556, %v548
    %v677 = vpack.c.b16 %v557, %v549
    %v678 = vpack.c.b16 %v558, %v550
    %v679 = vpack.c.b16 %v559, %v551
    %v680 = vpack.c.b16 %v568, %v560
    %v681 = vpack.c.b16 %v569, %v561
    %v682 = vpack.c.b16 %v570, %v562
    %v683 = vpack.c.b16 %v571, %v563
    %v684 = vpack.c.b16 %v572, %v564
    %v685 = vpack.c.b16 %v573, %v565
    %v686 = vpack.c.b16 %v574, %v566
    %v687 = vpack.c.b16 %v575, %v567
    %v688 = vpack.c.b16 %v584, %v576
    %v689 = vpack.c.b16 %v585, %v577
    %v690 = vpack.c.b16 %v586, %v578
    %v691 = vpack.c.b16 %v587, %v579
    %v692 = vpack.c.b16 %v588, %v580
    %v693 = vpack.c.b16 %v589, %v581
    %v694 = vpack.c.b16 %v590, %v582
    %v695 = vpack.c.b16 %v591, %v583
    %v696 = vpack.c.b16 %v600, %v592
    %v697 = vpack.c.b16 %v601, %v593
    %v698 = vpack.c.b16 %v602, %v594
    %v699 = vpack.c.b16 %v603, %v595
    %v700 = vpack.c.b16 %v604, %v596
    %v701 = vpack.c.b16 %v605, %v597
    %v702 = vpack.c.b16 %v606, %v598
    %v703 = vpack.c.b16 %v607, %v599
    %v704 = vpack.c.b16 %v616, %v608
    %v705 = vpack.c.b16 %v617, %v609
    %v706 = vpack.c.b16 %v618, %v610
    %v707 = vpack.c.b16 %v619, %v611
    %v708 = vpack.c.b16 %v620, %v612
    %v709 = vpack.c.b16 %v621, %v613
    %v710 = vpack.c.b16 %v622, %v614
    %v711 = vpack.c.b16 %v623, %v615
    %v712 = vpack.c.b16 %v632, %v624
    %v713 = vpack.c.b16 %v633, %v625
    %v714 = vpack.c.b16 %v634, %v626
    %v715 = vpack.c.b16 %v635, %v627
    %v716 = vpack.c.b16 %v636, %v628
    %v717 = vpack.c.b16 %v637, %v629
    %v718 = vpack.c.b16 %v638, %v630
    %v719 = vpack.c.b16 %v639, %v631
    %v720 = vpack.c.b16 %v648, %v640
    %v721 = vpack.c.b16 %v649, %v641
    %v722 = vpack.c.b16 %v650, %v642
    %v723 = vpack.c.b16 %v651, %v643
    %v724 = vpack.c.b16 %v652, %v644
    %v725 = vpack.c.b16 %v653, %v645
    %v726 = vpack.c.b16 %v654, %v646
    %v727 = vpack.c.b16 %v655, %v647
    %v728 = vpack.c.b16 %v664, %v656
    %v729 = vpack.c.b16 %v665, %v657
    %v730 = vpack.c.b16 %v666, %v658
    %v731 = vpack.c.b16 %v667, %v659
    %v732 = vpack.c.b16 %v668, %v660
    %v733 = vpack.c.b16 %v669, %v661
    %v734 = vpack.c.b16 %v670, %v662
    %v735 = vpack.c.b16 %v671, %v663
    %800 = vmatprep.subr.bf16.mxu0 %v729
    %801 = vmatpush1.bf16.msra.mxu0 %v728
    %802 = vmatprep.subr.bf16.mxu0 %v721
    %803 = vmatpush1.bf16.msra.mxu0 %v720
    %804 = vmatprep.subr.bf16.mxu0 %v713
    %805 = vmatpush1.bf16.msra.mxu0 %v712
    %806 = vmatprep.subr.bf16.mxu0 %v705
    %807 = vmatpush1.bf16.msra.mxu0 %v704
    %808 = vmatprep.subr.bf16.mxu0 %v697
    %809 = vmatpush1.bf16.msra.mxu0 %v696
    %810 = vmatprep.subr.bf16.mxu0 %v689
    %811 = vmatpush1.bf16.msra.mxu0 %v688
    %812 = vmatprep.subr.bf16.mxu0 %v681
    %813 = vmatpush1.bf16.msra.mxu0 %v680
    %814 = vmatprep.subr.bf16.mxu0 %v673
    %815 = vmatpush1.bf16.msra.mxu0 %v672
    %816 = vmatprep.subr.bf16.mxu0 0
    %817 = vmatpush2.bf16.msra.mxu0 0
    %818 = vmatprep.subr.bf16.mxu0 0
    %819 = vmatpush2.bf16.msra.mxu0 0
    %820 = vmatprep.subr.bf16.mxu0 0
    %821 = vmatpush2.bf16.msra.mxu0 0
    %822 = vmatprep.subr.bf16.mxu0 0
    %823 = vmatpush2.bf16.msra.mxu0 0
    %824 = vmatprep.subr.bf16.mxu0 0
    %825 = vmatpush2.bf16.msra.mxu0 0
    %826 = vmatprep.subr.bf16.mxu0 0
    %827 = vmatpush2.bf16.msra.mxu0 0
    %828 = vmatprep.subr.bf16.mxu0 0
    %829 = vmatpush2.bf16.msra.mxu0 0
    %830 = vmatprep.subr.bf16.mxu0 0
    %831 = vmatpush2.bf16.msra.mxu0 0
    %832 = vmatprep.mubr.bf16.mxu0 0
    %833 = vmatmul.mubr.bf16.gmra.mxu0 %v373
    %v834 = vpop.f32.mrf.mxu0
    %v835 = vadd.f32 %v443, %v834
    %v836 = vpop.f32.mrf.mxu0
    %v837 = vadd.f32 %v447, %v836
    %v838 = vpop.f32.mrf.mxu0
    %v839 = vadd.f32 %v443, %v838
    %v840 = vpop.f32.mrf.mxu0
    %v841 = vadd.f32 %v447, %v840
    %842 = vdwg.mxu0
    %843 = vmatprep.subr.bf16.mxu0 %v731
    %844 = vmatpush1.bf16.msra.mxu0 %v730
    %845 = vmatprep.subr.bf16.mxu0 %v723
    %846 = vmatpush1.bf16.msra.mxu0 %v722
    %847 = vmatprep.subr.bf16.mxu0 %v715
    %848 = vmatpush1.bf16.msra.mxu0 %v714
    %849 = vmatprep.subr.bf16.mxu0 %v707
    %850 = vmatpush1.bf16.msra.mxu0 %v706
    %851 = vmatprep.subr.bf16.mxu0 %v699
    %852 = vmatpush1.bf16.msra.mxu0 %v698
    %853 = vmatprep.subr.bf16.mxu0 %v691
    %854 = vmatpush1.bf16.msra.mxu0 %v690
    %855 = vmatprep.subr.bf16.mxu0 %v683
    %856 = vmatpush1.bf16.msra.mxu0 %v682
    %857 = vmatprep.subr.bf16.mxu0 %v675
    %858 = vmatpush1.bf16.msra.mxu0 %v674
    %859 = vmatprep.subr.bf16.mxu0 0
    %860 = vmatpush2.bf16.msra.mxu0 0
    %861 = vmatprep.subr.bf16.mxu0 0
    %862 = vmatpush2.bf16.msra.mxu0 0
    %863 = vmatprep.subr.bf16.mxu0 0
    %864 = vmatpush2.bf16.msra.mxu0 0
    %865 = vmatprep.subr.bf16.mxu0 0
    %866 = vmatpush2.bf16.msra.mxu0 0
    %867 = vmatprep.subr.bf16.mxu0 0
    %868 = vmatpush2.bf16.msra.mxu0 0
    %869 = vmatprep.subr.bf16.mxu0 0
    %870 = vmatpush2.bf16.msra.mxu0 0
    %871 = vmatprep.subr.bf16.mxu0 0
    %872 = vmatpush2.bf16.msra.mxu0 0
    %873 = vmatprep.subr.bf16.mxu0 0
    %874 = vmatpush2.bf16.msra.mxu0 0
    %875 = vmatprep.mubr.bf16.mxu0 0
    %876 = vmatmul.mubr.bf16.gmra.mxu0 %v373
    %v877 = vpop.f32.mrf.mxu0
    %v878 = vadd.f32 %v451, %v877
    %v879 = vpop.f32.mrf.mxu0
    %v880 = vadd.f32 %v455, %v879
    %v881 = vpop.f32.mrf.mxu0
    %v882 = vadd.f32 %v451, %v881
    %v883 = vpop.f32.mrf.mxu0
    %v884 = vadd.f32 %v455, %v883
    %885 = vdwg.mxu0
    %886 = vmatprep.subr.bf16.mxu0 %v733
    %887 = vmatpush1.bf16.msra.mxu0 %v732
    %888 = vmatprep.subr.bf16.mxu0 %v725
    %889 = vmatpush1.bf16.msra.mxu0 %v724
    %890 = vmatprep.subr.bf16.mxu0 %v717
    %891 = vmatpush1.bf16.msra.mxu0 %v716
    %892 = vmatprep.subr.bf16.mxu0 %v709
    %893 = vmatpush1.bf16.msra.mxu0 %v708
    %894 = vmatprep.subr.bf16.mxu0 %v701
    %895 = vmatpush1.bf16.msra.mxu0 %v700
    %896 = vmatprep.subr.bf16.mxu0 %v693
    %897 = vmatpush1.bf16.msra.mxu0 %v692
    %898 = vmatprep.subr.bf16.mxu0 %v685
    %899 = vmatpush1.bf16.msra.mxu0 %v684
    %900 = vmatprep.subr.bf16.mxu0 %v677
    %901 = vmatpush1.bf16.msra.mxu0 %v676
    %902 = vmatprep.subr.bf16.mxu0 0
    %903 = vmatpush2.bf16.msra.mxu0 0
    %904 = vmatprep.subr.bf16.mxu0 0
    %905 = vmatpush2.bf16.msra.mxu0 0
    %906 = vmatprep.subr.bf16.mxu0 0
    %907 = vmatpush2.bf16.msra.mxu0 0
    %908 = vmatprep.subr.bf16.mxu0 0
    %909 = vmatpush2.bf16.msra.mxu0 0
    %910 = vmatprep.subr.bf16.mxu0 0
    %911 = vmatpush2.bf16.msra.mxu0 0
    %912 = vmatprep.subr.bf16.mxu0 0
    %913 = vmatpush2.bf16.msra.mxu0 0
    %914 = vmatprep.subr.bf16.mxu0 0
    %915 = vmatpush2.bf16.msra.mxu0 0
    %916 = vmatprep.subr.bf16.mxu0 0
    %917 = vmatpush2.bf16.msra.mxu0 0
    %918 = vmatprep.mubr.bf16.mxu0 0
    %919 = vmatmul.mubr.bf16.gmra.mxu0 %v373
    %v920 = vpop.f32.mrf.mxu0
    %v921 = vadd.f32 %v459, %v920
    %v922 = vpop.f32.mrf.mxu0
    %v923 = vadd.f32 %v463, %v922
    %v924 = vpop.f32.mrf.mxu0
    %v925 = vadd.f32 %v459, %v924
    %v926 = vpop.f32.mrf.mxu0
    %v927 = vadd.f32 %v463, %v926
    %928 = vdwg.mxu0
    %929 = vmatprep.subr.bf16.mxu0 %v735
    %930 = vmatpush1.bf16.msra.mxu0 %v734
    %931 = vmatprep.subr.bf16.mxu0 %v727
    %932 = vmatpush1.bf16.msra.mxu0 %v726
    %933 = vmatprep.subr.bf16.mxu0 %v719
    %934 = vmatpush1.bf16.msra.mxu0 %v718
    %935 = vmatprep.subr.bf16.mxu0 %v711
    %936 = vmatpush1.bf16.msra.mxu0 %v710
    %937 = vmatprep.subr.bf16.mxu0 %v703
    %938 = vmatpush1.bf16.msra.mxu0 %v702
    %939 = vmatprep.subr.bf16.mxu0 %v695
    %940 = vmatpush1.bf16.msra.mxu0 %v694
    %941 = vmatprep.subr.bf16.mxu0 %v687
    %942 = vmatpush1.bf16.msra.mxu0 %v686
    %943 = vmatprep.subr.bf16.mxu0 %v679
    %944 = vmatpush1.bf16.msra.mxu0 %v678
    %945 = vmatprep.subr.bf16.mxu0 0
    %946 = vmatpush2.bf16.msra.mxu0 0
    %947 = vmatprep.subr.bf16.mxu0 0
    %948 = vmatpush2.bf16.msra.mxu0 0
    %949 = vmatprep.subr.bf16.mxu0 0
    %950 = vmatpush2.bf16.msra.mxu0 0
    %951 = vmatprep.subr.bf16.mxu0 0
    %952 = vmatpush2.bf16.msra.mxu0 0
    %953 = vmatprep.subr.bf16.mxu0 0
    %954 = vmatpush2.bf16.msra.mxu0 0
    %955 = vmatprep.subr.bf16.mxu0 0
    %956 = vmatpush2.bf16.msra.mxu0 0
    %957 = vmatprep.subr.bf16.mxu0 0
    %958 = vmatpush2.bf16.msra.mxu0 0
    %959 = vmatprep.subr.bf16.mxu0 0
    %960 = vmatpush2.bf16.msra.mxu0 0
    %961 = vmatprep.mubr.bf16.mxu0 0
    %962 = vmatmul.mubr.bf16.gmra.mxu0 %v373
    %v963 = vpop.f32.mrf.mxu0
    %v964 = vadd.f32 %v467, %v963
    %v965 = vpop.f32.mrf.mxu0
    %v966 = vadd.f32 %v471, %v965
    %v967 = vpop.f32.mrf.mxu0
    %v968 = vadd.f32 %v467, %v967
    %v969 = vpop.f32.mrf.mxu0
    %v970 = vadd.f32 %v471, %v969
    %971 = vdwg.mxu0
    %v972 = vmul.f32 %v835, 0.1
    %v973 = vmul.f32 %v837, 0.1
    %v974 = vmul.f32 %v878, 0.1
    %v975 = vmul.f32 %v880, 0.1
    %v976 = vmul.f32 %v921, 0.1
    %v977 = vmul.f32 %v923, 0.1
    %v978 = vmul.f32 %v964, 0.1
    %v979 = vmul.f32 %v966, 0.1
    %v980 = vmul.f32 %v839, 0.1
    %v981 = vmul.f32 %v841, 0.1
    %v982 = vmul.f32 %v882, 0.1
    %v983 = vmul.f32 %v884, 0.1
    %v984 = vmul.f32 %v925, 0.1
    %v985 = vmul.f32 %v927, 0.1
    %v986 = vmul.f32 %v968, 0.1
    %v987 = vmul.f32 %v970, 0.1
    %v988 = vmax.f32 %v835, %v972
    %v989 = vmax.f32 %v837, %v973
    %v990 = vmax.f32 %v878, %v974
    %v991 = vmax.f32 %v880, %v975
    %v992 = vmax.f32 %v921, %v976
    %v993 = vmax.f32 %v923, %v977
    %v994 = vmax.f32 %v964, %v978
    %v995 = vmax.f32 %v966, %v979
    %v996 = vmax.f32 %v839, %v980
    %v997 = vmax.f32 %v841, %v981
    %v998 = vmax.f32 %v882, %v982
    %v999 = vmax.f32 %v884, %v983
    %v1000 = vmax.f32 %v925, %v984
    %v1001 = vmax.f32 %v927, %v985
    %v1002 = vmax.f32 %v968, %v986
    %v1003 = vmax.f32 %v970, %v987
    %v1004 = vpack.c.bf16 %v996, %v988
    %v1005 = vpack.c.bf16 %v997, %v989
    %v1006 = vpack.c.bf16 %v998, %v990
    %v1007 = vpack.c.bf16 %v999, %v991
    %v1008 = vpack.c.bf16 %v1000, %v992
    %v1009 = vpack.c.bf16 %v1001, %v993
    %v1010 = vpack.c.bf16 %v1002, %v994
    %v1011 = vpack.c.bf16 %v1003, %v995
    %v1012 = vld [vmem:[#allocation11] sm:$0xff]
    %v1013 = vld [vmem:[#allocation11 + $0x8] sm:$0xf]
    %v1014 = vld [vmem:[#allocation11 + $0xc] sm:$0xff]
    %v1015 = vld [vmem:[#allocation11 + $0x14] sm:$0xf]
    %v1016 = vld [vmem:[#allocation11 + $0x18] sm:$0xff]
    %v1017 = vld [vmem:[#allocation11 + $0x20] sm:$0xf]
    %v1018 = vld [vmem:[#allocation11 + $0x24] sm:$0xff]
    %v1019 = vld [vmem:[#allocation11 + $0x2c] sm:$0xf]
    %v1020 = vld [vmem:[#allocation11 + $0x30] sm:$0xff]
    %v1021 = vld [vmem:[#allocation11 + $0x38] sm:$0xf]
    %v1022 = vld [vmem:[#allocation11 + $0x3c] sm:$0xff]
    %v1023 = vld [vmem:[#allocation11 + $0x44] sm:$0xf]
    %v1024 = vld [vmem:[#allocation11 + $0x48] sm:$0xff]
    %v1025 = vld [vmem:[#allocation11 + $0x50] sm:$0xf]
    %v1026 = vld [vmem:[#allocation11 + $0x54] sm:$0xff]
    %v1027 = vld [vmem:[#allocation11 + $0x5c] sm:$0xf]
    %v1028 = vld [vmem:[#allocation11 + $0x60] sm:$0xff]
    %v1029 = vld [vmem:[#allocation11 + $0x68] sm:$0xf]
    %v1030 = vld [vmem:[#allocation11 + $0x6c] sm:$0xff]
    %v1031 = vld [vmem:[#allocation11 + $0x74] sm:$0xf]
    %v1032 = vld [vmem:[#allocation11 + $0x78] sm:$0xff]
    %v1033 = vld [vmem:[#allocation11 + $0x80] sm:$0xf]
    %v1034 = vld [vmem:[#allocation11 + $0x84] sm:$0xff]
    %v1035 = vld [vmem:[#allocation11 + $0x8c] sm:$0xf]
    %v1036 = vld [vmem:[#allocation11 + $0x90] sm:$0xff]
    %v1037 = vld [vmem:[#allocation11 + $0x98] sm:$0xf]
    %v1038 = vld [vmem:[#allocation11 + $0x9c] sm:$0xff]
    %v1039 = vld [vmem:[#allocation11 + $0xa4] sm:$0xf]
    %v1040 = vld [vmem:[#allocation11 + $0xa8] sm:$0xff]
    %v1041 = vld [vmem:[#allocation11 + $0xb0] sm:$0xf]
    %v1042 = vld [vmem:[#allocation11 + $0xb4] sm:$0xff]
    %v1043 = vld [vmem:[#allocation11 + $0xbc] sm:$0xf]
    %v1044 = vld [vmem:[#allocation11 + $0xc0] sm:$0xff]
    %v1045 = vld [vmem:[#allocation11 + $0xc8] sm:$0xf]
    %v1046 = vld [vmem:[#allocation11 + $0xcc] sm:$0xff]
    %v1047 = vld [vmem:[#allocation11 + $0xd4] sm:$0xf]
    %v1048 = vld [vmem:[#allocation11 + $0xd8] sm:$0xff]
    %v1049 = vld [vmem:[#allocation11 + $0xe0] sm:$0xf]
    %v1050 = vld [vmem:[#allocation11 + $0xe4] sm:$0xff]
    %v1051 = vld [vmem:[#allocation11 + $0xec] sm:$0xf]
    %v1052 = vld [vmem:[#allocation11 + $0xf0] sm:$0xff]
    %v1053 = vld [vmem:[#allocation11 + $0xf8] sm:$0xf]
    %v1054 = vld [vmem:[#allocation11 + $0xfc] sm:$0xff]
    %v1055 = vld [vmem:[#allocation11 + $0x104] sm:$0xf]
    %v1056 = vld [vmem:[#allocation11 + $0x108] sm:$0xff]
    %v1057 = vld [vmem:[#allocation11 + $0x110] sm:$0xf]
    %v1058 = vld [vmem:[#allocation11 + $0x114] sm:$0xff]
    %v1059 = vld [vmem:[#allocation11 + $0x11c] sm:$0xf]
    %v1060 = vld [vmem:[#allocation11 + $0x120] sm:$0xff]
    %v1061 = vld [vmem:[#allocation11 + $0x128] sm:$0xf]
    %v1062 = vld [vmem:[#allocation11 + $0x12c] sm:$0xff]
    %v1063 = vld [vmem:[#allocation11 + $0x134] sm:$0xf]
    %v1064 = vld [vmem:[#allocation11 + $0x138] sm:$0xff]
    %v1065 = vld [vmem:[#allocation11 + $0x140] sm:$0xf]
    %v1066 = vld [vmem:[#allocation11 + $0x144] sm:$0xff]
    %v1067 = vld [vmem:[#allocation11 + $0x14c] sm:$0xf]
    %v1068 = vld [vmem:[#allocation11 + $0x150] sm:$0xff]
    %v1069 = vld [vmem:[#allocation11 + $0x158] sm:$0xf]
    %v1070 = vld [vmem:[#allocation11 + $0x15c] sm:$0xff]
    %v1071 = vld [vmem:[#allocation11 + $0x164] sm:$0xf]
    %v1072 = vld [vmem:[#allocation11 + $0x168] sm:$0xff]
    %v1073 = vld [vmem:[#allocation11 + $0x170] sm:$0xf]
    %v1074 = vld [vmem:[#allocation11 + $0x174] sm:$0xff]
    %v1075 = vld [vmem:[#allocation11 + $0x17c] sm:$0xf]
    %v1076 = vld [vmem:[#allocation11 + $0x180] sm:$0xff]
    %v1077 = vld [vmem:[#allocation11 + $0x188] sm:$0xf]
    %v1078 = vld [vmem:[#allocation11 + $0x18c] sm:$0xff]
    %v1079 = vld [vmem:[#allocation11 + $0x194] sm:$0xf]
    %v1080 = vld [vmem:[#allocation11 + $0x198] sm:$0xff]
    %v1081 = vld [vmem:[#allocation11 + $0x1a0] sm:$0xf]
    %v1082 = vld [vmem:[#allocation11 + $0x1a4] sm:$0xff]
    %v1083 = vld [vmem:[#allocation11 + $0x1ac] sm:$0xf]
    %v1084 = vld [vmem:[#allocation11 + $0x1b0] sm:$0xff]
    %v1085 = vld [vmem:[#allocation11 + $0x1b8] sm:$0xf]
    %v1086 = vld [vmem:[#allocation11 + $0x1bc] sm:$0xff]
    %v1087 = vld [vmem:[#allocation11 + $0x1c4] sm:$0xf]
    %v1088 = vld [vmem:[#allocation11 + $0x1c8] sm:$0xff]
    %v1089 = vld [vmem:[#allocation11 + $0x1d0] sm:$0xf]
    %v1090 = vld [vmem:[#allocation11 + $0x1d4] sm:$0xff]
    %v1091 = vld [vmem:[#allocation11 + $0x1dc] sm:$0xf]
    %v1092 = vld [vmem:[#allocation11 + $0x1e0] sm:$0xff]
    %v1093 = vld [vmem:[#allocation11 + $0x1e8] sm:$0xf]
    %v1094 = vld [vmem:[#allocation11 + $0x1ec] sm:$0xff]
    %v1095 = vld [vmem:[#allocation11 + $0x1f4] sm:$0xf]
    %v1096 = vld [vmem:[#allocation11 + $0x1f8] sm:$0xff]
    %v1097 = vld [vmem:[#allocation11 + $0x200] sm:$0xf]
    %v1098 = vld [vmem:[#allocation11 + $0x204] sm:$0xff]
    %v1099 = vld [vmem:[#allocation11 + $0x20c] sm:$0xf]
    %v1100 = vld [vmem:[#allocation11 + $0x210] sm:$0xff]
    %v1101 = vld [vmem:[#allocation11 + $0x218] sm:$0xf]
    %v1102 = vld [vmem:[#allocation11 + $0x21c] sm:$0xff]
    %v1103 = vld [vmem:[#allocation11 + $0x224] sm:$0xf]
    %v1104 = vld [vmem:[#allocation11 + $0x228] sm:$0xff]
    %v1105 = vld [vmem:[#allocation11 + $0x230] sm:$0xf]
    %v1106 = vld [vmem:[#allocation11 + $0x234] sm:$0xff]
    %v1107 = vld [vmem:[#allocation11 + $0x23c] sm:$0xf]
    %v1108 = vld [vmem:[#allocation11 + $0x240] sm:$0xff]
    %v1109 = vld [vmem:[#allocation11 + $0x248] sm:$0xf]
    %v1110 = vld [vmem:[#allocation11 + $0x24c] sm:$0xff]
    %v1111 = vld [vmem:[#allocation11 + $0x254] sm:$0xf]
    %v1112 = vld [vmem:[#allocation11 + $0x258] sm:$0xff]
    %v1113 = vld [vmem:[#allocation11 + $0x260] sm:$0xf]
    %v1114 = vld [vmem:[#allocation11 + $0x264] sm:$0xff]
    %v1115 = vld [vmem:[#allocation11 + $0x26c] sm:$0xf]
    %v1116 = vld [vmem:[#allocation11 + $0x270] sm:$0xff]
    %v1117 = vld [vmem:[#allocation11 + $0x278] sm:$0xf]
    %v1118 = vld [vmem:[#allocation11 + $0x27c] sm:$0xff]
    %v1119 = vld [vmem:[#allocation11 + $0x284] sm:$0xf]
    %v1120 = vld [vmem:[#allocation11 + $0x288] sm:$0xff]
    %v1121 = vld [vmem:[#allocation11 + $0x290] sm:$0xf]
    %v1122 = vld [vmem:[#allocation11 + $0x294] sm:$0xff]
    %v1123 = vld [vmem:[#allocation11 + $0x29c] sm:$0xf]
    %v1124 = vld [vmem:[#allocation11 + $0x2a0] sm:$0xff]
    %v1125 = vld [vmem:[#allocation11 + $0x2a8] sm:$0xf]
    %v1126 = vld [vmem:[#allocation11 + $0x2ac] sm:$0xff]
    %v1127 = vld [vmem:[#allocation11 + $0x2b4] sm:$0xf]
    %v1128 = vld [vmem:[#allocation11 + $0x2b8] sm:$0xff]
    %v1129 = vld [vmem:[#allocation11 + $0x2c0] sm:$0xf]
    %v1130 = vld [vmem:[#allocation11 + $0x2c4] sm:$0xff]
    %v1131 = vld [vmem:[#allocation11 + $0x2cc] sm:$0xf]
    %v1132 = vld [vmem:[#allocation11 + $0x2d0] sm:$0xff]
    %v1133 = vld [vmem:[#allocation11 + $0x2d8] sm:$0xf]
    %v1134 = vld [vmem:[#allocation11 + $0x2dc] sm:$0xff]
    %v1135 = vld [vmem:[#allocation11 + $0x2e4] sm:$0xf]
    %v1136 = vld [vmem:[#allocation11 + $0x2e8] sm:$0xff]
    %v1137 = vld [vmem:[#allocation11 + $0x2f0] sm:$0xf]
    %v1138 = vld [vmem:[#allocation11 + $0x2f4] sm:$0xff]
    %v1139 = vld [vmem:[#allocation11 + $0x2fc] sm:$0xf]
    %v1140 = vld [vmem:[#allocation11 + $0x300] sm:$0xff]
    %v1141 = vld [vmem:[#allocation11 + $0x308] sm:$0xf]
    %v1142 = vld [vmem:[#allocation11 + $0x30c] sm:$0xff]
    %v1143 = vld [vmem:[#allocation11 + $0x314] sm:$0xf]
    %v1144 = vld [vmem:[#allocation11 + $0x318] sm:$0xff]
    %v1145 = vld [vmem:[#allocation11 + $0x320] sm:$0xf]
    %v1146 = vld [vmem:[#allocation11 + $0x324] sm:$0xff]
    %v1147 = vld [vmem:[#allocation11 + $0x32c] sm:$0xf]
    %v1148 = vld [vmem:[#allocation11 + $0x330] sm:$0xff]
    %v1149 = vld [vmem:[#allocation11 + $0x338] sm:$0xf]
    %v1150 = vld [vmem:[#allocation11 + $0x33c] sm:$0xff]
    %v1151 = vld [vmem:[#allocation11 + $0x344] sm:$0xf]
    %v1152 = vld [vmem:[#allocation11 + $0x348] sm:$0xff]
    %v1153 = vld [vmem:[#allocation11 + $0x350] sm:$0xf]
    %v1154 = vld [vmem:[#allocation11 + $0x354] sm:$0xff]
    %v1155 = vld [vmem:[#allocation11 + $0x35c] sm:$0xf]
    %v1156 = vld [vmem:[#allocation11 + $0x360] sm:$0xff]
    %v1157 = vld [vmem:[#allocation11 + $0x368] sm:$0xf]
    %v1158 = vld [vmem:[#allocation11 + $0x36c] sm:$0xff]
    %v1159 = vld [vmem:[#allocation11 + $0x374] sm:$0xf]
    %v1160 = vld [vmem:[#allocation11 + $0x378] sm:$0xff]
    %v1161 = vld [vmem:[#allocation11 + $0x380] sm:$0xf]
    %v1162 = vld [vmem:[#allocation11 + $0x384] sm:$0xff]
    %v1163 = vld [vmem:[#allocation11 + $0x38c] sm:$0xf]
    %v1164 = vld [vmem:[#allocation11 + $0x390] sm:$0xff]
    %v1165 = vld [vmem:[#allocation11 + $0x398] sm:$0xf]
    %v1166 = vld [vmem:[#allocation11 + $0x39c] sm:$0xff]
    %v1167 = vld [vmem:[#allocation11 + $0x3a4] sm:$0xf]
    %v1168 = vld [vmem:[#allocation11 + $0x3a8] sm:$0xff]
    %v1169 = vld [vmem:[#allocation11 + $0x3b0] sm:$0xf]
    %v1170 = vld [vmem:[#allocation11 + $0x3b4] sm:$0xff]
    %v1171 = vld [vmem:[#allocation11 + $0x3bc] sm:$0xf]
    %v1172 = vld [vmem:[#allocation11 + $0x3c0] sm:$0xff]
    %v1173 = vld [vmem:[#allocation11 + $0x3c8] sm:$0xf]
    %v1174 = vld [vmem:[#allocation11 + $0x3cc] sm:$0xff]
    %v1175 = vld [vmem:[#allocation11 + $0x3d4] sm:$0xf]
    %v1176 = vld [vmem:[#allocation11 + $0x3d8] sm:$0xff]
    %v1177 = vld [vmem:[#allocation11 + $0x3e0] sm:$0xf]
    %v1178 = vld [vmem:[#allocation11 + $0x3e4] sm:$0xff]
    %v1179 = vld [vmem:[#allocation11 + $0x3ec] sm:$0xf]
    %v1180 = vld [vmem:[#allocation11 + $0x3f0] sm:$0xff]
    %v1181 = vld [vmem:[#allocation11 + $0x3f8] sm:$0xf]
    %v1182 = vld [vmem:[#allocation11 + $0x3fc] sm:$0xff]
    %v1183 = vld [vmem:[#allocation11 + $0x404] sm:$0xf]
    %v1184 = vld [vmem:[#allocation11 + $0x408] sm:$0xff]
    %v1185 = vld [vmem:[#allocation11 + $0x410] sm:$0xf]
    %v1186 = vld [vmem:[#allocation11 + $0x414] sm:$0xff]
    %v1187 = vld [vmem:[#allocation11 + $0x41c] sm:$0xf]
    %v1188 = vld [vmem:[#allocation11 + $0x420] sm:$0xff]
    %v1189 = vld [vmem:[#allocation11 + $0x428] sm:$0xf]
    %v1190 = vld [vmem:[#allocation11 + $0x42c] sm:$0xff]
    %v1191 = vld [vmem:[#allocation11 + $0x434] sm:$0xf]
    %v1192 = vld [vmem:[#allocation11 + $0x438] sm:$0xff]
    %v1193 = vld [vmem:[#allocation11 + $0x440] sm:$0xf]
    %v1194 = vld [vmem:[#allocation11 + $0x444] sm:$0xff]
    %v1195 = vld [vmem:[#allocation11 + $0x44c] sm:$0xf]
    %v1196 = vld [vmem:[#allocation11 + $0x450] sm:$0xff]
    %v1197 = vld [vmem:[#allocation11 + $0x458] sm:$0xf]
    %v1198 = vld [vmem:[#allocation11 + $0x45c] sm:$0xff]
    %v1199 = vld [vmem:[#allocation11 + $0x464] sm:$0xf]
    %v1200 = vld [vmem:[#allocation11 + $0x468] sm:$0xff]
    %v1201 = vld [vmem:[#allocation11 + $0x470] sm:$0xf]
    %v1202 = vld [vmem:[#allocation11 + $0x474] sm:$0xff]
    %v1203 = vld [vmem:[#allocation11 + $0x47c] sm:$0xf]
    %v1204 = vld [vmem:[#allocation11 + $0x480] sm:$0xff]
    %v1205 = vld [vmem:[#allocation11 + $0x488] sm:$0xf]
    %v1206 = vld [vmem:[#allocation11 + $0x48c] sm:$0xff]
    %v1207 = vld [vmem:[#allocation11 + $0x494] sm:$0xf]
    %v1208 = vld [vmem:[#allocation11 + $0x498] sm:$0xff]
    %v1209 = vld [vmem:[#allocation11 + $0x4a0] sm:$0xf]
    %v1210 = vld [vmem:[#allocation11 + $0x4a4] sm:$0xff]
    %v1211 = vld [vmem:[#allocation11 + $0x4ac] sm:$0xf]
    %v1212 = vld [vmem:[#allocation11 + $0x4b0] sm:$0xff]
    %v1213 = vld [vmem:[#allocation11 + $0x4b8] sm:$0xf]
    %v1214 = vld [vmem:[#allocation11 + $0x4bc] sm:$0xff]
    %v1215 = vld [vmem:[#allocation11 + $0x4c4] sm:$0xf]
    %v1216 = vld [vmem:[#allocation11 + $0x4c8] sm:$0xff]
    %v1217 = vld [vmem:[#allocation11 + $0x4d0] sm:$0xf]
    %v1218 = vld [vmem:[#allocation11 + $0x4d4] sm:$0xff]
    %v1219 = vld [vmem:[#allocation11 + $0x4dc] sm:$0xf]
    %v1220 = vld [vmem:[#allocation11 + $0x4e0] sm:$0xff]
    %v1221 = vld [vmem:[#allocation11 + $0x4e8] sm:$0xf]
    %v1222 = vld [vmem:[#allocation11 + $0x4ec] sm:$0xff]
    %v1223 = vld [vmem:[#allocation11 + $0x4f4] sm:$0xf]
    %v1224 = vld [vmem:[#allocation11 + $0x4f8] sm:$0xff]
    %v1225 = vld [vmem:[#allocation11 + $0x500] sm:$0xf]
    %v1226 = vld [vmem:[#allocation11 + $0x504] sm:$0xff]
    %v1227 = vld [vmem:[#allocation11 + $0x50c] sm:$0xf]
    %v1228 = vld [vmem:[#allocation11 + $0x510] sm:$0xff]
    %v1229 = vld [vmem:[#allocation11 + $0x518] sm:$0xf]
    %v1230 = vld [vmem:[#allocation11 + $0x51c] sm:$0xff]
    %v1231 = vld [vmem:[#allocation11 + $0x524] sm:$0xf]
    %v1232 = vld [vmem:[#allocation11 + $0x528] sm:$0xff]
    %v1233 = vld [vmem:[#allocation11 + $0x530] sm:$0xf]
    %v1234 = vld [vmem:[#allocation11 + $0x534] sm:$0xff]
    %v1235 = vld [vmem:[#allocation11 + $0x53c] sm:$0xf]
    %v1236 = vld [vmem:[#allocation11 + $0x540] sm:$0xff]
    %v1237 = vld [vmem:[#allocation11 + $0x548] sm:$0xf]
    %v1238 = vld [vmem:[#allocation11 + $0x54c] sm:$0xff]
    %v1239 = vld [vmem:[#allocation11 + $0x554] sm:$0xf]
    %v1240 = vld [vmem:[#allocation11 + $0x558] sm:$0xff]
    %v1241 = vld [vmem:[#allocation11 + $0x560] sm:$0xf]
    %v1242 = vld [vmem:[#allocation11 + $0x564] sm:$0xff]
    %v1243 = vld [vmem:[#allocation11 + $0x56c] sm:$0xf]
    %v1244 = vld [vmem:[#allocation11 + $0x570] sm:$0xff]
    %v1245 = vld [vmem:[#allocation11 + $0x578] sm:$0xf]
    %v1246 = vld [vmem:[#allocation11 + $0x57c] sm:$0xff]
    %v1247 = vld [vmem:[#allocation11 + $0x584] sm:$0xf]
    %v1248 = vld [vmem:[#allocation11 + $0x588] sm:$0xff]
    %v1249 = vld [vmem:[#allocation11 + $0x590] sm:$0xf]
    %v1250 = vld [vmem:[#allocation11 + $0x594] sm:$0xff]
    %v1251 = vld [vmem:[#allocation11 + $0x59c] sm:$0xf]
    %v1252 = vld [vmem:[#allocation11 + $0x5a0] sm:$0xff]
    %v1253 = vld [vmem:[#allocation11 + $0x5a8] sm:$0xf]
    %v1254 = vld [vmem:[#allocation11 + $0x5ac] sm:$0xff]
    %v1255 = vld [vmem:[#allocation11 + $0x5b4] sm:$0xf]
    %v1256 = vld [vmem:[#allocation11 + $0x5b8] sm:$0xff]
    %v1257 = vld [vmem:[#allocation11 + $0x5c0] sm:$0xf]
    %v1258 = vld [vmem:[#allocation11 + $0x5c4] sm:$0xff]
    %v1259 = vld [vmem:[#allocation11 + $0x5cc] sm:$0xf]
    %v1260 = vld [vmem:[#allocation11 + $0x5d0] sm:$0xff]
    %v1261 = vld [vmem:[#allocation11 + $0x5d8] sm:$0xf]
    %v1262 = vld [vmem:[#allocation11 + $0x5dc] sm:$0xff]
    %v1263 = vld [vmem:[#allocation11 + $0x5e4] sm:$0xf]
    %v1264 = vld [vmem:[#allocation11 + $0x5e8] sm:$0xff]
    %v1265 = vld [vmem:[#allocation11 + $0x5f0] sm:$0xf]
    %v1266 = vld [vmem:[#allocation11 + $0x5f4] sm:$0xff]
    %v1267 = vld [vmem:[#allocation11 + $0x5fc] sm:$0xf]
    %v1268 = vld [vmem:[%s8] sm:$0x7]
    %v1270 = vlaneseq
    %v1271 = vshrl.u32 %v1270, 7
    %v1272 = vsub.s32 0, %v1271
    %v1273 = vrot.slane %v1268, %v1272
    %v1274 = vlaneseq
    %v1275 = vshrl.u32 %v1274, 7
    %v1276 = vsub.s32 1, %v1275
    %v1277 = vrot.slane %v1268, %v1276
    %v1278 = vlaneseq
    %v1279 = vshrl.u32 %v1278, 7
    %v1280 = vsub.s32 2, %v1279
    %v1281 = vrot.slane %v1268, %v1280
    %v1541 = vunpack.c.l.b16 %v1012
    %v1542 = vunpack.c.h.b16 %v1012
    %v1543 = vunpack.c.l.b16 %v1013
    %v1544 = vunpack.c.l.b16 %v1014
    %v1545 = vunpack.c.h.b16 %v1014
    %v1546 = vunpack.c.l.b16 %v1015
    %v1547 = vunpack.c.l.b16 %v1016
    %v1548 = vunpack.c.h.b16 %v1016
    %v1549 = vunpack.c.l.b16 %v1017
    %v1550 = vunpack.c.l.b16 %v1018
    %v1551 = vunpack.c.h.b16 %v1018
    %v1552 = vunpack.c.l.b16 %v1019
    %v1553 = vunpack.c.l.b16 %v1020
    %v1554 = vunpack.c.h.b16 %v1020
    %v1555 = vunpack.c.l.b16 %v1021
    %v1556 = vunpack.c.l.b16 %v1022
    %v1557 = vunpack.c.h.b16 %v1022
    %v1558 = vunpack.c.l.b16 %v1023
    %v1559 = vunpack.c.l.b16 %v1024
    %v1560 = vunpack.c.h.b16 %v1024
    %v1561 = vunpack.c.l.b16 %v1025
    %v1562 = vunpack.c.l.b16 %v1026
    %v1563 = vunpack.c.h.b16 %v1026
    %v1564 = vunpack.c.l.b16 %v1027
    %v1565 = vunpack.c.l.b16 %v1028
    %v1566 = vunpack.c.h.b16 %v1028
    %v1567 = vunpack.c.l.b16 %v1029
    %v1568 = vunpack.c.l.b16 %v1030
    %v1569 = vunpack.c.h.b16 %v1030
    %v1570 = vunpack.c.l.b16 %v1031
    %v1571 = vunpack.c.l.b16 %v1032
    %v1572 = vunpack.c.h.b16 %v1032
    %v1573 = vunpack.c.l.b16 %v1033
    %v1574 = vunpack.c.l.b16 %v1034
    %v1575 = vunpack.c.h.b16 %v1034
    %v1576 = vunpack.c.l.b16 %v1035
    %v1577 = vunpack.c.l.b16 %v1036
    %v1578 = vunpack.c.h.b16 %v1036
    %v1579 = vunpack.c.l.b16 %v1037
    %v1580 = vunpack.c.l.b16 %v1038
    %v1581 = vunpack.c.h.b16 %v1038
    %v1582 = vunpack.c.l.b16 %v1039
    %v1583 = vunpack.c.l.b16 %v1040
    %v1584 = vunpack.c.h.b16 %v1040
    %v1585 = vunpack.c.l.b16 %v1041
    %v1586 = vunpack.c.l.b16 %v1042
    %v1587 = vunpack.c.h.b16 %v1042
    %v1588 = vunpack.c.l.b16 %v1043
    %v1589 = vunpack.c.l.b16 %v1044
    %v1590 = vunpack.c.h.b16 %v1044
    %v1591 = vunpack.c.l.b16 %v1045
    %v1592 = vunpack.c.l.b16 %v1046
    %v1593 = vunpack.c.h.b16 %v1046
    %v1594 = vunpack.c.l.b16 %v1047
    %v1595 = vunpack.c.l.b16 %v1048
    %v1596 = vunpack.c.h.b16 %v1048
    %v1597 = vunpack.c.l.b16 %v1049
    %v1598 = vunpack.c.l.b16 %v1050
    %v1599 = vunpack.c.h.b16 %v1050
    %v1600 = vunpack.c.l.b16 %v1051
    %v1601 = vunpack.c.l.b16 %v1052
    %v1602 = vunpack.c.h.b16 %v1052
    %v1603 = vunpack.c.l.b16 %v1053
    %v1604 = vunpack.c.l.b16 %v1054
    %v1605 = vunpack.c.h.b16 %v1054
    %v1606 = vunpack.c.l.b16 %v1055
    %v1607 = vunpack.c.l.b16 %v1056
    %v1608 = vunpack.c.h.b16 %v1056
    %v1609 = vunpack.c.l.b16 %v1057
    %v1610 = vunpack.c.l.b16 %v1058
    %v1611 = vunpack.c.h.b16 %v1058
    %v1612 = vunpack.c.l.b16 %v1059
    %v1613 = vunpack.c.l.b16 %v1060
    %v1614 = vunpack.c.h.b16 %v1060
    %v1615 = vunpack.c.l.b16 %v1061
    %v1616 = vunpack.c.l.b16 %v1062
    %v1617 = vunpack.c.h.b16 %v1062
    %v1618 = vunpack.c.l.b16 %v1063
    %v1619 = vunpack.c.l.b16 %v1064
    %v1620 = vunpack.c.h.b16 %v1064
    %v1621 = vunpack.c.l.b16 %v1065
    %v1622 = vunpack.c.l.b16 %v1066
    %v1623 = vunpack.c.h.b16 %v1066
    %v1624 = vunpack.c.l.b16 %v1067
    %v1625 = vunpack.c.l.b16 %v1068
    %v1626 = vunpack.c.h.b16 %v1068
    %v1627 = vunpack.c.l.b16 %v1069
    %v1628 = vunpack.c.l.b16 %v1070
    %v1629 = vunpack.c.h.b16 %v1070
    %v1630 = vunpack.c.l.b16 %v1071
    %v1631 = vunpack.c.l.b16 %v1072
    %v1632 = vunpack.c.h.b16 %v1072
    %v1633 = vunpack.c.l.b16 %v1073
    %v1634 = vunpack.c.l.b16 %v1074
    %v1635 = vunpack.c.h.b16 %v1074
    %v1636 = vunpack.c.l.b16 %v1075
    %v1637 = vunpack.c.l.b16 %v1076
    %v1638 = vunpack.c.h.b16 %v1076
    %v1639 = vunpack.c.l.b16 %v1077
    %v1640 = vunpack.c.l.b16 %v1078
    %v1641 = vunpack.c.h.b16 %v1078
    %v1642 = vunpack.c.l.b16 %v1079
    %v1643 = vunpack.c.l.b16 %v1080
    %v1644 = vunpack.c.h.b16 %v1080
    %v1645 = vunpack.c.l.b16 %v1081
    %v1646 = vunpack.c.l.b16 %v1082
    %v1647 = vunpack.c.h.b16 %v1082
    %v1648 = vunpack.c.l.b16 %v1083
    %v1649 = vunpack.c.l.b16 %v1084
    %v1650 = vunpack.c.h.b16 %v1084
    %v1651 = vunpack.c.l.b16 %v1085
    %v1652 = vunpack.c.l.b16 %v1086
    %v1653 = vunpack.c.h.b16 %v1086
    %v1654 = vunpack.c.l.b16 %v1087
    %v1655 = vunpack.c.l.b16 %v1088
    %v1656 = vunpack.c.h.b16 %v1088
    %v1657 = vunpack.c.l.b16 %v1089
    %v1658 = vunpack.c.l.b16 %v1090
    %v1659 = vunpack.c.h.b16 %v1090
    %v1660 = vunpack.c.l.b16 %v1091
    %v1661 = vunpack.c.l.b16 %v1092
    %v1662 = vunpack.c.h.b16 %v1092
    %v1663 = vunpack.c.l.b16 %v1093
    %v1664 = vunpack.c.l.b16 %v1094
    %v1665 = vunpack.c.h.b16 %v1094
    %v1666 = vunpack.c.l.b16 %v1095
    %v1667 = vunpack.c.l.b16 %v1096
    %v1668 = vunpack.c.h.b16 %v1096
    %v1669 = vunpack.c.l.b16 %v1097
    %v1670 = vunpack.c.l.b16 %v1098
    %v1671 = vunpack.c.h.b16 %v1098
    %v1672 = vunpack.c.l.b16 %v1099
    %v1673 = vunpack.c.l.b16 %v1100
    %v1674 = vunpack.c.h.b16 %v1100
    %v1675 = vunpack.c.l.b16 %v1101
    %v1676 = vunpack.c.l.b16 %v1102
    %v1677 = vunpack.c.h.b16 %v1102
    %v1678 = vunpack.c.l.b16 %v1103
    %v1679 = vunpack.c.l.b16 %v1104
    %v1680 = vunpack.c.h.b16 %v1104
    %v1681 = vunpack.c.l.b16 %v1105
    %v1682 = vunpack.c.l.b16 %v1106
    %v1683 = vunpack.c.h.b16 %v1106
    %v1684 = vunpack.c.l.b16 %v1107
    %v1685 = vunpack.c.l.b16 %v1108
    %v1686 = vunpack.c.h.b16 %v1108
    %v1687 = vunpack.c.l.b16 %v1109
    %v1688 = vunpack.c.l.b16 %v1110
    %v1689 = vunpack.c.h.b16 %v1110
    %v1690 = vunpack.c.l.b16 %v1111
    %v1691 = vunpack.c.l.b16 %v1112
    %v1692 = vunpack.c.h.b16 %v1112
    %v1693 = vunpack.c.l.b16 %v1113
    %v1694 = vunpack.c.l.b16 %v1114
    %v1695 = vunpack.c.h.b16 %v1114
    %v1696 = vunpack.c.l.b16 %v1115
    %v1697 = vunpack.c.l.b16 %v1116
    %v1698 = vunpack.c.h.b16 %v1116
    %v1699 = vunpack.c.l.b16 %v1117
    %v1700 = vunpack.c.l.b16 %v1118
    %v1701 = vunpack.c.h.b16 %v1118
    %v1702 = vunpack.c.l.b16 %v1119
    %v1703 = vunpack.c.l.b16 %v1120
    %v1704 = vunpack.c.h.b16 %v1120
    %v1705 = vunpack.c.l.b16 %v1121
    %v1706 = vunpack.c.l.b16 %v1122
    %v1707 = vunpack.c.h.b16 %v1122
    %v1708 = vunpack.c.l.b16 %v1123
    %v1709 = vunpack.c.l.b16 %v1124
    %v1710 = vunpack.c.h.b16 %v1124
    %v1711 = vunpack.c.l.b16 %v1125
    %v1712 = vunpack.c.l.b16 %v1126
    %v1713 = vunpack.c.h.b16 %v1126
    %v1714 = vunpack.c.l.b16 %v1127
    %v1715 = vunpack.c.l.b16 %v1128
    %v1716 = vunpack.c.h.b16 %v1128
    %v1717 = vunpack.c.l.b16 %v1129
    %v1718 = vunpack.c.l.b16 %v1130
    %v1719 = vunpack.c.h.b16 %v1130
    %v1720 = vunpack.c.l.b16 %v1131
    %v1721 = vunpack.c.l.b16 %v1132
    %v1722 = vunpack.c.h.b16 %v1132
    %v1723 = vunpack.c.l.b16 %v1133
    %v1724 = vunpack.c.l.b16 %v1134
    %v1725 = vunpack.c.h.b16 %v1134
    %v1726 = vunpack.c.l.b16 %v1135
    %v1727 = vunpack.c.l.b16 %v1136
    %v1728 = vunpack.c.h.b16 %v1136
    %v1729 = vunpack.c.l.b16 %v1137
    %v1730 = vunpack.c.l.b16 %v1138
    %v1731 = vunpack.c.h.b16 %v1138
    %v1732 = vunpack.c.l.b16 %v1139
    %v1733 = vunpack.c.l.b16 %v1140
    %v1734 = vunpack.c.h.b16 %v1140
    %v1735 = vunpack.c.l.b16 %v1141
    %v1736 = vunpack.c.l.b16 %v1142
    %v1737 = vunpack.c.h.b16 %v1142
    %v1738 = vunpack.c.l.b16 %v1143
    %v1739 = vunpack.c.l.b16 %v1144
    %v1740 = vunpack.c.h.b16 %v1144
    %v1741 = vunpack.c.l.b16 %v1145
    %v1742 = vunpack.c.l.b16 %v1146
    %v1743 = vunpack.c.h.b16 %v1146
    %v1744 = vunpack.c.l.b16 %v1147
    %v1745 = vunpack.c.l.b16 %v1148
    %v1746 = vunpack.c.h.b16 %v1148
    %v1747 = vunpack.c.l.b16 %v1149
    %v1748 = vunpack.c.l.b16 %v1150
    %v1749 = vunpack.c.h.b16 %v1150
    %v1750 = vunpack.c.l.b16 %v1151
    %v1751 = vunpack.c.l.b16 %v1152
    %v1752 = vunpack.c.h.b16 %v1152
    %v1753 = vunpack.c.l.b16 %v1153
    %v1754 = vunpack.c.l.b16 %v1154
    %v1755 = vunpack.c.h.b16 %v1154
    %v1756 = vunpack.c.l.b16 %v1155
    %v1757 = vunpack.c.l.b16 %v1156
    %v1758 = vunpack.c.h.b16 %v1156
    %v1759 = vunpack.c.l.b16 %v1157
    %v1760 = vunpack.c.l.b16 %v1158
    %v1761 = vunpack.c.h.b16 %v1158
    %v1762 = vunpack.c.l.b16 %v1159
    %v1763 = vunpack.c.l.b16 %v1160
    %v1764 = vunpack.c.h.b16 %v1160
    %v1765 = vunpack.c.l.b16 %v1161
    %v1766 = vunpack.c.l.b16 %v1162
    %v1767 = vunpack.c.h.b16 %v1162
    %v1768 = vunpack.c.l.b16 %v1163
    %v1769 = vunpack.c.l.b16 %v1164
    %v1770 = vunpack.c.h.b16 %v1164
    %v1771 = vunpack.c.l.b16 %v1165
    %v1772 = vunpack.c.l.b16 %v1166
    %v1773 = vunpack.c.h.b16 %v1166
    %v1774 = vunpack.c.l.b16 %v1167
    %v1775 = vunpack.c.l.b16 %v1168
    %v1776 = vunpack.c.h.b16 %v1168
    %v1777 = vunpack.c.l.b16 %v1169
    %v1778 = vunpack.c.l.b16 %v1170
    %v1779 = vunpack.c.h.b16 %v1170
    %v1780 = vunpack.c.l.b16 %v1171
    %v1781 = vunpack.c.l.b16 %v1172
    %v1782 = vunpack.c.h.b16 %v1172
    %v1783 = vunpack.c.l.b16 %v1173
    %v1784 = vunpack.c.l.b16 %v1174
    %v1785 = vunpack.c.h.b16 %v1174
    %v1786 = vunpack.c.l.b16 %v1175
    %v1787 = vunpack.c.l.b16 %v1176
    %v1788 = vunpack.c.h.b16 %v1176
    %v1789 = vunpack.c.l.b16 %v1177
    %v1790 = vunpack.c.l.b16 %v1178
    %v1791 = vunpack.c.h.b16 %v1178
    %v1792 = vunpack.c.l.b16 %v1179
    %v1793 = vunpack.c.l.b16 %v1180
    %v1794 = vunpack.c.h.b16 %v1180
    %v1795 = vunpack.c.l.b16 %v1181
    %v1796 = vunpack.c.l.b16 %v1182
    %v1797 = vunpack.c.h.b16 %v1182
    %v1798 = vunpack.c.l.b16 %v1183
    %v1799 = vunpack.c.l.b16 %v1184
    %v1800 = vunpack.c.h.b16 %v1184
    %v1801 = vunpack.c.l.b16 %v1185
    %v1802 = vunpack.c.l.b16 %v1186
    %v1803 = vunpack.c.h.b16 %v1186
    %v1804 = vunpack.c.l.b16 %v1187
    %v1805 = vunpack.c.l.b16 %v1188
    %v1806 = vunpack.c.h.b16 %v1188
    %v1807 = vunpack.c.l.b16 %v1189
    %v1808 = vunpack.c.l.b16 %v1190
    %v1809 = vunpack.c.h.b16 %v1190
    %v1810 = vunpack.c.l.b16 %v1191
    %v1811 = vunpack.c.l.b16 %v1192
    %v1812 = vunpack.c.h.b16 %v1192
    %v1813 = vunpack.c.l.b16 %v1193
    %v1814 = vunpack.c.l.b16 %v1194
    %v1815 = vunpack.c.h.b16 %v1194
    %v1816 = vunpack.c.l.b16 %v1195
    %v1817 = vunpack.c.l.b16 %v1196
    %v1818 = vunpack.c.h.b16 %v1196
    %v1819 = vunpack.c.l.b16 %v1197
    %v1820 = vunpack.c.l.b16 %v1198
    %v1821 = vunpack.c.h.b16 %v1198
    %v1822 = vunpack.c.l.b16 %v1199
    %v1823 = vunpack.c.l.b16 %v1200
    %v1824 = vunpack.c.h.b16 %v1200
    %v1825 = vunpack.c.l.b16 %v1201
    %v1826 = vunpack.c.l.b16 %v1202
    %v1827 = vunpack.c.h.b16 %v1202
    %v1828 = vunpack.c.l.b16 %v1203
    %v1829 = vunpack.c.l.b16 %v1204
    %v1830 = vunpack.c.h.b16 %v1204
    %v1831 = vunpack.c.l.b16 %v1205
    %v1832 = vunpack.c.l.b16 %v1206
    %v1833 = vunpack.c.h.b16 %v1206
    %v1834 = vunpack.c.l.b16 %v1207
    %v1835 = vunpack.c.l.b16 %v1208
    %v1836 = vunpack.c.h.b16 %v1208
    %v1837 = vunpack.c.l.b16 %v1209
    %v1838 = vunpack.c.l.b16 %v1210
    %v1839 = vunpack.c.h.b16 %v1210
    %v1840 = vunpack.c.l.b16 %v1211
    %v1841 = vunpack.c.l.b16 %v1212
    %v1842 = vunpack.c.h.b16 %v1212
    %v1843 = vunpack.c.l.b16 %v1213
    %v1844 = vunpack.c.l.b16 %v1214
    %v1845 = vunpack.c.h.b16 %v1214
    %v1846 = vunpack.c.l.b16 %v1215
    %v1847 = vunpack.c.l.b16 %v1216
    %v1848 = vunpack.c.h.b16 %v1216
    %v1849 = vunpack.c.l.b16 %v1217
    %v1850 = vunpack.c.l.b16 %v1218
    %v1851 = vunpack.c.h.b16 %v1218
    %v1852 = vunpack.c.l.b16 %v1219
    %v1853 = vunpack.c.l.b16 %v1220
    %v1854 = vunpack.c.h.b16 %v1220
    %v1855 = vunpack.c.l.b16 %v1221
    %v1856 = vunpack.c.l.b16 %v1222
    %v1857 = vunpack.c.h.b16 %v1222
    %v1858 = vunpack.c.l.b16 %v1223
    %v1859 = vunpack.c.l.b16 %v1224
    %v1860 = vunpack.c.h.b16 %v1224
    %v1861 = vunpack.c.l.b16 %v1225
    %v1862 = vunpack.c.l.b16 %v1226
    %v1863 = vunpack.c.h.b16 %v1226
    %v1864 = vunpack.c.l.b16 %v1227
    %v1865 = vunpack.c.l.b16 %v1228
    %v1866 = vunpack.c.h.b16 %v1228
    %v1867 = vunpack.c.l.b16 %v1229
    %v1868 = vunpack.c.l.b16 %v1230
    %v1869 = vunpack.c.h.b16 %v1230
    %v1870 = vunpack.c.l.b16 %v1231
    %v1871 = vunpack.c.l.b16 %v1232
    %v1872 = vunpack.c.h.b16 %v1232
    %v1873 = vunpack.c.l.b16 %v1233
    %v1874 = vunpack.c.l.b16 %v1234
    %v1875 = vunpack.c.h.b16 %v1234
    %v1876 = vunpack.c.l.b16 %v1235
    %v1877 = vunpack.c.l.b16 %v1236
    %v1878 = vunpack.c.h.b16 %v1236
    %v1879 = vunpack.c.l.b16 %v1237
    %v1880 = vunpack.c.l.b16 %v1238
    %v1881 = vunpack.c.h.b16 %v1238
    %v1882 = vunpack.c.l.b16 %v1239
    %v1883 = vunpack.c.l.b16 %v1240
    %v1884 = vunpack.c.h.b16 %v1240
    %v1885 = vunpack.c.l.b16 %v1241
    %v1886 = vunpack.c.l.b16 %v1242
    %v1887 = vunpack.c.h.b16 %v1242
    %v1888 = vunpack.c.l.b16 %v1243
    %v1889 = vunpack.c.l.b16 %v1244
    %v1890 = vunpack.c.h.b16 %v1244
    %v1891 = vunpack.c.l.b16 %v1245
    %v1892 = vunpack.c.l.b16 %v1246
    %v1893 = vunpack.c.h.b16 %v1246
    %v1894 = vunpack.c.l.b16 %v1247
    %v1895 = vunpack.c.l.b16 %v1248
    %v1896 = vunpack.c.h.b16 %v1248
    %v1897 = vunpack.c.l.b16 %v1249
    %v1898 = vunpack.c.l.b16 %v1250
    %v1899 = vunpack.c.h.b16 %v1250
    %v1900 = vunpack.c.l.b16 %v1251
    %v1901 = vunpack.c.l.b16 %v1252
    %v1902 = vunpack.c.h.b16 %v1252
    %v1903 = vunpack.c.l.b16 %v1253
    %v1904 = vunpack.c.l.b16 %v1254
    %v1905 = vunpack.c.h.b16 %v1254
    %v1906 = vunpack.c.l.b16 %v1255
    %v1907 = vunpack.c.l.b16 %v1256
    %v1908 = vunpack.c.h.b16 %v1256
    %v1909 = vunpack.c.l.b16 %v1257
    %v1910 = vunpack.c.l.b16 %v1258
    %v1911 = vunpack.c.h.b16 %v1258
    %v1912 = vunpack.c.l.b16 %v1259
    %v1913 = vunpack.c.l.b16 %v1260
    %v1914 = vunpack.c.h.b16 %v1260
    %v1915 = vunpack.c.l.b16 %v1261
    %v1916 = vunpack.c.l.b16 %v1262
    %v1917 = vunpack.c.h.b16 %v1262
    %v1918 = vunpack.c.l.b16 %v1263
    %v1919 = vunpack.c.l.b16 %v1264
    %v1920 = vunpack.c.h.b16 %v1264
    %v1921 = vunpack.c.l.b16 %v1265
    %v1922 = vunpack.c.l.b16 %v1266
    %v1923 = vunpack.c.h.b16 %v1266
    %v1924 = vunpack.c.l.b16 %v1267
    %v1925 = vpack.c.b16 %v1544, %v1541
    %v1926 = vpack.c.b16 %v1545, %v1542
    %v1927 = vpack.c.b16 %v1546, %v1543
    %v1928 = vpack.c.b16 %v1550, %v1547
    %v1929 = vpack.c.b16 %v1551, %v1548
    %v1930 = vpack.c.b16 %v1552, %v1549
    %v1931 = vpack.c.b16 %v1556, %v1553
    %v1932 = vpack.c.b16 %v1557, %v1554
    %v1933 = vpack.c.b16 %v1558, %v1555
    %v1934 = vpack.c.b16 %v1562, %v1559
    %v1935 = vpack.c.b16 %v1563, %v1560
    %v1936 = vpack.c.b16 %v1564, %v1561
    %v1937 = vpack.c.b16 %v1568, %v1565
    %v1938 = vpack.c.b16 %v1569, %v1566
    %v1939 = vpack.c.b16 %v1570, %v1567
    %v1940 = vpack.c.b16 %v1574, %v1571
    %v1941 = vpack.c.b16 %v1575, %v1572
    %v1942 = vpack.c.b16 %v1576, %v1573
    %v1943 = vpack.c.b16 %v1580, %v1577
    %v1944 = vpack.c.b16 %v1581, %v1578
    %v1945 = vpack.c.b16 %v1582, %v1579
    %v1946 = vpack.c.b16 %v1586, %v1583
    %v1947 = vpack.c.b16 %v1587, %v1584
    %v1948 = vpack.c.b16 %v1588, %v1585
    %v1949 = vpack.c.b16 %v1592, %v1589
    %v1950 = vpack.c.b16 %v1593, %v1590
    %v1951 = vpack.c.b16 %v1594, %v1591
    %v1952 = vpack.c.b16 %v1598, %v1595
    %v1953 = vpack.c.b16 %v1599, %v1596
    %v1954 = vpack.c.b16 %v1600, %v1597
    %v1955 = vpack.c.b16 %v1604, %v1601
    %v1956 = vpack.c.b16 %v1605, %v1602
    %v1957 = vpack.c.b16 %v1606, %v1603
    %v1958 = vpack.c.b16 %v1610, %v1607
    %v1959 = vpack.c.b16 %v1611, %v1608
    %v1960 = vpack.c.b16 %v1612, %v1609
    %v1961 = vpack.c.b16 %v1616, %v1613
    %v1962 = vpack.c.b16 %v1617, %v1614
    %v1963 = vpack.c.b16 %v1618, %v1615
    %v1964 = vpack.c.b16 %v1622, %v1619
    %v1965 = vpack.c.b16 %v1623, %v1620
    %v1966 = vpack.c.b16 %v1624, %v1621
    %v1967 = vpack.c.b16 %v1628, %v1625
    %v1968 = vpack.c.b16 %v1629, %v1626
    %v1969 = vpack.c.b16 %v1630, %v1627
    %v1970 = vpack.c.b16 %v1634, %v1631
    %v1971 = vpack.c.b16 %v1635, %v1632
    %v1972 = vpack.c.b16 %v1636, %v1633
    %v1973 = vpack.c.b16 %v1640, %v1637
    %v1974 = vpack.c.b16 %v1641, %v1638
    %v1975 = vpack.c.b16 %v1642, %v1639
    %v1976 = vpack.c.b16 %v1646, %v1643
    %v1977 = vpack.c.b16 %v1647, %v1644
    %v1978 = vpack.c.b16 %v1648, %v1645
    %v1979 = vpack.c.b16 %v1652, %v1649
    %v1980 = vpack.c.b16 %v1653, %v1650
    %v1981 = vpack.c.b16 %v1654, %v1651
    %v1982 = vpack.c.b16 %v1658, %v1655
    %v1983 = vpack.c.b16 %v1659, %v1656
    %v1984 = vpack.c.b16 %v1660, %v1657
    %v1985 = vpack.c.b16 %v1664, %v1661
    %v1986 = vpack.c.b16 %v1665, %v1662
    %v1987 = vpack.c.b16 %v1666, %v1663
    %v1988 = vpack.c.b16 %v1670, %v1667
    %v1989 = vpack.c.b16 %v1671, %v1668
    %v1990 = vpack.c.b16 %v1672, %v1669
    %v1991 = vpack.c.b16 %v1676, %v1673
    %v1992 = vpack.c.b16 %v1677, %v1674
    %v1993 = vpack.c.b16 %v1678, %v1675
    %v1994 = vpack.c.b16 %v1682, %v1679
    %v1995 = vpack.c.b16 %v1683, %v1680
    %v1996 = vpack.c.b16 %v1684, %v1681
    %v1997 = vpack.c.b16 %v1688, %v1685
    %v1998 = vpack.c.b16 %v1689, %v1686
    %v1999 = vpack.c.b16 %v1690, %v1687
    %v2000 = vpack.c.b16 %v1694, %v1691
    %v2001 = vpack.c.b16 %v1695, %v1692
    %v2002 = vpack.c.b16 %v1696, %v1693
    %v2003 = vpack.c.b16 %v1700, %v1697
    %v2004 = vpack.c.b16 %v1701, %v1698
    %v2005 = vpack.c.b16 %v1702, %v1699
    %v2006 = vpack.c.b16 %v1706, %v1703
    %v2007 = vpack.c.b16 %v1707, %v1704
    %v2008 = vpack.c.b16 %v1708, %v1705
    %v2009 = vpack.c.b16 %v1712, %v1709
    %v2010 = vpack.c.b16 %v1713, %v1710
    %v2011 = vpack.c.b16 %v1714, %v1711
    %v2012 = vpack.c.b16 %v1718, %v1715
    %v2013 = vpack.c.b16 %v1719, %v1716
    %v2014 = vpack.c.b16 %v1720, %v1717
    %v2015 = vpack.c.b16 %v1724, %v1721
    %v2016 = vpack.c.b16 %v1725, %v1722
    %v2017 = vpack.c.b16 %v1726, %v1723
    %v2018 = vpack.c.b16 %v1730, %v1727
    %v2019 = vpack.c.b16 %v1731, %v1728
    %v2020 = vpack.c.b16 %v1732, %v1729
    %v2021 = vpack.c.b16 %v1736, %v1733
    %v2022 = vpack.c.b16 %v1737, %v1734
    %v2023 = vpack.c.b16 %v1738, %v1735
    %v2024 = vpack.c.b16 %v1742, %v1739
    %v2025 = vpack.c.b16 %v1743, %v1740
    %v2026 = vpack.c.b16 %v1744, %v1741
    %v2027 = vpack.c.b16 %v1748, %v1745
    %v2028 = vpack.c.b16 %v1749, %v1746
    %v2029 = vpack.c.b16 %v1750, %v1747
    %v2030 = vpack.c.b16 %v1754, %v1751
    %v2031 = vpack.c.b16 %v1755, %v1752
    %v2032 = vpack.c.b16 %v1756, %v1753
    %v2033 = vpack.c.b16 %v1760, %v1757
    %v2034 = vpack.c.b16 %v1761, %v1758
    %v2035 = vpack.c.b16 %v1762, %v1759
    %v2036 = vpack.c.b16 %v1766, %v1763
    %v2037 = vpack.c.b16 %v1767, %v1764
    %v2038 = vpack.c.b16 %v1768, %v1765
    %v2039 = vpack.c.b16 %v1772, %v1769
    %v2040 = vpack.c.b16 %v1773, %v1770
    %v2041 = vpack.c.b16 %v1774, %v1771
    %v2042 = vpack.c.b16 %v1778, %v1775
    %v2043 = vpack.c.b16 %v1779, %v1776
    %v2044 = vpack.c.b16 %v1780, %v1777
    %v2045 = vpack.c.b16 %v1784, %v1781
    %v2046 = vpack.c.b16 %v1785, %v1782
    %v2047 = vpack.c.b16 %v1786, %v1783
    %v2048 = vpack.c.b16 %v1790, %v1787
    %v2049 = vpack.c.b16 %v1791, %v1788
    %v2050 = vpack.c.b16 %v1792, %v1789
    %v2051 = vpack.c.b16 %v1796, %v1793
    %v2052 = vpack.c.b16 %v1797, %v1794
    %v2053 = vpack.c.b16 %v1798, %v1795
    %v2054 = vpack.c.b16 %v1802, %v1799
    %v2055 = vpack.c.b16 %v1803, %v1800
    %v2056 = vpack.c.b16 %v1804, %v1801
    %v2057 = vpack.c.b16 %v1808, %v1805
    %v2058 = vpack.c.b16 %v1809, %v1806
    %v2059 = vpack.c.b16 %v1810, %v1807
    %v2060 = vpack.c.b16 %v1814, %v1811
    %v2061 = vpack.c.b16 %v1815, %v1812
    %v2062 = vpack.c.b16 %v1816, %v1813
    %v2063 = vpack.c.b16 %v1820, %v1817
    %v2064 = vpack.c.b16 %v1821, %v1818
    %v2065 = vpack.c.b16 %v1822, %v1819
    %v2066 = vpack.c.b16 %v1826, %v1823
    %v2067 = vpack.c.b16 %v1827, %v1824
    %v2068 = vpack.c.b16 %v1828, %v1825
    %v2069 = vpack.c.b16 %v1832, %v1829
    %v2070 = vpack.c.b16 %v1833, %v1830
    %v2071 = vpack.c.b16 %v1834, %v1831
    %v2072 = vpack.c.b16 %v1838, %v1835
    %v2073 = vpack.c.b16 %v1839, %v1836
    %v2074 = vpack.c.b16 %v1840, %v1837
    %v2075 = vpack.c.b16 %v1844, %v1841
    %v2076 = vpack.c.b16 %v1845, %v1842
    %v2077 = vpack.c.b16 %v1846, %v1843
    %v2078 = vpack.c.b16 %v1850, %v1847
    %v2079 = vpack.c.b16 %v1851, %v1848
    %v2080 = vpack.c.b16 %v1852, %v1849
    %v2081 = vpack.c.b16 %v1856, %v1853
    %v2082 = vpack.c.b16 %v1857, %v1854
    %v2083 = vpack.c.b16 %v1858, %v1855
    %v2084 = vpack.c.b16 %v1862, %v1859
    %v2085 = vpack.c.b16 %v1863, %v1860
    %v2086 = vpack.c.b16 %v1864, %v1861
    %v2087 = vpack.c.b16 %v1868, %v1865
    %v2088 = vpack.c.b16 %v1869, %v1866
    %v2089 = vpack.c.b16 %v1870, %v1867
    %v2090 = vpack.c.b16 %v1874, %v1871
    %v2091 = vpack.c.b16 %v1875, %v1872
    %v2092 = vpack.c.b16 %v1876, %v1873
    %v2093 = vpack.c.b16 %v1880, %v1877
    %v2094 = vpack.c.b16 %v1881, %v1878
    %v2095 = vpack.c.b16 %v1882, %v1879
    %v2096 = vpack.c.b16 %v1886, %v1883
    %v2097 = vpack.c.b16 %v1887, %v1884
    %v2098 = vpack.c.b16 %v1888, %v1885
    %v2099 = vpack.c.b16 %v1892, %v1889
    %v2100 = vpack.c.b16 %v1893, %v1890
    %v2101 = vpack.c.b16 %v1894, %v1891
    %v2102 = vpack.c.b16 %v1898, %v1895
    %v2103 = vpack.c.b16 %v1899, %v1896
    %v2104 = vpack.c.b16 %v1900, %v1897
    %v2105 = vpack.c.b16 %v1904, %v1901
    %v2106 = vpack.c.b16 %v1905, %v1902
    %v2107 = vpack.c.b16 %v1906, %v1903
    %v2108 = vpack.c.b16 %v1910, %v1907
    %v2109 = vpack.c.b16 %v1911, %v1908
    %v2110 = vpack.c.b16 %v1912, %v1909
    %v2111 = vpack.c.b16 %v1916, %v1913
    %v2112 = vpack.c.b16 %v1917, %v1914
    %v2113 = vpack.c.b16 %v1918, %v1915
    %v2114 = vpack.c.b16 %v1922, %v1919
    %v2115 = vpack.c.b16 %v1923, %v1920
    %v2116 = vpack.c.b16 %v1924, %v1921
    %2309 = vmatprep.subr.bf16.mxu0 %v1947
    %2310 = vmatpush1.bf16.msra.mxu0 %v1946
    %2311 = vmatprep.subr.bf16.mxu0 %v1944
    %2312 = vmatpush1.bf16.msra.mxu0 %v1943
    %2313 = vmatprep.subr.bf16.mxu0 %v1941
    %2314 = vmatpush1.bf16.msra.mxu0 %v1940
    %2315 = vmatprep.subr.bf16.mxu0 %v1938
    %2316 = vmatpush1.bf16.msra.mxu0 %v1937
    %2317 = vmatprep.subr.bf16.mxu0 %v1935
    %2318 = vmatpush1.bf16.msra.mxu0 %v1934
    %2319 = vmatprep.subr.bf16.mxu0 %v1932
    %2320 = vmatpush1.bf16.msra.mxu0 %v1931
    %2321 = vmatprep.subr.bf16.mxu0 %v1929
    %2322 = vmatpush1.bf16.msra.mxu0 %v1928
    %2323 = vmatprep.subr.bf16.mxu0 %v1926
    %2324 = vmatpush1.bf16.msra.mxu0 %v1925
    %2325 = vmatprep.subr.bf16.mxu0 %v1971
    %2326 = vmatpush2.bf16.msra.mxu0 %v1970
    %2327 = vmatprep.subr.bf16.mxu0 %v1968
    %2328 = vmatpush2.bf16.msra.mxu0 %v1967
    %2329 = vmatprep.subr.bf16.mxu0 %v1965
    %2330 = vmatpush2.bf16.msra.mxu0 %v1964
    %2331 = vmatprep.subr.bf16.mxu0 %v1962
    %2332 = vmatpush2.bf16.msra.mxu0 %v1961
    %2333 = vmatprep.subr.bf16.mxu0 %v1959
    %2334 = vmatpush2.bf16.msra.mxu0 %v1958
    %2335 = vmatprep.subr.bf16.mxu0 %v1956
    %2336 = vmatpush2.bf16.msra.mxu0 %v1955
    %2337 = vmatprep.subr.bf16.mxu0 %v1953
    %2338 = vmatpush2.bf16.msra.mxu0 %v1952
    %2339 = vmatprep.subr.bf16.mxu0 %v1950
    %2340 = vmatpush2.bf16.msra.mxu0 %v1949
    %2341 = vmatprep.mubr.bf16.mxu0 %v1005
    %2342 = vmatmul.mubr.bf16.gmra.mxu0 %v1004
    %v2343 = vpop.f32.mrf.mxu0
    %v2344 = vadd.f32 %v1273, %v2343
    %v2345 = vpop.f32.mrf.mxu0
    %v2346 = vadd.f32 %v1277, %v2345
    %v2347 = vpop.f32.mrf.mxu0
    %v2348 = vadd.f32 %v1273, %v2347
    %v2349 = vpop.f32.mrf.mxu0
    %v2350 = vadd.f32 %v1277, %v2349
    %2351 = vdwg.mxu0
    %2352 = vmatprep.subr.bf16.mxu0 %v1995
    %2353 = vmatpush1.bf16.msra.mxu0 %v1994
    %2354 = vmatprep.subr.bf16.mxu0 %v1992
    %2355 = vmatpush1.bf16.msra.mxu0 %v1991
    %2356 = vmatprep.subr.bf16.mxu0 %v1989
    %2357 = vmatpush1.bf16.msra.mxu0 %v1988
    %2358 = vmatprep.subr.bf16.mxu0 %v1986
    %2359 = vmatpush1.bf16.msra.mxu0 %v1985
    %2360 = vmatprep.subr.bf16.mxu0 %v1983
    %2361 = vmatpush1.bf16.msra.mxu0 %v1982
    %2362 = vmatprep.subr.bf16.mxu0 %v1980
    %2363 = vmatpush1.bf16.msra.mxu0 %v1979
    %2364 = vmatprep.subr.bf16.mxu0 %v1977
    %2365 = vmatpush1.bf16.msra.mxu0 %v1976
    %2366 = vmatprep.subr.bf16.mxu0 %v1974
    %2367 = vmatpush1.bf16.msra.mxu0 %v1973
    %2368 = vmatprep.subr.bf16.mxu0 %v2019
    %2369 = vmatpush2.bf16.msra.mxu0 %v2018
    %2370 = vmatprep.subr.bf16.mxu0 %v2016
    %2371 = vmatpush2.bf16.msra.mxu0 %v2015
    %2372 = vmatprep.subr.bf16.mxu0 %v2013
    %2373 = vmatpush2.bf16.msra.mxu0 %v2012
    %2374 = vmatprep.subr.bf16.mxu0 %v2010
    %2375 = vmatpush2.bf16.msra.mxu0 %v2009
    %2376 = vmatprep.subr.bf16.mxu0 %v2007
    %2377 = vmatpush2.bf16.msra.mxu0 %v2006
    %2378 = vmatprep.subr.bf16.mxu0 %v2004
    %2379 = vmatpush2.bf16.msra.mxu0 %v2003
    %2380 = vmatprep.subr.bf16.mxu0 %v2001
    %2381 = vmatpush2.bf16.msra.mxu0 %v2000
    %2382 = vmatprep.subr.bf16.mxu0 %v1998
    %2383 = vmatpush2.bf16.msra.mxu0 %v1997
    %2384 = vmatprep.mubr.bf16.mxu0 %v1007
    %2385 = vmatmul.mubr.bf16.gmra.mxu0 %v1006
    %v2386 = vpop.f32.mrf.mxu0
    %v2387 = vadd.f32 %v2344, %v2386
    %v2388 = vpop.f32.mrf.mxu0
    %v2389 = vadd.f32 %v2346, %v2388
    %v2390 = vpop.f32.mrf.mxu0
    %v2391 = vadd.f32 %v2348, %v2390
    %v2392 = vpop.f32.mrf.mxu0
    %v2393 = vadd.f32 %v2350, %v2392
    %2394 = vdwg.mxu0
    %2395 = vmatprep.subr.bf16.mxu0 %v2043
    %2396 = vmatpush1.bf16.msra.mxu0 %v2042
    %2397 = vmatprep.subr.bf16.mxu0 %v2040
    %2398 = vmatpush1.bf16.msra.mxu0 %v2039
    %2399 = vmatprep.subr.bf16.mxu0 %v2037
    %2400 = vmatpush1.bf16.msra.mxu0 %v2036
    %2401 = vmatprep.subr.bf16.mxu0 %v2034
    %2402 = vmatpush1.bf16.msra.mxu0 %v2033
    %2403 = vmatprep.subr.bf16.mxu0 %v2031
    %2404 = vmatpush1.bf16.msra.mxu0 %v2030
    %2405 = vmatprep.subr.bf16.mxu0 %v2028
    %2406 = vmatpush1.bf16.msra.mxu0 %v2027
    %2407 = vmatprep.subr.bf16.mxu0 %v2025
    %2408 = vmatpush1.bf16.msra.mxu0 %v2024
    %2409 = vmatprep.subr.bf16.mxu0 %v2022
    %2410 = vmatpush1.bf16.msra.mxu0 %v2021
    %2411 = vmatprep.subr.bf16.mxu0 %v2067
    %2412 = vmatpush2.bf16.msra.mxu0 %v2066
    %2413 = vmatprep.subr.bf16.mxu0 %v2064
    %2414 = vmatpush2.bf16.msra.mxu0 %v2063
    %2415 = vmatprep.subr.bf16.mxu0 %v2061
    %2416 = vmatpush2.bf16.msra.mxu0 %v2060
    %2417 = vmatprep.subr.bf16.mxu0 %v2058
    %2418 = vmatpush2.bf16.msra.mxu0 %v2057
    %2419 = vmatprep.subr.bf16.mxu0 %v2055
    %2420 = vmatpush2.bf16.msra.mxu0 %v2054
    %2421 = vmatprep.subr.bf16.mxu0 %v2052
    %2422 = vmatpush2.bf16.msra.mxu0 %v2051
    %2423 = vmatprep.subr.bf16.mxu0 %v2049
    %2424 = vmatpush2.bf16.msra.mxu0 %v2048
    %2425 = vmatprep.subr.bf16.mxu0 %v2046
    %2426 = vmatpush2.bf16.msra.mxu0 %v2045
    %2427 = vmatprep.mubr.bf16.mxu0 %v1009
    %2428 = vmatmul.mubr.bf16.gmra.mxu0 %v1008
    %v2429 = vpop.f32.mrf.mxu0
    %v2430 = vadd.f32 %v2387, %v2429
    %v2431 = vpop.f32.mrf.mxu0
    %v2432 = vadd.f32 %v2389, %v2431
    %v2433 = vpop.f32.mrf.mxu0
    %v2434 = vadd.f32 %v2391, %v2433
    %v2435 = vpop.f32.mrf.mxu0
    %v2436 = vadd.f32 %v2393, %v2435
    %2437 = vdwg.mxu0
    %2438 = vmatprep.subr.bf16.mxu0 %v2091
    %2439 = vmatpush1.bf16.msra.mxu0 %v2090
    %2440 = vmatprep.subr.bf16.mxu0 %v2088
    %2441 = vmatpush1.bf16.msra.mxu0 %v2087
    %2442 = vmatprep.subr.bf16.mxu0 %v2085
    %2443 = vmatpush1.bf16.msra.mxu0 %v2084
    %2444 = vmatprep.subr.bf16.mxu0 %v2082
    %2445 = vmatpush1.bf16.msra.mxu0 %v2081
    %2446 = vmatprep.subr.bf16.mxu0 %v2079
    %2447 = vmatpush1.bf16.msra.mxu0 %v2078
    %2448 = vmatprep.subr.bf16.mxu0 %v2076
    %2449 = vmatpush1.bf16.msra.mxu0 %v2075
    %2450 = vmatprep.subr.bf16.mxu0 %v2073
    %2451 = vmatpush1.bf16.msra.mxu0 %v2072
    %2452 = vmatprep.subr.bf16.mxu0 %v2070
    %2453 = vmatpush1.bf16.msra.mxu0 %v2069
    %2454 = vmatprep.subr.bf16.mxu0 %v2115
    %2455 = vmatpush2.bf16.msra.mxu0 %v2114
    %2456 = vmatprep.subr.bf16.mxu0 %v2112
    %2457 = vmatpush2.bf16.msra.mxu0 %v2111
    %2458 = vmatprep.subr.bf16.mxu0 %v2109
    %2459 = vmatpush2.bf16.msra.mxu0 %v2108
    %2460 = vmatprep.subr.bf16.mxu0 %v2106
    %2461 = vmatpush2.bf16.msra.mxu0 %v2105
    %2462 = vmatprep.subr.bf16.mxu0 %v2103
    %2463 = vmatpush2.bf16.msra.mxu0 %v2102
    %2464 = vmatprep.subr.bf16.mxu0 %v2100
    %2465 = vmatpush2.bf16.msra.mxu0 %v2099
    %2466 = vmatprep.subr.bf16.mxu0 %v2097
    %2467 = vmatpush2.bf16.msra.mxu0 %v2096
    %2468 = vmatprep.subr.bf16.mxu0 %v2094
    %2469 = vmatpush2.bf16.msra.mxu0 %v2093
    %2470 = vmatprep.mubr.bf16.mxu0 %v1011
    %2471 = vmatmul.mubr.bf16.gmra.mxu0 %v1010
    %v2472 = vpop.f32.mrf.mxu0
    %v2473 = vadd.f32 %v2430, %v2472
    %v2474 = vpop.f32.mrf.mxu0
    %v2475 = vadd.f32 %v2432, %v2474
    %v2476 = vpop.f32.mrf.mxu0
    %v2477 = vadd.f32 %v2434, %v2476
    %v2478 = vpop.f32.mrf.mxu0
    %v2479 = vadd.f32 %v2436, %v2478
    %2480 = vdwg.mxu0
    %2481 = vmatprep.subr.bf16.mxu0 0
    %2482 = vmatpush1.bf16.msra.mxu0 %v1948
    %2483 = vmatprep.subr.bf16.mxu0 0
    %2484 = vmatpush1.bf16.msra.mxu0 %v1945
    %2485 = vmatprep.subr.bf16.mxu0 0
    %2486 = vmatpush1.bf16.msra.mxu0 %v1942
    %2487 = vmatprep.subr.bf16.mxu0 0
    %2488 = vmatpush1.bf16.msra.mxu0 %v1939
    %2489 = vmatprep.subr.bf16.mxu0 0
    %2490 = vmatpush1.bf16.msra.mxu0 %v1936
    %2491 = vmatprep.subr.bf16.mxu0 0
    %2492 = vmatpush1.bf16.msra.mxu0 %v1933
    %2493 = vmatprep.subr.bf16.mxu0 0
    %2494 = vmatpush1.bf16.msra.mxu0 %v1930
    %2495 = vmatprep.subr.bf16.mxu0 0
    %2496 = vmatpush1.bf16.msra.mxu0 %v1927
    %2497 = vmatprep.subr.bf16.mxu0 0
    %2498 = vmatpush2.bf16.msra.mxu0 %v1972
    %2499 = vmatprep.subr.bf16.mxu0 0
    %2500 = vmatpush2.bf16.msra.mxu0 %v1969
    %2501 = vmatprep.subr.bf16.mxu0 0
    %2502 = vmatpush2.bf16.msra.mxu0 %v1966
    %2503 = vmatprep.subr.bf16.mxu0 0
    %2504 = vmatpush2.bf16.msra.mxu0 %v1963
    %2505 = vmatprep.subr.bf16.mxu0 0
    %2506 = vmatpush2.bf16.msra.mxu0 %v1960
    %2507 = vmatprep.subr.bf16.mxu0 0
    %2508 = vmatpush2.bf16.msra.mxu0 %v1957
    %2509 = vmatprep.subr.bf16.mxu0 0
    %2510 = vmatpush2.bf16.msra.mxu0 %v1954
    %2511 = vmatprep.subr.bf16.mxu0 0
    %2512 = vmatpush2.bf16.msra.mxu0 %v1951
    %2513 = vmatprep.mubr.bf16.mxu0 %v1005
    %2514 = vmatmul.mubr.bf16.gmra.mxu0 %v1004
    %v2515 = vpop.f32.mrf.mxu0
    %v2516 = vadd.f32 %v1281, %v2515
    %v2517 = vpop.f32.mrf.mxu0
    %v2518 = vpop.f32.mrf.mxu0
    %v2519 = vadd.f32 %v1281, %v2518
    %v2520 = vpop.f32.mrf.mxu0
    %2521 = vdwg.mxu0
    %2522 = vmatprep.subr.bf16.mxu0 0
    %2523 = vmatpush1.bf16.msra.mxu0 %v1996
    %2524 = vmatprep.subr.bf16.mxu0 0
    %2525 = vmatpush1.bf16.msra.mxu0 %v1993
    %2526 = vmatprep.subr.bf16.mxu0 0
    %2527 = vmatpush1.bf16.msra.mxu0 %v1990
    %2528 = vmatprep.subr.bf16.mxu0 0
    %2529 = vmatpush1.bf16.msra.mxu0 %v1987
    %2530 = vmatprep.subr.bf16.mxu0 0
    %2531 = vmatpush1.bf16.msra.mxu0 %v1984
    %2532 = vmatprep.subr.bf16.mxu0 0
    %2533 = vmatpush1.bf16.msra.mxu0 %v1981
    %2534 = vmatprep.subr.bf16.mxu0 0
    %2535 = vmatpush1.bf16.msra.mxu0 %v1978
    %2536 = vmatprep.subr.bf16.mxu0 0
    %2537 = vmatpush1.bf16.msra.mxu0 %v1975
    %2538 = vmatprep.subr.bf16.mxu0 0
    %2539 = vmatpush2.bf16.msra.mxu0 %v2020
    %2540 = vmatprep.subr.bf16.mxu0 0
    %2541 = vmatpush2.bf16.msra.mxu0 %v2017
    %2542 = vmatprep.subr.bf16.mxu0 0
    %2543 = vmatpush2.bf16.msra.mxu0 %v2014
    %2544 = vmatprep.subr.bf16.mxu0 0
    %2545 = vmatpush2.bf16.msra.mxu0 %v2011
    %2546 = vmatprep.subr.bf16.mxu0 0
    %2547 = vmatpush2.bf16.msra.mxu0 %v2008
    %2548 = vmatprep.subr.bf16.mxu0 0
    %2549 = vmatpush2.bf16.msra.mxu0 %v2005
    %2550 = vmatprep.subr.bf16.mxu0 0
    %2551 = vmatpush2.bf16.msra.mxu0 %v2002
    %2552 = vmatprep.subr.bf16.mxu0 0
    %2553 = vmatpush2.bf16.msra.mxu0 %v1999
    %2554 = vmatprep.mubr.bf16.mxu0 %v1007
    %2555 = vmatmul.mubr.bf16.gmra.mxu0 %v1006
    %v2556 = vpop.f32.mrf.mxu0
    %v2557 = vadd.f32 %v2516, %v2556
    %v2558 = vpop.f32.mrf.mxu0
    %v2559 = vpop.f32.mrf.mxu0
    %v2560 = vadd.f32 %v2519, %v2559
    %v2561 = vpop.f32.mrf.mxu0
    %2562 = vdwg.mxu0
    %2563 = vmatprep.subr.bf16.mxu0 0
    %2564 = vmatpush1.bf16.msra.mxu0 %v2044
    %2565 = vmatprep.subr.bf16.mxu0 0
    %2566 = vmatpush1.bf16.msra.mxu0 %v2041
    %2567 = vmatprep.subr.bf16.mxu0 0
    %2568 = vmatpush1.bf16.msra.mxu0 %v2038
    %2569 = vmatprep.subr.bf16.mxu0 0
    %2570 = vmatpush1.bf16.msra.mxu0 %v2035
    %2571 = vmatprep.subr.bf16.mxu0 0
    %2572 = vmatpush1.bf16.msra.mxu0 %v2032
    %2573 = vmatprep.subr.bf16.mxu0 0
    %2574 = vmatpush1.bf16.msra.mxu0 %v2029
    %2575 = vmatprep.subr.bf16.mxu0 0
    %2576 = vmatpush1.bf16.msra.mxu0 %v2026
    %2577 = vmatprep.subr.bf16.mxu0 0
    %2578 = vmatpush1.bf16.msra.mxu0 %v2023
    %2579 = vmatprep.subr.bf16.mxu0 0
    %2580 = vmatpush2.bf16.msra.mxu0 %v2068
    %2581 = vmatprep.subr.bf16.mxu0 0
    %2582 = vmatpush2.bf16.msra.mxu0 %v2065
    %2583 = vmatprep.subr.bf16.mxu0 0
    %2584 = vmatpush2.bf16.msra.mxu0 %v2062
    %2585 = vmatprep.subr.bf16.mxu0 0
    %2586 = vmatpush2.bf16.msra.mxu0 %v2059
    %2587 = vmatprep.subr.bf16.mxu0 0
    %2588 = vmatpush2.bf16.msra.mxu0 %v2056
    %2589 = vmatprep.subr.bf16.mxu0 0
    %2590 = vmatpush2.bf16.msra.mxu0 %v2053
    %2591 = vmatprep.subr.bf16.mxu0 0
    %2592 = vmatpush2.bf16.msra.mxu0 %v2050
    %2593 = vmatprep.subr.bf16.mxu0 0
    %2594 = vmatpush2.bf16.msra.mxu0 %v2047
    %2595 = vmatprep.mubr.bf16.mxu0 %v1009
    %2596 = vmatmul.mubr.bf16.gmra.mxu0 %v1008
    %v2597 = vpop.f32.mrf.mxu0
    %v2598 = vadd.f32 %v2557, %v2597
    %v2599 = vpop.f32.mrf.mxu0
    %v2600 = vpop.f32.mrf.mxu0
    %v2601 = vadd.f32 %v2560, %v2600
    %v2602 = vpop.f32.mrf.mxu0
    %2603 = vdwg.mxu0
    %2604 = vmatprep.subr.bf16.mxu0 0
    %2605 = vmatpush1.bf16.msra.mxu0 %v2092
    %2606 = vmatprep.subr.bf16.mxu0 0
    %2607 = vmatpush1.bf16.msra.mxu0 %v2089
    %2608 = vmatprep.subr.bf16.mxu0 0
    %2609 = vmatpush1.bf16.msra.mxu0 %v2086
    %2610 = vmatprep.subr.bf16.mxu0 0
    %2611 = vmatpush1.bf16.msra.mxu0 %v2083
    %2612 = vmatprep.subr.bf16.mxu0 0
    %2613 = vmatpush1.bf16.msra.mxu0 %v2080
    %2614 = vmatprep.subr.bf16.mxu0 0
    %2615 = vmatpush1.bf16.msra.mxu0 %v2077
    %2616 = vmatprep.subr.bf16.mxu0 0
    %2617 = vmatpush1.bf16.msra.mxu0 %v2074
    %2618 = vmatprep.subr.bf16.mxu0 0
    %2619 = vmatpush1.bf16.msra.mxu0 %v2071
    %2620 = vmatprep.subr.bf16.mxu0 0
    %2621 = vmatpush2.bf16.msra.mxu0 %v2116
    %2622 = vmatprep.subr.bf16.mxu0 0
    %2623 = vmatpush2.bf16.msra.mxu0 %v2113
    %2624 = vmatprep.subr.bf16.mxu0 0
    %2625 = vmatpush2.bf16.msra.mxu0 %v2110
    %2626 = vmatprep.subr.bf16.mxu0 0
    %2627 = vmatpush2.bf16.msra.mxu0 %v2107
    %2628 = vmatprep.subr.bf16.mxu0 0
    %2629 = vmatpush2.bf16.msra.mxu0 %v2104
    %2630 = vmatprep.subr.bf16.mxu0 0
    %2631 = vmatpush2.bf16.msra.mxu0 %v2101
    %2632 = vmatprep.subr.bf16.mxu0 0
    %2633 = vmatpush2.bf16.msra.mxu0 %v2098
    %2634 = vmatprep.subr.bf16.mxu0 0
    %2635 = vmatpush2.bf16.msra.mxu0 %v2095
    %2636 = vmatprep.mubr.bf16.mxu0 %v1011
    %2637 = vmatmul.mubr.bf16.gmra.mxu0 %v1010
    %v2638 = vpop.f32.mrf.mxu0
    %v2639 = vadd.f32 %v2598, %v2638
    %v2640 = vpop.f32.mrf.mxu0
    %v2641 = vpop.f32.mrf.mxu0
    %v2642 = vadd.f32 %v2601, %v2641
    %v2643 = vpop.f32.mrf.mxu0
    %2644 = vdwg.mxu0
    %2645 = vst [vmem:[#allocation14] sm:$0xff] %v2473
    %2646 = vst [vmem:[#allocation14 + $0x8] sm:$0xff] %v2475
    %2647 = vst [vmem:[#allocation14 + $0x10] sm:$0xff] %v2639
    %2648 = vst [vmem:[#allocation14 + $0x18] sm:$0xff] %v2477
    %2649 = vst [vmem:[#allocation14 + $0x20] sm:$0xff] %v2479
    %2650 = vst [vmem:[#allocation14 + $0x28] sm:$0xff] %v2642
    %v2651 = vpack.c.bf16 %v2477, %v2473
    %v2652 = vpack.c.bf16 %v2479, %v2475
    %v2653 = vpack.c.bf16 %v2642, %v2639
    %v2654 = vld [vmem:[#allocation13] sm:$0xff]
    %v2655 = vld [vmem:[#allocation13 + $0x8] sm:$0xff]
    %v2656 = vld [vmem:[#allocation13 + $0x10] sm:$0xff]
    %v2657 = vld [vmem:[#allocation13 + $0x18] sm:$0xff]
    %v2658 = vld [vmem:[#allocation13 + $0x20] sm:$0xff]
    %v2659 = vld [vmem:[#allocation13 + $0x28] sm:$0xff]
    %v2660 = vld [vmem:[#allocation13 + $0x30] sm:$0xff]
    %v2661 = vld [vmem:[#allocation13 + $0x38] sm:$0xff]
    %v2662 = vld [vmem:[#allocation13 + $0x40] sm:$0xff]
    %v2663 = vld [vmem:[#allocation13 + $0x48] sm:$0xff]
    %v2664 = vld [vmem:[#allocation13 + $0x50] sm:$0xff]
    %v2665 = vld [vmem:[#allocation13 + $0x58] sm:$0xff]
    %v2666 = vld [vmem:[#allocation13 + $0x60] sm:$0xff]
    %v2667 = vld [vmem:[#allocation13 + $0x68] sm:$0xff]
    %v2668 = vld [vmem:[#allocation13 + $0x70] sm:$0xff]
    %v2669 = vld [vmem:[#allocation13 + $0x78] sm:$0xff]
    %v2670 = vld [vmem:[#allocation13 + $0x80] sm:$0xff]
    %v2671 = vld [vmem:[#allocation13 + $0x88] sm:$0xff]
    %v2672 = vld [vmem:[#allocation13 + $0x90] sm:$0xff]
    %v2673 = vld [vmem:[#allocation13 + $0x98] sm:$0xff]
    %v2674 = vld [vmem:[#allocation13 + $0xa0] sm:$0xff]
    %v2675 = vld [vmem:[#allocation13 + $0xa8] sm:$0xff]
    %v2676 = vld [vmem:[#allocation13 + $0xb0] sm:$0xff]
    %v2677 = vld [vmem:[#allocation13 + $0xb8] sm:$0xff]
    %v2678 = vld [vmem:[#allocation13 + $0xc0] sm:$0xff]
    %v2679 = vld [vmem:[#allocation13 + $0xc8] sm:$0xff]
    %v2680 = vld [vmem:[#allocation13 + $0xd0] sm:$0xff]
    %v2681 = vld [vmem:[#allocation13 + $0xd8] sm:$0xff]
    %v2682 = vld [vmem:[#allocation13 + $0xe0] sm:$0xff]
    %v2683 = vld [vmem:[#allocation13 + $0xe8] sm:$0xff]
    %v2684 = vld [vmem:[#allocation13 + $0xf0] sm:$0xff]
    %v2685 = vld [vmem:[#allocation13 + $0xf8] sm:$0xff]
    %v2686 = vld [vmem:[#allocation13 + $0x100] sm:$0xff]
    %v2687 = vld [vmem:[#allocation13 + $0x108] sm:$0xff]
    %v2688 = vld [vmem:[#allocation13 + $0x110] sm:$0xff]
    %v2689 = vld [vmem:[#allocation13 + $0x118] sm:$0xff]
    %v2690 = vld [vmem:[#allocation13 + $0x120] sm:$0xff]
    %v2691 = vld [vmem:[#allocation13 + $0x128] sm:$0xff]
    %v2692 = vld [vmem:[#allocation13 + $0x130] sm:$0xff]
    %v2693 = vld [vmem:[#allocation13 + $0x138] sm:$0xff]
    %v2694 = vld [vmem:[#allocation13 + $0x140] sm:$0xff]
    %v2695 = vld [vmem:[#allocation13 + $0x148] sm:$0xff]
    %v2696 = vld [vmem:[#allocation13 + $0x150] sm:$0xff]
    %v2697 = vld [vmem:[#allocation13 + $0x158] sm:$0xff]
    %v2698 = vld [vmem:[#allocation13 + $0x160] sm:$0xff]
    %v2699 = vld [vmem:[#allocation13 + $0x168] sm:$0xff]
    %v2700 = vld [vmem:[#allocation13 + $0x170] sm:$0xff]
    %v2701 = vld [vmem:[#allocation13 + $0x178] sm:$0xff]
    %v2702 = vld [vmem:[%s10] sm:$0x3]
    %v2704 = vlaneseq
    %v2705 = vshrl.u32 %v2704, 7
    %v2706 = vsub.s32 0, %v2705
    %v2707 = vrot.slane %v2702, %v2706
    %v2708 = vlaneseq
    %v2709 = vshrl.u32 %v2708, 7
    %v2710 = vsub.s32 1, %v2709
    %v2711 = vrot.slane %v2702, %v2710
    %v2762 = vunpack.c.l.b16 %v2654
    %v2763 = vunpack.c.h.b16 %v2654
    %v2764 = vunpack.c.l.b16 %v2655
    %v2765 = vunpack.c.h.b16 %v2655
    %v2766 = vunpack.c.l.b16 %v2656
    %v2767 = vunpack.c.h.b16 %v2656
    %v2768 = vunpack.c.l.b16 %v2657
    %v2769 = vunpack.c.h.b16 %v2657
    %v2770 = vunpack.c.l.b16 %v2658
    %v2771 = vunpack.c.h.b16 %v2658
    %v2772 = vunpack.c.l.b16 %v2659
    %v2773 = vunpack.c.h.b16 %v2659
    %v2774 = vunpack.c.l.b16 %v2660
    %v2775 = vunpack.c.h.b16 %v2660
    %v2776 = vunpack.c.l.b16 %v2661
    %v2777 = vunpack.c.h.b16 %v2661
    %v2778 = vunpack.c.l.b16 %v2662
    %v2779 = vunpack.c.h.b16 %v2662
    %v2780 = vunpack.c.l.b16 %v2663
    %v2781 = vunpack.c.h.b16 %v2663
    %v2782 = vunpack.c.l.b16 %v2664
    %v2783 = vunpack.c.h.b16 %v2664
    %v2784 = vunpack.c.l.b16 %v2665
    %v2785 = vunpack.c.h.b16 %v2665
    %v2786 = vunpack.c.l.b16 %v2666
    %v2787 = vunpack.c.h.b16 %v2666
    %v2788 = vunpack.c.l.b16 %v2667
    %v2789 = vunpack.c.h.b16 %v2667
    %v2790 = vunpack.c.l.b16 %v2668
    %v2791 = vunpack.c.h.b16 %v2668
    %v2792 = vunpack.c.l.b16 %v2669
    %v2793 = vunpack.c.h.b16 %v2669
    %v2794 = vunpack.c.l.b16 %v2670
    %v2795 = vunpack.c.h.b16 %v2670
    %v2796 = vunpack.c.l.b16 %v2671
    %v2797 = vunpack.c.h.b16 %v2671
    %v2798 = vunpack.c.l.b16 %v2672
    %v2799 = vunpack.c.h.b16 %v2672
    %v2800 = vunpack.c.l.b16 %v2673
    %v2801 = vunpack.c.h.b16 %v2673
    %v2802 = vunpack.c.l.b16 %v2674
    %v2803 = vunpack.c.h.b16 %v2674
    %v2804 = vunpack.c.l.b16 %v2675
    %v2805 = vunpack.c.h.b16 %v2675
    %v2806 = vunpack.c.l.b16 %v2676
    %v2807 = vunpack.c.h.b16 %v2676
    %v2808 = vunpack.c.l.b16 %v2677
    %v2809 = vunpack.c.h.b16 %v2677
    %v2810 = vunpack.c.l.b16 %v2678
    %v2811 = vunpack.c.h.b16 %v2678
    %v2812 = vunpack.c.l.b16 %v2679
    %v2813 = vunpack.c.h.b16 %v2679
    %v2814 = vunpack.c.l.b16 %v2680
    %v2815 = vunpack.c.h.b16 %v2680
    %v2816 = vunpack.c.l.b16 %v2681
    %v2817 = vunpack.c.h.b16 %v2681
    %v2818 = vunpack.c.l.b16 %v2682
    %v2819 = vunpack.c.h.b16 %v2682
    %v2820 = vunpack.c.l.b16 %v2683
    %v2821 = vunpack.c.h.b16 %v2683
    %v2822 = vunpack.c.l.b16 %v2684
    %v2823 = vunpack.c.h.b16 %v2684
    %v2824 = vunpack.c.l.b16 %v2685
    %v2825 = vunpack.c.h.b16 %v2685
    %v2826 = vunpack.c.l.b16 %v2686
    %v2827 = vunpack.c.h.b16 %v2686
    %v2828 = vunpack.c.l.b16 %v2687
    %v2829 = vunpack.c.h.b16 %v2687
    %v2830 = vunpack.c.l.b16 %v2688
    %v2831 = vunpack.c.h.b16 %v2688
    %v2832 = vunpack.c.l.b16 %v2689
    %v2833 = vunpack.c.h.b16 %v2689
    %v2834 = vunpack.c.l.b16 %v2690
    %v2835 = vunpack.c.h.b16 %v2690
    %v2836 = vunpack.c.l.b16 %v2691
    %v2837 = vunpack.c.h.b16 %v2691
    %v2838 = vunpack.c.l.b16 %v2692
    %v2839 = vunpack.c.h.b16 %v2692
    %v2840 = vunpack.c.l.b16 %v2693
    %v2841 = vunpack.c.h.b16 %v2693
    %v2842 = vunpack.c.l.b16 %v2694
    %v2843 = vunpack.c.h.b16 %v2694
    %v2844 = vunpack.c.l.b16 %v2695
    %v2845 = vunpack.c.h.b16 %v2695
    %v2846 = vunpack.c.l.b16 %v2696
    %v2847 = vunpack.c.h.b16 %v2696
    %v2848 = vunpack.c.l.b16 %v2697
    %v2849 = vunpack.c.h.b16 %v2697
    %v2850 = vunpack.c.l.b16 %v2698
    %v2851 = vunpack.c.h.b16 %v2698
    %v2852 = vunpack.c.l.b16 %v2699
    %v2853 = vunpack.c.h.b16 %v2699
    %v2854 = vunpack.c.l.b16 %v2700
    %v2855 = vunpack.c.h.b16 %v2700
    %v2856 = vunpack.c.l.b16 %v2701
    %v2857 = vunpack.c.h.b16 %v2701
    %v2858 = vpack.c.b16 %v2764, %v2762
    %v2859 = vpack.c.b16 %v2765, %v2763
    %v2860 = vpack.c.b16 %v2768, %v2766
    %v2861 = vpack.c.b16 %v2769, %v2767
    %v2862 = vpack.c.b16 %v2772, %v2770
    %v2863 = vpack.c.b16 %v2773, %v2771
    %v2864 = vpack.c.b16 %v2776, %v2774
    %v2865 = vpack.c.b16 %v2777, %v2775
    %v2866 = vpack.c.b16 %v2780, %v2778
    %v2867 = vpack.c.b16 %v2781, %v2779
    %v2868 = vpack.c.b16 %v2784, %v2782
    %v2869 = vpack.c.b16 %v2785, %v2783
    %v2870 = vpack.c.b16 %v2788, %v2786
    %v2871 = vpack.c.b16 %v2789, %v2787
    %v2872 = vpack.c.b16 %v2792, %v2790
    %v2873 = vpack.c.b16 %v2793, %v2791
    %v2874 = vpack.c.b16 %v2796, %v2794
    %v2875 = vpack.c.b16 %v2797, %v2795
    %v2876 = vpack.c.b16 %v2800, %v2798
    %v2877 = vpack.c.b16 %v2801, %v2799
    %v2878 = vpack.c.b16 %v2804, %v2802
    %v2879 = vpack.c.b16 %v2805, %v2803
    %v2880 = vpack.c.b16 %v2808, %v2806
    %v2881 = vpack.c.b16 %v2809, %v2807
    %v2882 = vpack.c.b16 %v2812, %v2810
    %v2883 = vpack.c.b16 %v2813, %v2811
    %v2884 = vpack.c.b16 %v2816, %v2814
    %v2885 = vpack.c.b16 %v2817, %v2815
    %v2886 = vpack.c.b16 %v2820, %v2818
    %v2887 = vpack.c.b16 %v2821, %v2819
    %v2888 = vpack.c.b16 %v2824, %v2822
    %v2889 = vpack.c.b16 %v2825, %v2823
    %v2890 = vpack.c.b16 %v2828, %v2826
    %v2891 = vpack.c.b16 %v2829, %v2827
    %v2892 = vpack.c.b16 %v2832, %v2830
    %v2893 = vpack.c.b16 %v2833, %v2831
    %v2894 = vpack.c.b16 %v2836, %v2834
    %v2895 = vpack.c.b16 %v2837, %v2835
    %v2896 = vpack.c.b16 %v2840, %v2838
    %v2897 = vpack.c.b16 %v2841, %v2839
    %v2898 = vpack.c.b16 %v2844, %v2842
    %v2899 = vpack.c.b16 %v2845, %v2843
    %v2900 = vpack.c.b16 %v2848, %v2846
    %v2901 = vpack.c.b16 %v2849, %v2847
    %v2902 = vpack.c.b16 %v2852, %v2850
    %v2903 = vpack.c.b16 %v2853, %v2851
    %v2904 = vpack.c.b16 %v2856, %v2854
    %v2905 = vpack.c.b16 %v2857, %v2855
    %2954 = vmatprep.subr.bf16.mxu0 %v2873
    %2955 = vmatpush1.bf16.msra.mxu0 %v2872
    %2956 = vmatprep.subr.bf16.mxu0 %v2871
    %2957 = vmatpush1.bf16.msra.mxu0 %v2870
    %2958 = vmatprep.subr.bf16.mxu0 %v2869
    %2959 = vmatpush1.bf16.msra.mxu0 %v2868
    %2960 = vmatprep.subr.bf16.mxu0 %v2867
    %2961 = vmatpush1.bf16.msra.mxu0 %v2866
    %2962 = vmatprep.subr.bf16.mxu0 %v2865
    %2963 = vmatpush1.bf16.msra.mxu0 %v2864
    %2964 = vmatprep.subr.bf16.mxu0 %v2863
    %2965 = vmatpush1.bf16.msra.mxu0 %v2862
    %2966 = vmatprep.subr.bf16.mxu0 %v2861
    %2967 = vmatpush1.bf16.msra.mxu0 %v2860
    %2968 = vmatprep.subr.bf16.mxu0 %v2859
    %2969 = vmatpush1.bf16.msra.mxu0 %v2858
    %2970 = vmatprep.subr.bf16.mxu0 %v2889
    %2971 = vmatpush2.bf16.msra.mxu0 %v2888
    %2972 = vmatprep.subr.bf16.mxu0 %v2887
    %2973 = vmatpush2.bf16.msra.mxu0 %v2886
    %2974 = vmatprep.subr.bf16.mxu0 %v2885
    %2975 = vmatpush2.bf16.msra.mxu0 %v2884
    %2976 = vmatprep.subr.bf16.mxu0 %v2883
    %2977 = vmatpush2.bf16.msra.mxu0 %v2882
    %2978 = vmatprep.subr.bf16.mxu0 %v2881
    %2979 = vmatpush2.bf16.msra.mxu0 %v2880
    %2980 = vmatprep.subr.bf16.mxu0 %v2879
    %2981 = vmatpush2.bf16.msra.mxu0 %v2878
    %2982 = vmatprep.subr.bf16.mxu0 %v2877
    %2983 = vmatpush2.bf16.msra.mxu0 %v2876
    %2984 = vmatprep.subr.bf16.mxu0 %v2875
    %2985 = vmatpush2.bf16.msra.mxu0 %v2874
    %2986 = vmatprep.mubr.bf16.mxu0 %v2652
    %2987 = vmatmul.mubr.bf16.gmra.mxu0 %v2651
    %v2988 = vpop.f32.mrf.mxu0
    %v2989 = vadd.f32 %v2707, %v2988
    %v2990 = vpop.f32.mrf.mxu0
    %v2991 = vadd.f32 %v2711, %v2990
    %v2992 = vpop.f32.mrf.mxu0
    %v2993 = vadd.f32 %v2707, %v2992
    %v2994 = vpop.f32.mrf.mxu0
    %v2995 = vadd.f32 %v2711, %v2994
    %2996 = vdwg.mxu0
    %2997 = vmatprep.subr.bf16.mxu0 %v2905
    %2998 = vmatpush1.bf16.msra.mxu0 %v2904
    %2999 = vmatprep.subr.bf16.mxu0 %v2903
    %3000 = vmatpush1.bf16.msra.mxu0 %v2902
    %3001 = vmatprep.subr.bf16.mxu0 %v2901
    %3002 = vmatpush1.bf16.msra.mxu0 %v2900
    %3003 = vmatprep.subr.bf16.mxu0 %v2899
    %3004 = vmatpush1.bf16.msra.mxu0 %v2898
    %3005 = vmatprep.subr.bf16.mxu0 %v2897
    %3006 = vmatpush1.bf16.msra.mxu0 %v2896
    %3007 = vmatprep.subr.bf16.mxu0 %v2895
    %3008 = vmatpush1.bf16.msra.mxu0 %v2894
    %3009 = vmatprep.subr.bf16.mxu0 %v2893
    %3010 = vmatpush1.bf16.msra.mxu0 %v2892
    %3011 = vmatprep.subr.bf16.mxu0 %v2891
    %3012 = vmatpush1.bf16.msra.mxu0 %v2890
    %3013 = vmatprep.subr.bf16.mxu0 0
    %3014 = vmatpush2.bf16.msra.mxu0 0
    %3015 = vmatprep.subr.bf16.mxu0 0
    %3016 = vmatpush2.bf16.msra.mxu0 0
    %3017 = vmatprep.subr.bf16.mxu0 0
    %3018 = vmatpush2.bf16.msra.mxu0 0
    %3019 = vmatprep.subr.bf16.mxu0 0
    %3020 = vmatpush2.bf16.msra.mxu0 0
    %3021 = vmatprep.subr.bf16.mxu0 0
    %3022 = vmatpush2.bf16.msra.mxu0 0
    %3023 = vmatprep.subr.bf16.mxu0 0
    %3024 = vmatpush2.bf16.msra.mxu0 0
    %3025 = vmatprep.subr.bf16.mxu0 0
    %3026 = vmatpush2.bf16.msra.mxu0 0
    %3027 = vmatprep.subr.bf16.mxu0 0
    %3028 = vmatpush2.bf16.msra.mxu0 0
    %3029 = vmatprep.mubr.bf16.mxu0 0
    %3030 = vmatmul.mubr.bf16.gmra.mxu0 %v2653
    %v3031 = vpop.f32.mrf.mxu0
    %v3032 = vadd.f32 %v2989, %v3031
    %v3033 = vpop.f32.mrf.mxu0
    %v3034 = vadd.f32 %v2991, %v3033
    %v3035 = vpop.f32.mrf.mxu0
    %v3036 = vadd.f32 %v2993, %v3035
    %v3037 = vpop.f32.mrf.mxu0
    %v3038 = vadd.f32 %v2995, %v3037
    %3039 = vdwg.mxu0
    %v3040 = vmax.f32 %v3032, %v3034
    %3041 = vmax.xlane.f32.xlu0 %v3040
    %v3042 = vpop.xlane.xlu0 %3041
    %v3043 = vmax.f32 %v3036, %v3038
    %3044 = vmax.xlane.f32.xlu0 %v3043
    %v3045 = vpop.xlane.xlu0 %3044
    %v3046 = vsub.f32 %v3032, %v3042
    %v3047 = vsub.f32 %v3034, %v3042
    %v3048 = vsub.f32 %v3036, %v3045
    %v3049 = vsub.f32 %v3038, %v3045
    %v3050 = vmul.f32 %v3046, 1.442695
    %v3051 = vpow.pop %v3050
    %v3052 = vmul.f32 %v3047, 1.442695
    %v3053 = vpow.pop %v3052
    %v3054 = vmul.f32 %v3048, 1.442695
    %v3055 = vpow.pop %v3054
    %v3056 = vmul.f32 %v3049, 1.442695
    %v3057 = vpow.pop %v3056
    %v3058 = vadd.f32 %v3051, %v3053
    %3059 = vadd.xlane.f32.xlu0 %v3058
    %v3060 = vpop.xlane.xlu0 %3059
    %v3061 = vadd.f32 %v3055, %v3057
    %3062 = vadd.xlane.f32.xlu0 %v3061
    %v3063 = vpop.xlane.xlu0 %3062
    %v3064 = vrcp.pop %v3060
    %v3065 = vrcp.pop %v3063
    %v3066 = vmul.f32 %v3051, %v3064
    %v3067 = vmul.f32 %v3053, %v3064
    %v3068 = vmul.f32 %v3055, %v3065
    %v3069 = vmul.f32 %v3057, %v3065
    %3070 = vst [vmem:[#allocation15] sm:$0xff] %v3066
    %3071 = vst [vmem:[#allocation15 + $0x8] sm:$0xff] %v3067
    %3072 = vst [vmem:[#allocation15 + $0x10] sm:$0xff] %v3068
    %3073 = vst [vmem:[#allocation15 + $0x18] sm:$0xff] %v3069
    // Predicated region
    $region74: #{tpu_custom_call.1} parent=1 // pred_check
      _
    $region75: #{tpu_custom_call.1} parent=1 // pred_check_branch
      %3075 = sbr.rel (0) target = $region77
    $region76: #{tpu_custom_call.1} parent=1 // pred_region
      %s3077 = ssub.s32 768, 768
      %3078 = vsyncadd [#allocation4], %s3077
      %s3079 = sshll.u32 [#allocation14], 4
      %s3080 = int_to_ptr.vmem [resolvable:$true] %s3079
      %3085 = dma.vmem_to_hbm [thread:$0]  %s3080, 768, %s11, [#allocation4], 384, 384, 24
    $region77: #{tpu_custom_call.1} parent=1 // pred_fallthru
      _
    // Predicated region
    $region78: #{tpu_custom_call.1} parent=1 // pred_check
      _
    $region79: #{tpu_custom_call.1} parent=1 // pred_check_branch
      %3087 = sbr.rel (0) target = $region81
    $region80: #{tpu_custom_call.1} parent=1 // pred_region
      %s3089 = ssub.s32 512, 512
      %3090 = vsyncadd [#allocation16], %s3089
      %s3091 = sshll.u32 [#allocation15], 4
      %s3092 = int_to_ptr.vmem [resolvable:$true] %s3091
      %3097 = dma.vmem_to_hbm [thread:$0]  %s3092, 512, %s12, [#allocation16], 256, 256, 16
    $region81: #{tpu_custom_call.1} parent=1 // pred_fallthru
      _
    // Predicated region
    $region82: #{tpu_custom_call.1} parent=1 // pred_check
      _
    $region83: #{tpu_custom_call.1} parent=1 // pred_check_branch
      %3099 = sbr.rel (0) target = $region85
    $region84: #{tpu_custom_call.1} parent=1 // pred_region
      %3100 = dma.done [#allocation4], 768
    $region85: #{tpu_custom_call.1} parent=1 // pred_fallthru
      _
    // Predicated region
    $region86: #{tpu_custom_call.1} parent=1 // pred_check
      _
    $region87: #{tpu_custom_call.1} parent=1 // pred_check_branch
      %3102 = sbr.rel (0) target = $region89
    $region88: #{tpu_custom_call.1} parent=1 // pred_region
      %3103 = dma.done [#allocation16], 512
    $region89: #{tpu_custom_call.1} parent=1 // pred_fallthru
      _
    %3104 = vsyncpa [#allocation3], 1
    %3105 = vsyncpa [#allocation6], 1
    %3106 = vsyncpa [#allocation9], 1
    %3107 = vsyncpa [#allocation12], 1
    %3108 = vsyncpa [#allocation4], 1
    %3109 = vsyncpa [#allocation16], 1

// kernel: tpu_custom_call.1
$region0: #{tpu_custom_call.1}
  #allocation0 [shape = 'u32[]', space=smem, size = 0x4, offset = 0x4, fixed_abs, tag = 'smem constant byte address 0x4 - core index']
  #allocation1 [shape = 'u32[144,128]{1,0:T(1,128)}', space=vmem, size = 0x12000, scoped, tag = 'internal scratch']
  %s0 = inlined_call_operand.hbm [shape: bf16[16,128], index: 0, kind: input, shape index: {}]
  %s1 = inlined_call_operand.hbm [shape: bf16[128,128], index: 1, kind: input, shape index: {}]
  %s2 = inlined_call_operand.vmem [shape: f32[1,128], index: 2, kind: input, shape index: {}]
  %s3 = inlined_call_operand.hbm [shape: bf16[128,128], index: 3, kind: input, shape index: {}]
  %s4 = inlined_call_operand.hbm [shape: f32[1,128], index: 4, kind: input, shape index: {}]
  %s5 = inlined_call_operand.hbm [shape: bf16[128,1024], index: 5, kind: input, shape index: {}]
  %s6 = inlined_call_operand.vmem [shape: f32[1,1024], index: 6, kind: input, shape index: {}]
  %s7 = inlined_call_operand.hbm [shape: bf16[1024,384], index: 7, kind: input, shape index: {}]
  %s8 = inlined_call_operand.vmem [shape: f32[1,384], index: 8, kind: input, shape index: {}]
  %s9 = inlined_call_operand.hbm [shape: bf16[384,256], index: 9, kind: input, shape index: {}]
  %s10 = inlined_call_operand.vmem [shape: f32[1,256], index: 10, kind: input, shape index: {}]
  %s11 = inlined_call_operand.hbm [shape: f32[16,384], index: 11, kind: output, shape index: {0}]
  %s12 = inlined_call_operand.hbm [shape: f32[16,256], index: 12, kind: output, shape index: {1}]
  %13 = xla_tuple %s11, %s12
  %s14 = sld [smem:[#allocation0]]
  $region90: #{tpu_custom_call.1} parent=0
    _
  %s16 = ssub.s32 1, %s14
  %s17 = scalar_select 0, %s16, %s14
  $region1: #{tpu_custom_call.1} parent=0
    #allocation2 [shape = 'u8[4096]{0}', space=vmem, size = 0x1000, scoped, tag = 'input window, operand 0, single buffered']
    #allocation3 [shape = 's32[1]{0}', space=sflag, size = 0x4, scoped, tag = 'scoped memory for tpu_custom_call.1']
    #allocation4 [shape = 's32[1]{0}', space=sflag, size = 0x4, scoped, tag = 'scoped memory for tpu_custom_call.1']
    #allocation5 [shape = 'u8[32768]{0}', space=vmem, size = 0x8000, scoped, tag = 'input window, operand 1, single buffered']
    #allocation6 [shape = 's32[1]{0}', space=sflag, size = 0x4, scoped, tag = 'scoped memory for tpu_custom_call.1']
    #allocation7 [shape = 'u8[32768]{0}', space=vmem, size = 0x8000, scoped, tag = 'input window, operand 3, single buffered']
    #allocation8 [shape = 'u8[512]{0}', space=vmem, size = 0x400, scoped, tag = 'input window, operand 4, single buffered']
    #allocation9 [shape = 's32[1]{0}', space=sflag, size = 0x4, scoped, tag = 'scoped memory for tpu_custom_call.1']
    #allocation10 [shape = 'u8[262144]{0}', space=vmem, size = 0x40000, scoped, tag = 'input window, operand 5, single buffered']
    #allocation11 [shape = 'u8[786432]{0}', space=vmem, size = 0xc0000, scoped, tag = 'input window, operand 7, single buffered']
    #allocation12 [shape = 's32[1]{0}', space=sflag, size = 0x4, scoped, tag = 'scoped memory for tpu_custom_call.1']
    #allocation13 [shape = 'u8[196608]{0}', space=vmem, size = 0x30000, scoped, tag = 'input window, operand 9, single buffered']
    #allocation14 [shape = 'u8[24576]{0}', space=vmem, size = 0x6000, scoped, tag = 'output window, operand 0, single buffered']
    #allocation15 [shape = 'u8[16384]{0}', space=vmem, size = 0x4000, scoped, tag = 'output window, operand 1, single buffered']
    #allocation16 [shape = 's32[1]{0}', space=sflag, size = 0x4, scoped, tag = 'scoped memory for tpu_custom_call.1']
    %18 = vsyncpa [#allocation3], 0
    %19 = vsyncpa [#allocation6], 0
    %20 = vsyncpa [#allocation9], 0
    %21 = vsyncpa [#allocation12], 0
    %22 = vsyncpa [#allocation4], 0
    %23 = vsyncpa [#allocation16], 0
    // Predicated region
    $region2: #{tpu_custom_call.1} parent=1 // pred_check
      _
    $region3: #{tpu_custom_call.1} parent=1 // pred_check_branch
      %25 = sbr.rel (0) target = $region5
    $region4: #{tpu_custom_call.1} parent=1 // pred_region
      %s27 = ssub.s32 128, 128
      %28 = vsyncadd [#allocation3], %s27
      %s29 = sshll.u32 [#allocation2], 4
      %s30 = int_to_ptr.vmem [resolvable:$true] %s29
      %35 = dma.hbm_to_vmem [thread:$0]  %s0, 128, %s30, [#allocation3], 64, 64, 4
    $region5: #{tpu_custom_call.1} parent=1 // pred_fallthru
      _
    // Predicated region
    $region6: #{tpu_custom_call.1} parent=1 // pred_check
      _
    $region7: #{tpu_custom_call.1} parent=1 // pred_check_branch
      %37 = sbr.rel (0) target = $region9
    $region8: #{tpu_custom_call.1} parent=1 // pred_region
      %s39 = ssub.s32 1024, 1024
      %40 = vsyncadd [#allocation6], %s39
      %s41 = sshll.u32 [#allocation5], 4
      %s42 = int_to_ptr.vmem [resolvable:$true] %s41
      %47 = dma.hbm_to_vmem [thread:$0]  %s1, 1024, %s42, [#allocation6], 64, 64, 4
    $region9: #{tpu_custom_call.1} parent=1 // pred_fallthru
      _
    // Predicated region
    $region10: #{tpu_custom_call.1} parent=1 // pred_check
      _
    $region11: #{tpu_custom_call.1} parent=1 // pred_check_branch
      %49 = sbr.rel (0) target = $region13
    $region12: #{tpu_custom_call.1} parent=1 // pred_region
      _
    $region13: #{tpu_custom_call.1} parent=1 // pred_fallthru
      _
    // Predicated region
    $region14: #{tpu_custom_call.1} parent=1 // pred_check
      _
    $region15: #{tpu_custom_call.1} parent=1 // pred_check_branch
      %51 = sbr.rel (0) target = $region17
    $region16: #{tpu_custom_call.1} parent=1 // pred_region
      %s53 = ssub.s32 1024, 1024
      %54 = vsyncadd [#allocation6], %s53
      %s55 = sshll.u32 [#allocation7], 4
      %s56 = int_to_ptr.vmem [resolvable:$true] %s55
      %61 = dma.hbm_to_vmem [thread:$0]  %s3, 1024, %s56, [#allocation6], 64, 64, 4
    $region17: #{tpu_custom_call.1} parent=1 // pred_fallthru
      _
    // Predicated region
    $region18: #{tpu_custom_call.1} parent=1 // pred_check
      _
    $region19: #{tpu_custom_call.1} parent=1 // pred_check_branch
      %63 = sbr.rel (0) target = $region21
    $region20: #{tpu_custom_call.1} parent=1 // pred_region
      %s65 = ssub.s32 16, 16
      %66 = vsyncadd [#allocation9], %s65
      %s68 = sshll.u32 [#allocation8], 4
      %s69 = int_to_ptr.vmem [resolvable:$true] %s68
      %71 = dma.hbm_to_vmem [thread:$0]  %s4, 16, %s69, [#allocation9]
    $region21: #{tpu_custom_call.1} parent=1 // pred_fallthru
      _
    // Predicated region
    $region22: #{tpu_custom_call.1} parent=1 // pred_check
      _
    $region23: #{tpu_custom_call.1} parent=1 // pred_check_branch
      %73 = sbr.rel (0) target = $region25
    $region24: #{tpu_custom_call.1} parent=1 // pred_region
      %s75 = ssub.s32 8192, 8192
      %76 = vsyncadd [#allocation9], %s75
      %s77 = sshll.u32 [#allocation10], 4
      %s78 = int_to_ptr.vmem [resolvable:$true] %s77
      %83 = dma.hbm_to_vmem [thread:$0]  %s5, 8192, %s78, [#allocation9], 512, 512, 32
    $region25: #{tpu_custom_call.1} parent=1 // pred_fallthru
      _
    // Predicated region
    $region26: #{tpu_custom_call.1} parent=1 // pred_check
      _
    $region27: #{tpu_custom_call.1} parent=1 // pred_check_branch
      %85 = sbr.rel (0) target = $region29
    $region28: #{tpu_custom_call.1} parent=1 // pred_region
      _
    $region29: #{tpu_custom_call.1} parent=1 // pred_fallthru
      _
    // Predicated region
    $region30: #{tpu_custom_call.1} parent=1 // pred_check
      _
    $region31: #{tpu_custom_call.1} parent=1 // pred_check_branch
      %87 = sbr.rel (0) target = $region33
    $region32: #{tpu_custom_call.1} parent=1 // pred_region
      %s89 = ssub.s32 24576, 24576
      %90 = vsyncadd [#allocation12], %s89
      %s91 = sshll.u32 [#allocation11], 4
      %s92 = int_to_ptr.vmem [resolvable:$true] %s91
      %97 = dma.hbm_to_vmem [thread:$0]  %s7, 24576, %s92, [#allocation12], 192, 192, 12
    $region33: #{tpu_custom_call.1} parent=1 // pred_fallthru
      _
    // Predicated region
    $region34: #{tpu_custom_call.1} parent=1 // pred_check
      _
    $region35: #{tpu_custom_call.1} parent=1 // pred_check_branch
      %99 = sbr.rel (0) target = $region37
    $region36: #{tpu_custom_call.1} parent=1 // pred_region
      _
    $region37: #{tpu_custom_call.1} parent=1 // pred_fallthru
      _
    // Predicated region
    $region38: #{tpu_custom_call.1} parent=1 // pred_check
      _
    $region39: #{tpu_custom_call.1} parent=1 // pred_check_branch
      %101 = sbr.rel (0) target = $region41
    $region40: #{tpu_custom_call.1} parent=1 // pred_region
      %s103 = ssub.s32 6144, 6144
      %104 = vsyncadd [#allocation12], %s103
      %s105 = sshll.u32 [#allocation13], 4
      %s106 = int_to_ptr.vmem [resolvable:$true] %s105
      %111 = dma.hbm_to_vmem [thread:$0]  %s9, 6144, %s106, [#allocation12], 128, 128, 8
    $region41: #{tpu_custom_call.1} parent=1 // pred_fallthru
      _
    // Predicated region
    $region42: #{tpu_custom_call.1} parent=1 // pred_check
      _
    $region43: #{tpu_custom_call.1} parent=1 // pred_check_branch
      %113 = sbr.rel (0) target = $region45
    $region44: #{tpu_custom_call.1} parent=1 // pred_region
      _
    $region45: #{tpu_custom_call.1} parent=1 // pred_fallthru
      _
    // Predicated region
    $region46: #{tpu_custom_call.1} parent=1 // pred_check
      _
    $region47: #{tpu_custom_call.1} parent=1 // pred_check_branch
      %115 = sbr.rel (0) target = $region49
    $region48: #{tpu_custom_call.1} parent=1 // pred_region
      %116 = dma.done [#allocation3], 128
    $region49: #{tpu_custom_call.1} parent=1 // pred_fallthru
      _
    // Predicated region
    $region50: #{tpu_custom_call.1} parent=1 // pred_check
      _
    $region51: #{tpu_custom_call.1} parent=1 // pred_check_branch
      %118 = sbr.rel (0) target = $region53
    $region52: #{tpu_custom_call.1} parent=1 // pred_region
      %119 = dma.done [#allocation6], 1024
    $region53: #{tpu_custom_call.1} parent=1 // pred_fallthru
      _
    // Predicated region
    $region54: #{tpu_custom_call.1} parent=1 // pred_check
      _
    $region55: #{tpu_custom_call.1} parent=1 // pred_check_branch
      %121 = sbr.rel (0) target = $region57
    $region56: #{tpu_custom_call.1} parent=1 // pred_region
      %122 = dma.done [#allocation6], 1024
    $region57: #{tpu_custom_call.1} parent=1 // pred_fallthru
      _
    // Predicated region
    $region58: #{tpu_custom_call.1} parent=1 // pred_check
      _
    $region59: #{tpu_custom_call.1} parent=1 // pred_check_branch
      %124 = sbr.rel (0) target = $region61
    $region60: #{tpu_custom_call.1} parent=1 // pred_region
      %125 = dma.done [#allocation9], 16
    $region61: #{tpu_custom_call.1} parent=1 // pred_fallthru
      _
    // Predicated region
    $region62: #{tpu_custom_call.1} parent=1 // pred_check
      _
    $region63: #{tpu_custom_call.1} parent=1 // pred_check_branch
      %127 = sbr.rel (0) target = $region65
    $region64: #{tpu_custom_call.1} parent=1 // pred_region
      %128 = dma.done [#allocation9], 8192
    $region65: #{tpu_custom_call.1} parent=1 // pred_fallthru
      _
    // Predicated region
    $region66: #{tpu_custom_call.1} parent=1 // pred_check
      _
    $region67: #{tpu_custom_call.1} parent=1 // pred_check_branch
      %130 = sbr.rel (0) target = $region69
    $region68: #{tpu_custom_call.1} parent=1 // pred_region
      %131 = dma.done [#allocation12], 24576
    $region69: #{tpu_custom_call.1} parent=1 // pred_fallthru
      _
    // Predicated region
    $region70: #{tpu_custom_call.1} parent=1 // pred_check
      _
    $region71: #{tpu_custom_call.1} parent=1 // pred_check_branch
      %133 = sbr.rel (0) target = $region73
    $region72: #{tpu_custom_call.1} parent=1 // pred_region
      %134 = dma.done [#allocation12], 6144
    $region73: #{tpu_custom_call.1} parent=1 // pred_fallthru
      _
    %v136 = vld [vmem:[#allocation2] sm:$0xf]
    %v137 = vld [vmem:[#allocation2 + $0x4] sm:$0xf]
    %v138 = vld [vmem:[#allocation5] sm:$0xf]
    %v139 = vld [vmem:[#allocation5 + $0x4] sm:$0xf]
    %v140 = vld [vmem:[#allocation5 + $0x8] sm:$0xf]
    %v141 = vld [vmem:[#allocation5 + $0xc] sm:$0xf]
    %v142 = vld [vmem:[#allocation5 + $0x10] sm:$0xf]
    %v143 = vld [vmem:[#allocation5 + $0x14] sm:$0xf]
    %v144 = vld [vmem:[#allocation5 + $0x18] sm:$0xf]
    %v145 = vld [vmem:[#allocation5 + $0x1c] sm:$0xf]
    %v146 = vld [vmem:[#allocation5 + $0x20] sm:$0xf]
    %v147 = vld [vmem:[#allocation5 + $0x24] sm:$0xf]
    %v148 = vld [vmem:[#allocation5 + $0x28] sm:$0xf]
    %v149 = vld [vmem:[#allocation5 + $0x2c] sm:$0xf]
    %v150 = vld [vmem:[#allocation5 + $0x30] sm:$0xf]
    %v151 = vld [vmem:[#allocation5 + $0x34] sm:$0xf]
    %v152 = vld [vmem:[#allocation5 + $0x38] sm:$0xf]
    %v153 = vld [vmem:[#allocation5 + $0x3c] sm:$0xf]
    %v154 = vld [vmem:[%s2] sm:$0x1]
    %v156 = vlaneseq
    %v157 = vshrl.u32 %v156, 7
    %v158 = vsub.s32 0, %v157
    %v159 = vrot.slane %v154, %v158
    %v163 = vunpack.c.l.b16 %v136
    %v164 = vunpack.c.l.b16 %v137
    %v165 = vpack.c.b16 %v164, %v163
    %v183 = vunpack.c.l.b16 %v138
    %v184 = vunpack.c.l.b16 %v139
    %v185 = vunpack.c.l.b16 %v140
    %v186 = vunpack.c.l.b16 %v141
    %v187 = vunpack.c.l.b16 %v142
    %v188 = vunpack.c.l.b16 %v143
    %v189 = vunpack.c.l.b16 %v144
    %v190 = vunpack.c.l.b16 %v145
    %v191 = vunpack.c.l.b16 %v146
    %v192 = vunpack.c.l.b16 %v147
    %v193 = vunpack.c.l.b16 %v148
    %v194 = vunpack.c.l.b16 %v149
    %v195 = vunpack.c.l.b16 %v150
    %v196 = vunpack.c.l.b16 %v151
    %v197 = vunpack.c.l.b16 %v152
    %v198 = vunpack.c.l.b16 %v153
    %v199 = vpack.c.b16 %v184, %v183
    %v200 = vpack.c.b16 %v186, %v185
    %v201 = vpack.c.b16 %v188, %v187
    %v202 = vpack.c.b16 %v190, %v189
    %v203 = vpack.c.b16 %v192, %v191
    %v204 = vpack.c.b16 %v194, %v193
    %v205 = vpack.c.b16 %v196, %v195
    %v206 = vpack.c.b16 %v198, %v197
    %215 = vmatprep.subr.bf16.mxu0 0
    %216 = vmatpush1.bf16.msra.mxu0 %v206
    %217 = vmatprep.subr.bf16.mxu0 0
    %218 = vmatpush1.bf16.msra.mxu0 %v205
    %219 = vmatprep.subr.bf16.mxu0 0
    %220 = vmatpush1.bf16.msra.mxu0 %v204
    %221 = vmatprep.subr.bf16.mxu0 0
    %222 = vmatpush1.bf16.msra.mxu0 %v203
    %223 = vmatprep.subr.bf16.mxu0 0
    %224 = vmatpush1.bf16.msra.mxu0 %v202
    %225 = vmatprep.subr.bf16.mxu0 0
    %226 = vmatpush1.bf16.msra.mxu0 %v201
    %227 = vmatprep.subr.bf16.mxu0 0
    %228 = vmatpush1.bf16.msra.mxu0 %v200
    %229 = vmatprep.subr.bf16.mxu0 0
    %230 = vmatpush1.bf16.msra.mxu0 %v199
    %231 = vmatprep.subr.bf16.mxu0 0
    %232 = vmatpush2.bf16.msra.mxu0 0
    %233 = vmatprep.subr.bf16.mxu0 0
    %234 = vmatpush2.bf16.msra.mxu0 0
    %235 = vmatprep.subr.bf16.mxu0 0
    %236 = vmatpush2.bf16.msra.mxu0 0
    %237 = vmatprep.subr.bf16.mxu0 0
    %238 = vmatpush2.bf16.msra.mxu0 0
    %239 = vmatprep.subr.bf16.mxu0 0
    %240 = vmatpush2.bf16.msra.mxu0 0
    %241 = vmatprep.subr.bf16.mxu0 0
    %242 = vmatpush2.bf16.msra.mxu0 0
    %243 = vmatprep.subr.bf16.mxu0 0
    %244 = vmatpush2.bf16.msra.mxu0 0
    %245 = vmatprep.subr.bf16.mxu0 0
    %246 = vmatpush2.bf16.msra.mxu0 0
    %247 = vmatprep.mubr.bf16.mxu0 0
    %248 = vmatmul.mubr.bf16.gmra.mxu0 %v165
    %v249 = vpop.f32.mrf.mxu0
    %v250 = vadd.f32 %v159, %v249
    %v251 = vpop.f32.mrf.mxu0
    %v252 = vpop.f32.mrf.mxu0
    %v253 = vadd.f32 %v159, %v252
    %v254 = vpop.f32.mrf.mxu0
    %255 = vdwg.mxu0
    %v256 = vmul.f32 %v250, 0.3
    %v257 = vmul.f32 %v253, 0.3
    %v258 = vmax.f32 %v250, %v256
    %v259 = vmax.f32 %v253, %v257
    %v260 = vpack.c.bf16 %v259, %v258
    %v261 = vld [vmem:[#allocation7] sm:$0xf]
    %v262 = vld [vmem:[#allocation7 + $0x4] sm:$0xf]
    %v263 = vld [vmem:[#allocation7 + $0x8] sm:$0xf]
    %v264 = vld [vmem:[#allocation7 + $0xc] sm:$0xf]
    %v265 = vld [vmem:[#allocation7 + $0x10] sm:$0xf]
    %v266 = vld [vmem:[#allocation7 + $0x14] sm:$0xf]
    %v267 = vld [vmem:[#allocation7 + $0x18] sm:$0xf]
    %v268 = vld [vmem:[#allocation7 + $0x1c] sm:$0xf]
    %v269 = vld [vmem:[#allocation7 + $0x20] sm:$0xf]
    %v270 = vld [vmem:[#allocation7 + $0x24] sm:$0xf]
    %v271 = vld [vmem:[#allocation7 + $0x28] sm:$0xf]
    %v272 = vld [vmem:[#allocation7 + $0x2c] sm:$0xf]
    %v273 = vld [vmem:[#allocation7 + $0x30] sm:$0xf]
    %v274 = vld [vmem:[#allocation7 + $0x34] sm:$0xf]
    %v275 = vld [vmem:[#allocation7 + $0x38] sm:$0xf]
    %v276 = vld [vmem:[#allocation7 + $0x3c] sm:$0xf]
    %v277 = vld [vmem:[#allocation8] sm:$0x1]
    %v279 = vlaneseq
    %v280 = vshrl.u32 %v279, 7
    %v281 = vsub.s32 0, %v280
    %v282 = vrot.slane %v277, %v281
    %v300 = vunpack.c.l.b16 %v261
    %v301 = vunpack.c.l.b16 %v262
    %v302 = vunpack.c.l.b16 %v263
    %v303 = vunpack.c.l.b16 %v264
    %v304 = vunpack.c.l.b16 %v265
    %v305 = vunpack.c.l.b16 %v266
    %v306 = vunpack.c.l.b16 %v267
    %v307 = vunpack.c.l.b16 %v268
    %v308 = vunpack.c.l.b16 %v269
    %v309 = vunpack.c.l.b16 %v270
    %v310 = vunpack.c.l.b16 %v271
    %v311 = vunpack.c.l.b16 %v272
    %v312 = vunpack.c.l.b16 %v273
    %v313 = vunpack.c.l.b16 %v274
    %v314 = vunpack.c.l.b16 %v275
    %v315 = vunpack.c.l.b16 %v276
    %v316 = vpack.c.b16 %v301, %v300
    %v317 = vpack.c.b16 %v303, %v302
    %v318 = vpack.c.b16 %v305, %v304
    %v319 = vpack.c.b16 %v307, %v306
    %v320 = vpack.c.b16 %v309, %v308
    %v321 = vpack.c.b16 %v311, %v310
    %v322 = vpack.c.b16 %v313, %v312
    %v323 = vpack.c.b16 %v315, %v314
    %332 = vmatprep.subr.bf16.mxu0 0
    %333 = vmatpush1.bf16.msra.mxu0 %v323
    %334 = vmatprep.subr.bf16.mxu0 0
    %335 = vmatpush1.bf16.msra.mxu0 %v322
    %336 = vmatprep.subr.bf16.mxu0 0
    %337 = vmatpush1.bf16.msra.mxu0 %v321
    %338 = vmatprep.subr.bf16.mxu0 0
    %339 = vmatpush1.bf16.msra.mxu0 %v320
    %340 = vmatprep.subr.bf16.mxu0 0
    %341 = vmatpush1.bf16.msra.mxu0 %v319
    %342 = vmatprep.subr.bf16.mxu0 0
    %343 = vmatpush1.bf16.msra.mxu0 %v318
    %344 = vmatprep.subr.bf16.mxu0 0
    %345 = vmatpush1.bf16.msra.mxu0 %v317
    %346 = vmatprep.subr.bf16.mxu0 0
    %347 = vmatpush1.bf16.msra.mxu0 %v316
    %348 = vmatprep.subr.bf16.mxu0 0
    %349 = vmatpush2.bf16.msra.mxu0 0
    %350 = vmatprep.subr.bf16.mxu0 0
    %351 = vmatpush2.bf16.msra.mxu0 0
    %352 = vmatprep.subr.bf16.mxu0 0
    %353 = vmatpush2.bf16.msra.mxu0 0
    %354 = vmatprep.subr.bf16.mxu0 0
    %355 = vmatpush2.bf16.msra.mxu0 0
    %356 = vmatprep.subr.bf16.mxu0 0
    %357 = vmatpush2.bf16.msra.mxu0 0
    %358 = vmatprep.subr.bf16.mxu0 0
    %359 = vmatpush2.bf16.msra.mxu0 0
    %360 = vmatprep.subr.bf16.mxu0 0
    %361 = vmatpush2.bf16.msra.mxu0 0
    %362 = vmatprep.subr.bf16.mxu0 0
    %363 = vmatpush2.bf16.msra.mxu0 0
    %364 = vmatprep.mubr.bf16.mxu0 0
    %365 = vmatmul.mubr.bf16.gmra.mxu0 %v260
    %v366 = vpop.f32.mrf.mxu0
    %v367 = vadd.f32 %v282, %v366
    %v368 = vpop.f32.mrf.mxu0
    %v369 = vpop.f32.mrf.mxu0
    %v370 = vadd.f32 %v282, %v369
    %v371 = vpop.f32.mrf.mxu0
    %372 = vdwg.mxu0
    %v373 = vpack.c.bf16 %v370, %v367
    %v374 = vld [vmem:[#allocation10] sm:$0xff]
    %v375 = vld [vmem:[#allocation10 + $0x8] sm:$0xff]
    %v376 = vld [vmem:[#allocation10 + $0x10] sm:$0xff]
    %v377 = vld [vmem:[#allocation10 + $0x18] sm:$0xff]
    %v378 = vld [vmem:[#allocation10 + $0x20] sm:$0xff]
    %v379 = vld [vmem:[#allocation10 + $0x28] sm:$0xff]
    %v380 = vld [vmem:[#allocation10 + $0x30] sm:$0xff]
    %v381 = vld [vmem:[#allocation10 + $0x38] sm:$0xff]
    %v382 = vld [vmem:[#allocation10 + $0x40] sm:$0xff]
    %v383 = vld [vmem:[#allocation10 + $0x48] sm:$0xff]
    %v384 = vld [vmem:[#allocation10 + $0x50] sm:$0xff]
    %v385 = vld [vmem:[#allocation10 + $0x58] sm:$0xff]
    %v386 = vld [vmem:[#allocation10 + $0x60] sm:$0xff]
    %v387 = vld [vmem:[#allocation10 + $0x68] sm:$0xff]
    %v388 = vld [vmem:[#allocation10 + $0x70] sm:$0xff]
    %v389 = vld [vmem:[#allocation10 + $0x78] sm:$0xff]
    %v390 = vld [vmem:[#allocation10 + $0x80] sm:$0xff]
    %v391 = vld [vmem:[#allocation10 + $0x88] sm:$0xff]
    %v392 = vld [vmem:[#allocation10 + $0x90] sm:$0xff]
    %v393 = vld [vmem:[#allocation10 + $0x98] sm:$0xff]
    %v394 = vld [vmem:[#allocation10 + $0xa0] sm:$0xff]
    %v395 = vld [vmem:[#allocation10 + $0xa8] sm:$0xff]
    %v396 = vld [vmem:[#allocation10 + $0xb0] sm:$0xff]
    %v397 = vld [vmem:[#allocation10 + $0xb8] sm:$0xff]
    %v398 = vld [vmem:[#allocation10 + $0xc0] sm:$0xff]
    %v399 = vld [vmem:[#allocation10 + $0xc8] sm:$0xff]
    %v400 = vld [vmem:[#allocation10 + $0xd0] sm:$0xff]
    %v401 = vld [vmem:[#allocation10 + $0xd8] sm:$0xff]
    %v402 = vld [vmem:[#allocation10 + $0xe0] sm:$0xff]
    %v403 = vld [vmem:[#allocation10 + $0xe8] sm:$0xff]
    %v404 = vld [vmem:[#allocation10 + $0xf0] sm:$0xff]
    %v405 = vld [vmem:[#allocation10 + $0xf8] sm:$0xff]
    %v406 = vld [vmem:[#allocation10 + $0x100] sm:$0xff]
    %v407 = vld [vmem:[#allocation10 + $0x108] sm:$0xff]
    %v408 = vld [vmem:[#allocation10 + $0x110] sm:$0xff]
    %v409 = vld [vmem:[#allocation10 + $0x118] sm:$0xff]
    %v410 = vld [vmem:[#allocation10 + $0x120] sm:$0xff]
    %v411 = vld [vmem:[#allocation10 + $0x128] sm:$0xff]
    %v412 = vld [vmem:[#allocation10 + $0x130] sm:$0xff]
    %v413 = vld [vmem:[#allocation10 + $0x138] sm:$0xff]
    %v414 = vld [vmem:[#allocation10 + $0x140] sm:$0xff]
    %v415 = vld [vmem:[#allocation10 + $0x148] sm:$0xff]
    %v416 = vld [vmem:[#allocation10 + $0x150] sm:$0xff]
    %v417 = vld [vmem:[#allocation10 + $0x158] sm:$0xff]
    %v418 = vld [vmem:[#allocation10 + $0x160] sm:$0xff]
    %v419 = vld [vmem:[#allocation10 + $0x168] sm:$0xff]
    %v420 = vld [vmem:[#allocation10 + $0x170] sm:$0xff]
    %v421 = vld [vmem:[#allocation10 + $0x178] sm:$0xff]
    %v422 = vld [vmem:[#allocation10 + $0x180] sm:$0xff]
    %v423 = vld [vmem:[#allocation10 + $0x188] sm:$0xff]
    %v424 = vld [vmem:[#allocation10 + $0x190] sm:$0xff]
    %v425 = vld [vmem:[#allocation10 + $0x198] sm:$0xff]
    %v426 = vld [vmem:[#allocation10 + $0x1a0] sm:$0xff]
    %v427 = vld [vmem:[#allocation10 + $0x1a8] sm:$0xff]
    %v428 = vld [vmem:[#allocation10 + $0x1b0] sm:$0xff]
    %v429 = vld [vmem:[#allocation10 + $0x1b8] sm:$0xff]
    %v430 = vld [vmem:[#allocation10 + $0x1c0] sm:$0xff]
    %v431 = vld [vmem:[#allocation10 + $0x1c8] sm:$0xff]
    %v432 = vld [vmem:[#allocation10 + $0x1d0] sm:$0xff]
    %v433 = vld [vmem:[#allocation10 + $0x1d8] sm:$0xff]
    %v434 = vld [vmem:[#allocation10 + $0x1e0] sm:$0xff]
    %v435 = vld [vmem:[#allocation10 + $0x1e8] sm:$0xff]
    %v436 = vld [vmem:[#allocation10 + $0x1f0] sm:$0xff]
    %v437 = vld [vmem:[#allocation10 + $0x1f8] sm:$0xff]
    %v438 = vld [vmem:[%s6] sm:$0xff]
    %v440 = vlaneseq
    %v441 = vshrl.u32 %v440, 7
    %v442 = vsub.s32 0, %v441
    %v443 = vrot.slane %v438, %v442
    %v444 = vlaneseq
    %v445 = vshrl.u32 %v444, 7
    %v446 = vsub.s32 1, %v445
    %v447 = vrot.slane %v438, %v446
    %v448 = vlaneseq
    %v449 = vshrl.u32 %v448, 7
    %v450 = vsub.s32 2, %v449
    %v451 = vrot.slane %v438, %v450
    %v452 = vlaneseq
    %v453 = vshrl.u32 %v452, 7
    %v454 = vsub.s32 3, %v453
    %v455 = vrot.slane %v438, %v454
    %v456 = vlaneseq
    %v457 = vshrl.u32 %v456, 7
    %v458 = vsub.s32 4, %v457
    %v459 = vrot.slane %v438, %v458
    %v460 = vlaneseq
    %v461 = vshrl.u32 %v460, 7
    %v462 = vsub.s32 5, %v461
    %v463 = vrot.slane %v438, %v462
    %v464 = vlaneseq
    %v465 = vshrl.u32 %v464, 7
    %v466 = vsub.s32 6, %v465
    %v467 = vrot.slane %v438, %v466
    %v468 = vlaneseq
    %v469 = vshrl.u32 %v468, 7
    %v470 = vsub.s32 7, %v469
    %v471 = vrot.slane %v438, %v470
    %v544 = vunpack.c.l.b16 %v374
    %v545 = vunpack.c.h.b16 %v374
    %v546 = vunpack.c.l.b16 %v375
    %v547 = vunpack.c.h.b16 %v375
    %v548 = vunpack.c.l.b16 %v376
    %v549 = vunpack.c.h.b16 %v376
    %v550 = vunpack.c.l.b16 %v377
    %v551 = vunpack.c.h.b16 %v377
    %v552 = vunpack.c.l.b16 %v378
    %v553 = vunpack.c.h.b16 %v378
    %v554 = vunpack.c.l.b16 %v379
    %v555 = vunpack.c.h.b16 %v379
    %v556 = vunpack.c.l.b16 %v380
    %v557 = vunpack.c.h.b16 %v380
    %v558 = vunpack.c.l.b16 %v381
    %v559 = vunpack.c.h.b16 %v381
    %v560 = vunpack.c.l.b16 %v382
    %v561 = vunpack.c.h.b16 %v382
    %v562 = vunpack.c.l.b16 %v383
    %v563 = vunpack.c.h.b16 %v383
    %v564 = vunpack.c.l.b16 %v384
    %v565 = vunpack.c.h.b16 %v384
    %v566 = vunpack.c.l.b16 %v385
    %v567 = vunpack.c.h.b16 %v385
    %v568 = vunpack.c.l.b16 %v386
    %v569 = vunpack.c.h.b16 %v386
    %v570 = vunpack.c.l.b16 %v387
    %v571 = vunpack.c.h.b16 %v387
    %v572 = vunpack.c.l.b16 %v388
    %v573 = vunpack.c.h.b16 %v388
    %v574 = vunpack.c.l.b16 %v389
    %v575 = vunpack.c.h.b16 %v389
    %v576 = vunpack.c.l.b16 %v390
    %v577 = vunpack.c.h.b16 %v390
    %v578 = vunpack.c.l.b16 %v391
    %v579 = vunpack.c.h.b16 %v391
    %v580 = vunpack.c.l.b16 %v392
    %v581 = vunpack.c.h.b16 %v392
    %v582 = vunpack.c.l.b16 %v393
    %v583 = vunpack.c.h.b16 %v393
    %v584 = vunpack.c.l.b16 %v394
    %v585 = vunpack.c.h.b16 %v394
    %v586 = vunpack.c.l.b16 %v395
    %v587 = vunpack.c.h.b16 %v395
    %v588 = vunpack.c.l.b16 %v396
    %v589 = vunpack.c.h.b16 %v396
    %v590 = vunpack.c.l.b16 %v397
    %v591 = vunpack.c.h.b16 %v397
    %v592 = vunpack.c.l.b16 %v398
    %v593 = vunpack.c.h.b16 %v398
    %v594 = vunpack.c.l.b16 %v399
    %v595 = vunpack.c.h.b16 %v399
    %v596 = vunpack.c.l.b16 %v400
    %v597 = vunpack.c.h.b16 %v400
    %v598 = vunpack.c.l.b16 %v401
    %v599 = vunpack.c.h.b16 %v401
    %v600 = vunpack.c.l.b16 %v402
    %v601 = vunpack.c.h.b16 %v402
    %v602 = vunpack.c.l.b16 %v403
    %v603 = vunpack.c.h.b16 %v403
    %v604 = vunpack.c.l.b16 %v404
    %v605 = vunpack.c.h.b16 %v404
    %v606 = vunpack.c.l.b16 %v405
    %v607 = vunpack.c.h.b16 %v405
    %v608 = vunpack.c.l.b16 %v406
    %v609 = vunpack.c.h.b16 %v406
    %v610 = vunpack.c.l.b16 %v407
    %v611 = vunpack.c.h.b16 %v407
    %v612 = vunpack.c.l.b16 %v408
    %v613 = vunpack.c.h.b16 %v408
    %v614 = vunpack.c.l.b16 %v409
    %v615 = vunpack.c.h.b16 %v409
    %v616 = vunpack.c.l.b16 %v410
    %v617 = vunpack.c.h.b16 %v410
    %v618 = vunpack.c.l.b16 %v411
    %v619 = vunpack.c.h.b16 %v411
    %v620 = vunpack.c.l.b16 %v412
    %v621 = vunpack.c.h.b16 %v412
    %v622 = vunpack.c.l.b16 %v413
    %v623 = vunpack.c.h.b16 %v413
    %v624 = vunpack.c.l.b16 %v414
    %v625 = vunpack.c.h.b16 %v414
    %v626 = vunpack.c.l.b16 %v415
    %v627 = vunpack.c.h.b16 %v415
    %v628 = vunpack.c.l.b16 %v416
    %v629 = vunpack.c.h.b16 %v416
    %v630 = vunpack.c.l.b16 %v417
    %v631 = vunpack.c.h.b16 %v417
    %v632 = vunpack.c.l.b16 %v418
    %v633 = vunpack.c.h.b16 %v418
    %v634 = vunpack.c.l.b16 %v419
    %v635 = vunpack.c.h.b16 %v419
    %v636 = vunpack.c.l.b16 %v420
    %v637 = vunpack.c.h.b16 %v420
    %v638 = vunpack.c.l.b16 %v421
    %v639 = vunpack.c.h.b16 %v421
    %v640 = vunpack.c.l.b16 %v422
    %v641 = vunpack.c.h.b16 %v422
    %v642 = vunpack.c.l.b16 %v423
    %v643 = vunpack.c.h.b16 %v423
    %v644 = vunpack.c.l.b16 %v424
    %v645 = vunpack.c.h.b16 %v424
    %v646 = vunpack.c.l.b16 %v425
    %v647 = vunpack.c.h.b16 %v425
    %v648 = vunpack.c.l.b16 %v426
    %v649 = vunpack.c.h.b16 %v426
    %v650 = vunpack.c.l.b16 %v427
    %v651 = vunpack.c.h.b16 %v427
    %v652 = vunpack.c.l.b16 %v428
    %v653 = vunpack.c.h.b16 %v428
    %v654 = vunpack.c.l.b16 %v429
    %v655 = vunpack.c.h.b16 %v429
    %v656 = vunpack.c.l.b16 %v430
    %v657 = vunpack.c.h.b16 %v430
    %v658 = vunpack.c.l.b16 %v431
    %v659 = vunpack.c.h.b16 %v431
    %v660 = vunpack.c.l.b16 %v432
    %v661 = vunpack.c.h.b16 %v432
    %v662 = vunpack.c.l.b16 %v433
    %v663 = vunpack.c.h.b16 %v433
    %v664 = vunpack.c.l.b16 %v434
    %v665 = vunpack.c.h.b16 %v434
    %v666 = vunpack.c.l.b16 %v435
    %v667 = vunpack.c.h.b16 %v435
    %v668 = vunpack.c.l.b16 %v436
    %v669 = vunpack.c.h.b16 %v436
    %v670 = vunpack.c.l.b16 %v437
    %v671 = vunpack.c.h.b16 %v437
    %v672 = vpack.c.b16 %v552, %v544
    %v673 = vpack.c.b16 %v553, %v545
    %v674 = vpack.c.b16 %v554, %v546
    %v675 = vpack.c.b16 %v555, %v547
    %v676 = vpack.c.b16 %v556, %v548
    %v677 = vpack.c.b16 %v557, %v549
    %v678 = vpack.c.b16 %v558, %v550
    %v679 = vpack.c.b16 %v559, %v551
    %v680 = vpack.c.b16 %v568, %v560
    %v681 = vpack.c.b16 %v569, %v561
    %v682 = vpack.c.b16 %v570, %v562
    %v683 = vpack.c.b16 %v571, %v563
    %v684 = vpack.c.b16 %v572, %v564
    %v685 = vpack.c.b16 %v573, %v565
    %v686 = vpack.c.b16 %v574, %v566
    %v687 = vpack.c.b16 %v575, %v567
    %v688 = vpack.c.b16 %v584, %v576
    %v689 = vpack.c.b16 %v585, %v577
    %v690 = vpack.c.b16 %v586, %v578
    %v691 = vpack.c.b16 %v587, %v579
    %v692 = vpack.c.b16 %v588, %v580
    %v693 = vpack.c.b16 %v589, %v581
    %v694 = vpack.c.b16 %v590, %v582
    %v695 = vpack.c.b16 %v591, %v583
    %v696 = vpack.c.b16 %v600, %v592
    %v697 = vpack.c.b16 %v601, %v593
    %v698 = vpack.c.b16 %v602, %v594
    %v699 = vpack.c.b16 %v603, %v595
    %v700 = vpack.c.b16 %v604, %v596
    %v701 = vpack.c.b16 %v605, %v597
    %v702 = vpack.c.b16 %v606, %v598
    %v703 = vpack.c.b16 %v607, %v599
    %v704 = vpack.c.b16 %v616, %v608
    %v705 = vpack.c.b16 %v617, %v609
    %v706 = vpack.c.b16 %v618, %v610
    %v707 = vpack.c.b16 %v619, %v611
    %v708 = vpack.c.b16 %v620, %v612
    %v709 = vpack.c.b16 %v621, %v613
    %v710 = vpack.c.b16 %v622, %v614
    %v711 = vpack.c.b16 %v623, %v615
    %v712 = vpack.c.b16 %v632, %v624
    %v713 = vpack.c.b16 %v633, %v625
    %v714 = vpack.c.b16 %v634, %v626
    %v715 = vpack.c.b16 %v635, %v627
    %v716 = vpack.c.b16 %v636, %v628
    %v717 = vpack.c.b16 %v637, %v629
    %v718 = vpack.c.b16 %v638, %v630
    %v719 = vpack.c.b16 %v639, %v631
    %v720 = vpack.c.b16 %v648, %v640
    %v721 = vpack.c.b16 %v649, %v641
    %v722 = vpack.c.b16 %v650, %v642
    %v723 = vpack.c.b16 %v651, %v643
    %v724 = vpack.c.b16 %v652, %v644
    %v725 = vpack.c.b16 %v653, %v645
    %v726 = vpack.c.b16 %v654, %v646
    %v727 = vpack.c.b16 %v655, %v647
    %v728 = vpack.c.b16 %v664, %v656
    %v729 = vpack.c.b16 %v665, %v657
    %v730 = vpack.c.b16 %v666, %v658
    %v731 = vpack.c.b16 %v667, %v659
    %v732 = vpack.c.b16 %v668, %v660
    %v733 = vpack.c.b16 %v669, %v661
    %v734 = vpack.c.b16 %v670, %v662
    %v735 = vpack.c.b16 %v671, %v663
    %800 = vmatprep.subr.bf16.mxu0 %v729
    %801 = vmatpush1.bf16.msra.mxu0 %v728
    %802 = vmatprep.subr.bf16.mxu0 %v721
    %803 = vmatpush1.bf16.msra.mxu0 %v720
    %804 = vmatprep.subr.bf16.mxu0 %v713
    %805 = vmatpush1.bf16.msra.mxu0 %v712
    %806 = vmatprep.subr.bf16.mxu0 %v705
    %807 = vmatpush1.bf16.msra.mxu0 %v704
    %808 = vmatprep.subr.bf16.mxu0 %v697
    %809 = vmatpush1.bf16.msra.mxu0 %v696
    %810 = vmatprep.subr.bf16.mxu0 %v689
    %811 = vmatpush1.bf16.msra.mxu0 %v688
    %812 = vmatprep.subr.bf16.mxu0 %v681
    %813 = vmatpush1.bf16.msra.mxu0 %v680
    %814 = vmatprep.subr.bf16.mxu0 %v673
    %815 = vmatpush1.bf16.msra.mxu0 %v672
    %816 = vmatprep.subr.bf16.mxu0 0
    %817 = vmatpush2.bf16.msra.mxu0 0
    %818 = vmatprep.subr.bf16.mxu0 0
    %819 = vmatpush2.bf16.msra.mxu0 0
    %820 = vmatprep.subr.bf16.mxu0 0
    %821 = vmatpush2.bf16.msra.mxu0 0
    %822 = vmatprep.subr.bf16.mxu0 0
    %823 = vmatpush2.bf16.msra.mxu0 0
    %824 = vmatprep.subr.bf16.mxu0 0
    %825 = vmatpush2.bf16.msra.mxu0 0
    %826 = vmatprep.subr.bf16.mxu0 0
    %827 = vmatpush2.bf16.msra.mxu0 0
    %828 = vmatprep.subr.bf16.mxu0 0
    %829 = vmatpush2.bf16.msra.mxu0 0
    %830 = vmatprep.subr.bf16.mxu0 0
    %831 = vmatpush2.bf16.msra.mxu0 0
    %832 = vmatprep.mubr.bf16.mxu0 0
    %833 = vmatmul.mubr.bf16.gmra.mxu0 %v373
    %v834 = vpop.f32.mrf.mxu0
    %v835 = vadd.f32 %v443, %v834
    %v836 = vpop.f32.mrf.mxu0
    %v837 = vadd.f32 %v447, %v836
    %v838 = vpop.f32.mrf.mxu0
    %v839 = vadd.f32 %v443, %v838
    %v840 = vpop.f32.mrf.mxu0
    %v841 = vadd.f32 %v447, %v840
    %842 = vdwg.mxu0
    %843 = vmatprep.subr.bf16.mxu0 %v731
    %844 = vmatpush1.bf16.msra.mxu0 %v730
    %845 = vmatprep.subr.bf16.mxu0 %v723
    %846 = vmatpush1.bf16.msra.mxu0 %v722
    %847 = vmatprep.subr.bf16.mxu0 %v715
    %848 = vmatpush1.bf16.msra.mxu0 %v714
    %849 = vmatprep.subr.bf16.mxu0 %v707
    %850 = vmatpush1.bf16.msra.mxu0 %v706
    %851 = vmatprep.subr.bf16.mxu0 %v699
    %852 = vmatpush1.bf16.msra.mxu0 %v698
    %853 = vmatprep.subr.bf16.mxu0 %v691
    %854 = vmatpush1.bf16.msra.mxu0 %v690
    %855 = vmatprep.subr.bf16.mxu0 %v683
    %856 = vmatpush1.bf16.msra.mxu0 %v682
    %857 = vmatprep.subr.bf16.mxu0 %v675
    %858 = vmatpush1.bf16.msra.mxu0 %v674
    %859 = vmatprep.subr.bf16.mxu0 0
    %860 = vmatpush2.bf16.msra.mxu0 0
    %861 = vmatprep.subr.bf16.mxu0 0
    %862 = vmatpush2.bf16.msra.mxu0 0
    %863 = vmatprep.subr.bf16.mxu0 0
    %864 = vmatpush2.bf16.msra.mxu0 0
    %865 = vmatprep.subr.bf16.mxu0 0
    %866 = vmatpush2.bf16.msra.mxu0 0
    %867 = vmatprep.subr.bf16.mxu0 0
    %868 = vmatpush2.bf16.msra.mxu0 0
    %869 = vmatprep.subr.bf16.mxu0 0
    %870 = vmatpush2.bf16.msra.mxu0 0
    %871 = vmatprep.subr.bf16.mxu0 0
    %872 = vmatpush2.bf16.msra.mxu0 0
    %873 = vmatprep.subr.bf16.mxu0 0
    %874 = vmatpush2.bf16.msra.mxu0 0
    %875 = vmatprep.mubr.bf16.mxu0 0
    %876 = vmatmul.mubr.bf16.gmra.mxu0 %v373
    %v877 = vpop.f32.mrf.mxu0
    %v878 = vadd.f32 %v451, %v877
    %v879 = vpop.f32.mrf.mxu0
    %v880 = vadd.f32 %v455, %v879
    %v881 = vpop.f32.mrf.mxu0
    %v882 = vadd.f32 %v451, %v881
    %v883 = vpop.f32.mrf.mxu0
    %v884 = vadd.f32 %v455, %v883
    %885 = vdwg.mxu0
    %886 = vmatprep.subr.bf16.mxu0 %v733
    %887 = vmatpush1.bf16.msra.mxu0 %v732
    %888 = vmatprep.subr.bf16.mxu0 %v725
    %889 = vmatpush1.bf16.msra.mxu0 %v724
    %890 = vmatprep.subr.bf16.mxu0 %v717
    %891 = vmatpush1.bf16.msra.mxu0 %v716
    %892 = vmatprep.subr.bf16.mxu0 %v709
    %893 = vmatpush1.bf16.msra.mxu0 %v708
    %894 = vmatprep.subr.bf16.mxu0 %v701
    %895 = vmatpush1.bf16.msra.mxu0 %v700
    %896 = vmatprep.subr.bf16.mxu0 %v693
    %897 = vmatpush1.bf16.msra.mxu0 %v692
    %898 = vmatprep.subr.bf16.mxu0 %v685
    %899 = vmatpush1.bf16.msra.mxu0 %v684
    %900 = vmatprep.subr.bf16.mxu0 %v677
    %901 = vmatpush1.bf16.msra.mxu0 %v676
    %902 = vmatprep.subr.bf16.mxu0 0
    %903 = vmatpush2.bf16.msra.mxu0 0
    %904 = vmatprep.subr.bf16.mxu0 0
    %905 = vmatpush2.bf16.msra.mxu0 0
    %906 = vmatprep.subr.bf16.mxu0 0
    %907 = vmatpush2.bf16.msra.mxu0 0
    %908 = vmatprep.subr.bf16.mxu0 0
    %909 = vmatpush2.bf16.msra.mxu0 0
    %910 = vmatprep.subr.bf16.mxu0 0
    %911 = vmatpush2.bf16.msra.mxu0 0
    %912 = vmatprep.subr.bf16.mxu0 0
    %913 = vmatpush2.bf16.msra.mxu0 0
    %914 = vmatprep.subr.bf16.mxu0 0
    %915 = vmatpush2.bf16.msra.mxu0 0
    %916 = vmatprep.subr.bf16.mxu0 0
    %917 = vmatpush2.bf16.msra.mxu0 0
    %918 = vmatprep.mubr.bf16.mxu0 0
    %919 = vmatmul.mubr.bf16.gmra.mxu0 %v373
    %v920 = vpop.f32.mrf.mxu0
    %v921 = vadd.f32 %v459, %v920
    %v922 = vpop.f32.mrf.mxu0
    %v923 = vadd.f32 %v463, %v922
    %v924 = vpop.f32.mrf.mxu0
    %v925 = vadd.f32 %v459, %v924
    %v926 = vpop.f32.mrf.mxu0
    %v927 = vadd.f32 %v463, %v926
    %928 = vdwg.mxu0
    %929 = vmatprep.subr.bf16.mxu0 %v735
    %930 = vmatpush1.bf16.msra.mxu0 %v734
    %931 = vmatprep.subr.bf16.mxu0 %v727
    %932 = vmatpush1.bf16.msra.mxu0 %v726
    %933 = vmatprep.subr.bf16.mxu0 %v719
    %934 = vmatpush1.bf16.msra.mxu0 %v718
    %935 = vmatprep.subr.bf16.mxu0 %v711
    %936 = vmatpush1.bf16.msra.mxu0 %v710
    %937 = vmatprep.subr.bf16.mxu0 %v703
    %938 = vmatpush1.bf16.msra.mxu0 %v702
    %939 = vmatprep.subr.bf16.mxu0 %v695
    %940 = vmatpush1.bf16.msra.mxu0 %v694
    %941 = vmatprep.subr.bf16.mxu0 %v687
    %942 = vmatpush1.bf16.msra.mxu0 %v686
    %943 = vmatprep.subr.bf16.mxu0 %v679
    %944 = vmatpush1.bf16.msra.mxu0 %v678
    %945 = vmatprep.subr.bf16.mxu0 0
    %946 = vmatpush2.bf16.msra.mxu0 0
    %947 = vmatprep.subr.bf16.mxu0 0
    %948 = vmatpush2.bf16.msra.mxu0 0
    %949 = vmatprep.subr.bf16.mxu0 0
    %950 = vmatpush2.bf16.msra.mxu0 0
    %951 = vmatprep.subr.bf16.mxu0 0
    %952 = vmatpush2.bf16.msra.mxu0 0
    %953 = vmatprep.subr.bf16.mxu0 0
    %954 = vmatpush2.bf16.msra.mxu0 0
    %955 = vmatprep.subr.bf16.mxu0 0
    %956 = vmatpush2.bf16.msra.mxu0 0
    %957 = vmatprep.subr.bf16.mxu0 0
    %958 = vmatpush2.bf16.msra.mxu0 0
    %959 = vmatprep.subr.bf16.mxu0 0
    %960 = vmatpush2.bf16.msra.mxu0 0
    %961 = vmatprep.mubr.bf16.mxu0 0
    %962 = vmatmul.mubr.bf16.gmra.mxu0 %v373
    %v963 = vpop.f32.mrf.mxu0
    %v964 = vadd.f32 %v467, %v963
    %v965 = vpop.f32.mrf.mxu0
    %v966 = vadd.f32 %v471, %v965
    %v967 = vpop.f32.mrf.mxu0
    %v968 = vadd.f32 %v467, %v967
    %v969 = vpop.f32.mrf.mxu0
    %v970 = vadd.f32 %v471, %v969
    %971 = vdwg.mxu0
    %v972 = vmul.f32 %v835, 0.1
    %v973 = vmul.f32 %v837, 0.1
    %v974 = vmul.f32 %v878, 0.1
    %v975 = vmul.f32 %v880, 0.1
    %v976 = vmul.f32 %v921, 0.1
    %v977 = vmul.f32 %v923, 0.1
    %v978 = vmul.f32 %v964, 0.1
    %v979 = vmul.f32 %v966, 0.1
    %v980 = vmul.f32 %v839, 0.1
    %v981 = vmul.f32 %v841, 0.1
    %v982 = vmul.f32 %v882, 0.1
    %v983 = vmul.f32 %v884, 0.1
    %v984 = vmul.f32 %v925, 0.1
    %v985 = vmul.f32 %v927, 0.1
    %v986 = vmul.f32 %v968, 0.1
    %v987 = vmul.f32 %v970, 0.1
    %v988 = vmax.f32 %v835, %v972
    %v989 = vmax.f32 %v837, %v973
    %v990 = vmax.f32 %v878, %v974
    %v991 = vmax.f32 %v880, %v975
    %v992 = vmax.f32 %v921, %v976
    %v993 = vmax.f32 %v923, %v977
    %v994 = vmax.f32 %v964, %v978
    %v995 = vmax.f32 %v966, %v979
    %v996 = vmax.f32 %v839, %v980
    %v997 = vmax.f32 %v841, %v981
    %v998 = vmax.f32 %v882, %v982
    %v999 = vmax.f32 %v884, %v983
    %v1000 = vmax.f32 %v925, %v984
    %v1001 = vmax.f32 %v927, %v985
    %v1002 = vmax.f32 %v968, %v986
    %v1003 = vmax.f32 %v970, %v987
    %v1004 = vpack.c.bf16 %v996, %v988
    %v1005 = vpack.c.bf16 %v997, %v989
    %v1006 = vpack.c.bf16 %v998, %v990
    %v1007 = vpack.c.bf16 %v999, %v991
    %v1008 = vpack.c.bf16 %v1000, %v992
    %v1009 = vpack.c.bf16 %v1001, %v993
    %v1010 = vpack.c.bf16 %v1002, %v994
    %v1011 = vpack.c.bf16 %v1003, %v995
    %v1012 = vld [vmem:[#allocation11] sm:$0xff]
    %v1013 = vld [vmem:[#allocation11 + $0x8] sm:$0xf]
    %v1014 = vld [vmem:[#allocation11 + $0xc] sm:$0xff]
    %v1015 = vld [vmem:[#allocation11 + $0x14] sm:$0xf]
    %v1016 = vld [vmem:[#allocation11 + $0x18] sm:$0xff]
    %v1017 = vld [vmem:[#allocation11 + $0x20] sm:$0xf]
    %v1018 = vld [vmem:[#allocation11 + $0x24] sm:$0xff]
    %v1019 = vld [vmem:[#allocation11 + $0x2c] sm:$0xf]
    %v1020 = vld [vmem:[#allocation11 + $0x30] sm:$0xff]
    %v1021 = vld [vmem:[#allocation11 + $0x38] sm:$0xf]
    %v1022 = vld [vmem:[#allocation11 + $0x3c] sm:$0xff]
    %v1023 = vld [vmem:[#allocation11 + $0x44] sm:$0xf]
    %v1024 = vld [vmem:[#allocation11 + $0x48] sm:$0xff]
    %v1025 = vld [vmem:[#allocation11 + $0x50] sm:$0xf]
    %v1026 = vld [vmem:[#allocation11 + $0x54] sm:$0xff]
    %v1027 = vld [vmem:[#allocation11 + $0x5c] sm:$0xf]
    %v1028 = vld [vmem:[#allocation11 + $0x60] sm:$0xff]
    %v1029 = vld [vmem:[#allocation11 + $0x68] sm:$0xf]
    %v1030 = vld [vmem:[#allocation11 + $0x6c] sm:$0xff]
    %v1031 = vld [vmem:[#allocation11 + $0x74] sm:$0xf]
    %v1032 = vld [vmem:[#allocation11 + $0x78] sm:$0xff]
    %v1033 = vld [vmem:[#allocation11 + $0x80] sm:$0xf]
    %v1034 = vld [vmem:[#allocation11 + $0x84] sm:$0xff]
    %v1035 = vld [vmem:[#allocation11 + $0x8c] sm:$0xf]
    %v1036 = vld [vmem:[#allocation11 + $0x90] sm:$0xff]
    %v1037 = vld [vmem:[#allocation11 + $0x98] sm:$0xf]
    %v1038 = vld [vmem:[#allocation11 + $0x9c] sm:$0xff]
    %v1039 = vld [vmem:[#allocation11 + $0xa4] sm:$0xf]
    %v1040 = vld [vmem:[#allocation11 + $0xa8] sm:$0xff]
    %v1041 = vld [vmem:[#allocation11 + $0xb0] sm:$0xf]
    %v1042 = vld [vmem:[#allocation11 + $0xb4] sm:$0xff]
    %v1043 = vld [vmem:[#allocation11 + $0xbc] sm:$0xf]
    %v1044 = vld [vmem:[#allocation11 + $0xc0] sm:$0xff]
    %v1045 = vld [vmem:[#allocation11 + $0xc8] sm:$0xf]
    %v1046 = vld [vmem:[#allocation11 + $0xcc] sm:$0xff]
    %v1047 = vld [vmem:[#allocation11 + $0xd4] sm:$0xf]
    %v1048 = vld [vmem:[#allocation11 + $0xd8] sm:$0xff]
    %v1049 = vld [vmem:[#allocation11 + $0xe0] sm:$0xf]
    %v1050 = vld [vmem:[#allocation11 + $0xe4] sm:$0xff]
    %v1051 = vld [vmem:[#allocation11 + $0xec] sm:$0xf]
    %v1052 = vld [vmem:[#allocation11 + $0xf0] sm:$0xff]
    %v1053 = vld [vmem:[#allocation11 + $0xf8] sm:$0xf]
    %v1054 = vld [vmem:[#allocation11 + $0xfc] sm:$0xff]
    %v1055 = vld [vmem:[#allocation11 + $0x104] sm:$0xf]
    %v1056 = vld [vmem:[#allocation11 + $0x108] sm:$0xff]
    %v1057 = vld [vmem:[#allocation11 + $0x110] sm:$0xf]
    %v1058 = vld [vmem:[#allocation11 + $0x114] sm:$0xff]
    %v1059 = vld [vmem:[#allocation11 + $0x11c] sm:$0xf]
    %v1060 = vld [vmem:[#allocation11 + $0x120] sm:$0xff]
    %v1061 = vld [vmem:[#allocation11 + $0x128] sm:$0xf]
    %v1062 = vld [vmem:[#allocation11 + $0x12c] sm:$0xff]
    %v1063 = vld [vmem:[#allocation11 + $0x134] sm:$0xf]
    %v1064 = vld [vmem:[#allocation11 + $0x138] sm:$0xff]
    %v1065 = vld [vmem:[#allocation11 + $0x140] sm:$0xf]
    %v1066 = vld [vmem:[#allocation11 + $0x144] sm:$0xff]
    %v1067 = vld [vmem:[#allocation11 + $0x14c] sm:$0xf]
    %v1068 = vld [vmem:[#allocation11 + $0x150] sm:$0xff]
    %v1069 = vld [vmem:[#allocation11 + $0x158] sm:$0xf]
    %v1070 = vld [vmem:[#allocation11 + $0x15c] sm:$0xff]
    %v1071 = vld [vmem:[#allocation11 + $0x164] sm:$0xf]
    %v1072 = vld [vmem:[#allocation11 + $0x168] sm:$0xff]
    %v1073 = vld [vmem:[#allocation11 + $0x170] sm:$0xf]
    %v1074 = vld [vmem:[#allocation11 + $0x174] sm:$0xff]
    %v1075 = vld [vmem:[#allocation11 + $0x17c] sm:$0xf]
    %v1076 = vld [vmem:[#allocation11 + $0x180] sm:$0xff]
    %v1077 = vld [vmem:[#allocation11 + $0x188] sm:$0xf]
    %v1078 = vld [vmem:[#allocation11 + $0x18c] sm:$0xff]
    %v1079 = vld [vmem:[#allocation11 + $0x194] sm:$0xf]
    %v1080 = vld [vmem:[#allocation11 + $0x198] sm:$0xff]
    %v1081 = vld [vmem:[#allocation11 + $0x1a0] sm:$0xf]
    %v1082 = vld [vmem:[#allocation11 + $0x1a4] sm:$0xff]
    %v1083 = vld [vmem:[#allocation11 + $0x1ac] sm:$0xf]
    %v1084 = vld [vmem:[#allocation11 + $0x1b0] sm:$0xff]
    %v1085 = vld [vmem:[#allocation11 + $0x1b8] sm:$0xf]
    %v1086 = vld [vmem:[#allocation11 + $0x1bc] sm:$0xff]
    %v1087 = vld [vmem:[#allocation11 + $0x1c4] sm:$0xf]
    %v1088 = vld [vmem:[#allocation11 + $0x1c8] sm:$0xff]
    %v1089 = vld [vmem:[#allocation11 + $0x1d0] sm:$0xf]
    %v1090 = vld [vmem:[#allocation11 + $0x1d4] sm:$0xff]
    %v1091 = vld [vmem:[#allocation11 + $0x1dc] sm:$0xf]
    %v1092 = vld [vmem:[#allocation11 + $0x1e0] sm:$0xff]
    %v1093 = vld [vmem:[#allocation11 + $0x1e8] sm:$0xf]
    %v1094 = vld [vmem:[#allocation11 + $0x1ec] sm:$0xff]
    %v1095 = vld [vmem:[#allocation11 + $0x1f4] sm:$0xf]
    %v1096 = vld [vmem:[#allocation11 + $0x1f8] sm:$0xff]
    %v1097 = vld [vmem:[#allocation11 + $0x200] sm:$0xf]
    %v1098 = vld [vmem:[#allocation11 + $0x204] sm:$0xff]
    %v1099 = vld [vmem:[#allocation11 + $0x20c] sm:$0xf]
    %v1100 = vld [vmem:[#allocation11 + $0x210] sm:$0xff]
    %v1101 = vld [vmem:[#allocation11 + $0x218] sm:$0xf]
    %v1102 = vld [vmem:[#allocation11 + $0x21c] sm:$0xff]
    %v1103 = vld [vmem:[#allocation11 + $0x224] sm:$0xf]
    %v1104 = vld [vmem:[#allocation11 + $0x228] sm:$0xff]
    %v1105 = vld [vmem:[#allocation11 + $0x230] sm:$0xf]
    %v1106 = vld [vmem:[#allocation11 + $0x234] sm:$0xff]
    %v1107 = vld [vmem:[#allocation11 + $0x23c] sm:$0xf]
    %v1108 = vld [vmem:[#allocation11 + $0x240] sm:$0xff]
    %v1109 = vld [vmem:[#allocation11 + $0x248] sm:$0xf]
    %v1110 = vld [vmem:[#allocation11 + $0x24c] sm:$0xff]
    %v1111 = vld [vmem:[#allocation11 + $0x254] sm:$0xf]
    %v1112 = vld [vmem:[#allocation11 + $0x258] sm:$0xff]
    %v1113 = vld [vmem:[#allocation11 + $0x260] sm:$0xf]
    %v1114 = vld [vmem:[#allocation11 + $0x264] sm:$0xff]
    %v1115 = vld [vmem:[#allocation11 + $0x26c] sm:$0xf]
    %v1116 = vld [vmem:[#allocation11 + $0x270] sm:$0xff]
    %v1117 = vld [vmem:[#allocation11 + $0x278] sm:$0xf]
    %v1118 = vld [vmem:[#allocation11 + $0x27c] sm:$0xff]
    %v1119 = vld [vmem:[#allocation11 + $0x284] sm:$0xf]
    %v1120 = vld [vmem:[#allocation11 + $0x288] sm:$0xff]
    %v1121 = vld [vmem:[#allocation11 + $0x290] sm:$0xf]
    %v1122 = vld [vmem:[#allocation11 + $0x294] sm:$0xff]
    %v1123 = vld [vmem:[#allocation11 + $0x29c] sm:$0xf]
    %v1124 = vld [vmem:[#allocation11 + $0x2a0] sm:$0xff]
    %v1125 = vld [vmem:[#allocation11 + $0x2a8] sm:$0xf]
    %v1126 = vld [vmem:[#allocation11 + $0x2ac] sm:$0xff]
    %v1127 = vld [vmem:[#allocation11 + $0x2b4] sm:$0xf]
    %v1128 = vld [vmem:[#allocation11 + $0x2b8] sm:$0xff]
    %v1129 = vld [vmem:[#allocation11 + $0x2c0] sm:$0xf]
    %v1130 = vld [vmem:[#allocation11 + $0x2c4] sm:$0xff]
    %v1131 = vld [vmem:[#allocation11 + $0x2cc] sm:$0xf]
    %v1132 = vld [vmem:[#allocation11 + $0x2d0] sm:$0xff]
    %v1133 = vld [vmem:[#allocation11 + $0x2d8] sm:$0xf]
    %v1134 = vld [vmem:[#allocation11 + $0x2dc] sm:$0xff]
    %v1135 = vld [vmem:[#allocation11 + $0x2e4] sm:$0xf]
    %v1136 = vld [vmem:[#allocation11 + $0x2e8] sm:$0xff]
    %v1137 = vld [vmem:[#allocation11 + $0x2f0] sm:$0xf]
    %v1138 = vld [vmem:[#allocation11 + $0x2f4] sm:$0xff]
    %v1139 = vld [vmem:[#allocation11 + $0x2fc] sm:$0xf]
    %v1140 = vld [vmem:[#allocation11 + $0x300] sm:$0xff]
    %v1141 = vld [vmem:[#allocation11 + $0x308] sm:$0xf]
    %v1142 = vld [vmem:[#allocation11 + $0x30c] sm:$0xff]
    %v1143 = vld [vmem:[#allocation11 + $0x314] sm:$0xf]
    %v1144 = vld [vmem:[#allocation11 + $0x318] sm:$0xff]
    %v1145 = vld [vmem:[#allocation11 + $0x320] sm:$0xf]
    %v1146 = vld [vmem:[#allocation11 + $0x324] sm:$0xff]
    %v1147 = vld [vmem:[#allocation11 + $0x32c] sm:$0xf]
    %v1148 = vld [vmem:[#allocation11 + $0x330] sm:$0xff]
    %v1149 = vld [vmem:[#allocation11 + $0x338] sm:$0xf]
    %v1150 = vld [vmem:[#allocation11 + $0x33c] sm:$0xff]
    %v1151 = vld [vmem:[#allocation11 + $0x344] sm:$0xf]
    %v1152 = vld [vmem:[#allocation11 + $0x348] sm:$0xff]
    %v1153 = vld [vmem:[#allocation11 + $0x350] sm:$0xf]
    %v1154 = vld [vmem:[#allocation11 + $0x354] sm:$0xff]
    %v1155 = vld [vmem:[#allocation11 + $0x35c] sm:$0xf]
    %v1156 = vld [vmem:[#allocation11 + $0x360] sm:$0xff]
    %v1157 = vld [vmem:[#allocation11 + $0x368] sm:$0xf]
    %v1158 = vld [vmem:[#allocation11 + $0x36c] sm:$0xff]
    %v1159 = vld [vmem:[#allocation11 + $0x374] sm:$0xf]
    %v1160 = vld [vmem:[#allocation11 + $0x378] sm:$0xff]
    %v1161 = vld [vmem:[#allocation11 + $0x380] sm:$0xf]
    %v1162 = vld [vmem:[#allocation11 + $0x384] sm:$0xff]
    %v1163 = vld [vmem:[#allocation11 + $0x38c] sm:$0xf]
    %v1164 = vld [vmem:[#allocation11 + $0x390] sm:$0xff]
    %v1165 = vld [vmem:[#allocation11 + $0x398] sm:$0xf]
    %v1166 = vld [vmem:[#allocation11 + $0x39c] sm:$0xff]
    %v1167 = vld [vmem:[#allocation11 + $0x3a4] sm:$0xf]
    %v1168 = vld [vmem:[#allocation11 + $0x3a8] sm:$0xff]
    %v1169 = vld [vmem:[#allocation11 + $0x3b0] sm:$0xf]
    %v1170 = vld [vmem:[#allocation11 + $0x3b4] sm:$0xff]
    %v1171 = vld [vmem:[#allocation11 + $0x3bc] sm:$0xf]
    %v1172 = vld [vmem:[#allocation11 + $0x3c0] sm:$0xff]
    %v1173 = vld [vmem:[#allocation11 + $0x3c8] sm:$0xf]
    %v1174 = vld [vmem:[#allocation11 + $0x3cc] sm:$0xff]
    %v1175 = vld [vmem:[#allocation11 + $0x3d4] sm:$0xf]
    %v1176 = vld [vmem:[#allocation11 + $0x3d8] sm:$0xff]
    %v1177 = vld [vmem:[#allocation11 + $0x3e0] sm:$0xf]
    %v1178 = vld [vmem:[#allocation11 + $0x3e4] sm:$0xff]
    %v1179 = vld [vmem:[#allocation11 + $0x3ec] sm:$0xf]
    %v1180 = vld [vmem:[#allocation11 + $0x3f0] sm:$0xff]
    %v1181 = vld [vmem:[#allocation11 + $0x3f8] sm:$0xf]
    %v1182 = vld [vmem:[#allocation11 + $0x3fc] sm:$0xff]
    %v1183 = vld [vmem:[#allocation11 + $0x404] sm:$0xf]
    %v1184 = vld [vmem:[#allocation11 + $0x408] sm:$0xff]
    %v1185 = vld [vmem:[#allocation11 + $0x410] sm:$0xf]
    %v1186 = vld [vmem:[#allocation11 + $0x414] sm:$0xff]
    %v1187 = vld [vmem:[#allocation11 + $0x41c] sm:$0xf]
    %v1188 = vld [vmem:[#allocation11 + $0x420] sm:$0xff]
    %v1189 = vld [vmem:[#allocation11 + $0x428] sm:$0xf]
    %v1190 = vld [vmem:[#allocation11 + $0x42c] sm:$0xff]
    %v1191 = vld [vmem:[#allocation11 + $0x434] sm:$0xf]
    %v1192 = vld [vmem:[#allocation11 + $0x438] sm:$0xff]
    %v1193 = vld [vmem:[#allocation11 + $0x440] sm:$0xf]
    %v1194 = vld [vmem:[#allocation11 + $0x444] sm:$0xff]
    %v1195 = vld [vmem:[#allocation11 + $0x44c] sm:$0xf]
    %v1196 = vld [vmem:[#allocation11 + $0x450] sm:$0xff]
    %v1197 = vld [vmem:[#allocation11 + $0x458] sm:$0xf]
    %v1198 = vld [vmem:[#allocation11 + $0x45c] sm:$0xff]
    %v1199 = vld [vmem:[#allocation11 + $0x464] sm:$0xf]
    %v1200 = vld [vmem:[#allocation11 + $0x468] sm:$0xff]
    %v1201 = vld [vmem:[#allocation11 + $0x470] sm:$0xf]
    %v1202 = vld [vmem:[#allocation11 + $0x474] sm:$0xff]
    %v1203 = vld [vmem:[#allocation11 + $0x47c] sm:$0xf]
    %v1204 = vld [vmem:[#allocation11 + $0x480] sm:$0xff]
    %v1205 = vld [vmem:[#allocation11 + $0x488] sm:$0xf]
    %v1206 = vld [vmem:[#allocation11 + $0x48c] sm:$0xff]
    %v1207 = vld [vmem:[#allocation11 + $0x494] sm:$0xf]
    %v1208 = vld [vmem:[#allocation11 + $0x498] sm:$0xff]
    %v1209 = vld [vmem:[#allocation11 + $0x4a0] sm:$0xf]
    %v1210 = vld [vmem:[#allocation11 + $0x4a4] sm:$0xff]
    %v1211 = vld [vmem:[#allocation11 + $0x4ac] sm:$0xf]
    %v1212 = vld [vmem:[#allocation11 + $0x4b0] sm:$0xff]
    %v1213 = vld [vmem:[#allocation11 + $0x4b8] sm:$0xf]
    %v1214 = vld [vmem:[#allocation11 + $0x4bc] sm:$0xff]
    %v1215 = vld [vmem:[#allocation11 + $0x4c4] sm:$0xf]
    %v1216 = vld [vmem:[#allocation11 + $0x4c8] sm:$0xff]
    %v1217 = vld [vmem:[#allocation11 + $0x4d0] sm:$0xf]
    %v1218 = vld [vmem:[#allocation11 + $0x4d4] sm:$0xff]
    %v1219 = vld [vmem:[#allocation11 + $0x4dc] sm:$0xf]
    %v1220 = vld [vmem:[#allocation11 + $0x4e0] sm:$0xff]
    %v1221 = vld [vmem:[#allocation11 + $0x4e8] sm:$0xf]
    %v1222 = vld [vmem:[#allocation11 + $0x4ec] sm:$0xff]
    %v1223 = vld [vmem:[#allocation11 + $0x4f4] sm:$0xf]
    %v1224 = vld [vmem:[#allocation11 + $0x4f8] sm:$0xff]
    %v1225 = vld [vmem:[#allocation11 + $0x500] sm:$0xf]
    %v1226 = vld [vmem:[#allocation11 + $0x504] sm:$0xff]
    %v1227 = vld [vmem:[#allocation11 + $0x50c] sm:$0xf]
    %v1228 = vld [vmem:[#allocation11 + $0x510] sm:$0xff]
    %v1229 = vld [vmem:[#allocation11 + $0x518] sm:$0xf]
    %v1230 = vld [vmem:[#allocation11 + $0x51c] sm:$0xff]
    %v1231 = vld [vmem:[#allocation11 + $0x524] sm:$0xf]
    %v1232 = vld [vmem:[#allocation11 + $0x528] sm:$0xff]
    %v1233 = vld [vmem:[#allocation11 + $0x530] sm:$0xf]
    %v1234 = vld [vmem:[#allocation11 + $0x534] sm:$0xff]
    %v1235 = vld [vmem:[#allocation11 + $0x53c] sm:$0xf]
    %v1236 = vld [vmem:[#allocation11 + $0x540] sm:$0xff]
    %v1237 = vld [vmem:[#allocation11 + $0x548] sm:$0xf]
    %v1238 = vld [vmem:[#allocation11 + $0x54c] sm:$0xff]
    %v1239 = vld [vmem:[#allocation11 + $0x554] sm:$0xf]
    %v1240 = vld [vmem:[#allocation11 + $0x558] sm:$0xff]
    %v1241 = vld [vmem:[#allocation11 + $0x560] sm:$0xf]
    %v1242 = vld [vmem:[#allocation11 + $0x564] sm:$0xff]
    %v1243 = vld [vmem:[#allocation11 + $0x56c] sm:$0xf]
    %v1244 = vld [vmem:[#allocation11 + $0x570] sm:$0xff]
    %v1245 = vld [vmem:[#allocation11 + $0x578] sm:$0xf]
    %v1246 = vld [vmem:[#allocation11 + $0x57c] sm:$0xff]
    %v1247 = vld [vmem:[#allocation11 + $0x584] sm:$0xf]
    %v1248 = vld [vmem:[#allocation11 + $0x588] sm:$0xff]
    %v1249 = vld [vmem:[#allocation11 + $0x590] sm:$0xf]
    %v1250 = vld [vmem:[#allocation11 + $0x594] sm:$0xff]
    %v1251 = vld [vmem:[#allocation11 + $0x59c] sm:$0xf]
    %v1252 = vld [vmem:[#allocation11 + $0x5a0] sm:$0xff]
    %v1253 = vld [vmem:[#allocation11 + $0x5a8] sm:$0xf]
    %v1254 = vld [vmem:[#allocation11 + $0x5ac] sm:$0xff]
    %v1255 = vld [vmem:[#allocation11 + $0x5b4] sm:$0xf]
    %v1256 = vld [vmem:[#allocation11 + $0x5b8] sm:$0xff]
    %v1257 = vld [vmem:[#allocation11 + $0x5c0] sm:$0xf]
    %v1258 = vld [vmem:[#allocation11 + $0x5c4] sm:$0xff]
    %v1259 = vld [vmem:[#allocation11 + $0x5cc] sm:$0xf]
    %v1260 = vld [vmem:[#allocation11 + $0x5d0] sm:$0xff]
    %v1261 = vld [vmem:[#allocation11 + $0x5d8] sm:$0xf]
    %v1262 = vld [vmem:[#allocation11 + $0x5dc] sm:$0xff]
    %v1263 = vld [vmem:[#allocation11 + $0x5e4] sm:$0xf]
    %v1264 = vld [vmem:[#allocation11 + $0x5e8] sm:$0xff]
    %v1265 = vld [vmem:[#allocation11 + $0x5f0] sm:$0xf]
    %v1266 = vld [vmem:[#allocation11 + $0x5f4] sm:$0xff]
    %v1267 = vld [vmem:[#allocation11 + $0x5fc] sm:$0xf]
    %v1268 = vld [vmem:[%s8] sm:$0x7]
    %v1270 = vlaneseq
    %v1271 = vshrl.u32 %v1270, 7
    %v1272 = vsub.s32 0, %v1271
    %v1273 = vrot.slane %v1268, %v1272
    %v1274 = vlaneseq
    %v1275 = vshrl.u32 %v1274, 7
    %v1276 = vsub.s32 1, %v1275
    %v1277 = vrot.slane %v1268, %v1276
    %v1278 = vlaneseq
    %v1279 = vshrl.u32 %v1278, 7
    %v1280 = vsub.s32 2, %v1279
    %v1281 = vrot.slane %v1268, %v1280
    %v1541 = vunpack.c.l.b16 %v1012
    %v1542 = vunpack.c.h.b16 %v1012
    %v1543 = vunpack.c.l.b16 %v1013
    %v1544 = vunpack.c.l.b16 %v1014
    %v1545 = vunpack.c.h.b16 %v1014
    %v1546 = vunpack.c.l.b16 %v1015
    %v1547 = vunpack.c.l.b16 %v1016
    %v1548 = vunpack.c.h.b16 %v1016
    %v1549 = vunpack.c.l.b16 %v1017
    %v1550 = vunpack.c.l.b16 %v1018
    %v1551 = vunpack.c.h.b16 %v1018
    %v1552 = vunpack.c.l.b16 %v1019
    %v1553 = vunpack.c.l.b16 %v1020
    %v1554 = vunpack.c.h.b16 %v1020
    %v1555 = vunpack.c.l.b16 %v1021
    %v1556 = vunpack.c.l.b16 %v1022
    %v1557 = vunpack.c.h.b16 %v1022
    %v1558 = vunpack.c.l.b16 %v1023
    %v1559 = vunpack.c.l.b16 %v1024
    %v1560 = vunpack.c.h.b16 %v1024
    %v1561 = vunpack.c.l.b16 %v1025
    %v1562 = vunpack.c.l.b16 %v1026
    %v1563 = vunpack.c.h.b16 %v1026
    %v1564 = vunpack.c.l.b16 %v1027
    %v1565 = vunpack.c.l.b16 %v1028
    %v1566 = vunpack.c.h.b16 %v1028
    %v1567 = vunpack.c.l.b16 %v1029
    %v1568 = vunpack.c.l.b16 %v1030
    %v1569 = vunpack.c.h.b16 %v1030
    %v1570 = vunpack.c.l.b16 %v1031
    %v1571 = vunpack.c.l.b16 %v1032
    %v1572 = vunpack.c.h.b16 %v1032
    %v1573 = vunpack.c.l.b16 %v1033
    %v1574 = vunpack.c.l.b16 %v1034
    %v1575 = vunpack.c.h.b16 %v1034
    %v1576 = vunpack.c.l.b16 %v1035
    %v1577 = vunpack.c.l.b16 %v1036
    %v1578 = vunpack.c.h.b16 %v1036
    %v1579 = vunpack.c.l.b16 %v1037
    %v1580 = vunpack.c.l.b16 %v1038
    %v1581 = vunpack.c.h.b16 %v1038
    %v1582 = vunpack.c.l.b16 %v1039
    %v1583 = vunpack.c.l.b16 %v1040
    %v1584 = vunpack.c.h.b16 %v1040
    %v1585 = vunpack.c.l.b16 %v1041
    %v1586 = vunpack.c.l.b16 %v1042
    %v1587 = vunpack.c.h.b16 %v1042
    %v1588 = vunpack.c.l.b16 %v1043
    %v1589 = vunpack.c.l.b16 %v1044
    %v1590 = vunpack.c.h.b16 %v1044
    %v1591 = vunpack.c.l.b16 %v1045
    %v1592 = vunpack.c.l.b16 %v1046
    %v1593 = vunpack.c.h.b16 %v1046
    %v1594 = vunpack.c.l.b16 %v1047
    %v1595 = vunpack.c.l.b16 %v1048
    %v1596 = vunpack.c.h.b16 %v1048
    %v1597 = vunpack.c.l.b16 %v1049
    %v1598 = vunpack.c.l.b16 %v1050
    %v1599 = vunpack.c.h.b16 %v1050
    %v1600 = vunpack.c.l.b16 %v1051
    %v1601 = vunpack.c.l.b16 %v1052
    %v1602 = vunpack.c.h.b16 %v1052
    %v1603 = vunpack.c.l.b16 %v1053
    %v1604 = vunpack.c.l.b16 %v1054
    %v1605 = vunpack.c.h.b16 %v1054
    %v1606 = vunpack.c.l.b16 %v1055
    %v1607 = vunpack.c.l.b16 %v1056
    %v1608 = vunpack.c.h.b16 %v1056
    %v1609 = vunpack.c.l.b16 %v1057
    %v1610 = vunpack.c.l.b16 %v1058
    %v1611 = vunpack.c.h.b16 %v1058
    %v1612 = vunpack.c.l.b16 %v1059
    %v1613 = vunpack.c.l.b16 %v1060
    %v1614 = vunpack.c.h.b16 %v1060
    %v1615 = vunpack.c.l.b16 %v1061
    %v1616 = vunpack.c.l.b16 %v1062
    %v1617 = vunpack.c.h.b16 %v1062
    %v1618 = vunpack.c.l.b16 %v1063
    %v1619 = vunpack.c.l.b16 %v1064
    %v1620 = vunpack.c.h.b16 %v1064
    %v1621 = vunpack.c.l.b16 %v1065
    %v1622 = vunpack.c.l.b16 %v1066
    %v1623 = vunpack.c.h.b16 %v1066
    %v1624 = vunpack.c.l.b16 %v1067
    %v1625 = vunpack.c.l.b16 %v1068
    %v1626 = vunpack.c.h.b16 %v1068
    %v1627 = vunpack.c.l.b16 %v1069
    %v1628 = vunpack.c.l.b16 %v1070
    %v1629 = vunpack.c.h.b16 %v1070
    %v1630 = vunpack.c.l.b16 %v1071
    %v1631 = vunpack.c.l.b16 %v1072
    %v1632 = vunpack.c.h.b16 %v1072
    %v1633 = vunpack.c.l.b16 %v1073
    %v1634 = vunpack.c.l.b16 %v1074
    %v1635 = vunpack.c.h.b16 %v1074
    %v1636 = vunpack.c.l.b16 %v1075
    %v1637 = vunpack.c.l.b16 %v1076
    %v1638 = vunpack.c.h.b16 %v1076
    %v1639 = vunpack.c.l.b16 %v1077
    %v1640 = vunpack.c.l.b16 %v1078
    %v1641 = vunpack.c.h.b16 %v1078
    %v1642 = vunpack.c.l.b16 %v1079
    %v1643 = vunpack.c.l.b16 %v1080
    %v1644 = vunpack.c.h.b16 %v1080
    %v1645 = vunpack.c.l.b16 %v1081
    %v1646 = vunpack.c.l.b16 %v1082
    %v1647 = vunpack.c.h.b16 %v1082
    %v1648 = vunpack.c.l.b16 %v1083
    %v1649 = vunpack.c.l.b16 %v1084
    %v1650 = vunpack.c.h.b16 %v1084
    %v1651 = vunpack.c.l.b16 %v1085
    %v1652 = vunpack.c.l.b16 %v1086
    %v1653 = vunpack.c.h.b16 %v1086
    %v1654 = vunpack.c.l.b16 %v1087
    %v1655 = vunpack.c.l.b16 %v1088
    %v1656 = vunpack.c.h.b16 %v1088
    %v1657 = vunpack.c.l.b16 %v1089
    %v1658 = vunpack.c.l.b16 %v1090
    %v1659 = vunpack.c.h.b16 %v1090
    %v1660 = vunpack.c.l.b16 %v1091
    %v1661 = vunpack.c.l.b16 %v1092
    %v1662 = vunpack.c.h.b16 %v1092
    %v1663 = vunpack.c.l.b16 %v1093
    %v1664 = vunpack.c.l.b16 %v1094
    %v1665 = vunpack.c.h.b16 %v1094
    %v1666 = vunpack.c.l.b16 %v1095
    %v1667 = vunpack.c.l.b16 %v1096
    %v1668 = vunpack.c.h.b16 %v1096
    %v1669 = vunpack.c.l.b16 %v1097
    %v1670 = vunpack.c.l.b16 %v1098
    %v1671 = vunpack.c.h.b16 %v1098
    %v1672 = vunpack.c.l.b16 %v1099
    %v1673 = vunpack.c.l.b16 %v1100
    %v1674 = vunpack.c.h.b16 %v1100
    %v1675 = vunpack.c.l.b16 %v1101
    %v1676 = vunpack.c.l.b16 %v1102
    %v1677 = vunpack.c.h.b16 %v1102
    %v1678 = vunpack.c.l.b16 %v1103
    %v1679 = vunpack.c.l.b16 %v1104
    %v1680 = vunpack.c.h.b16 %v1104
    %v1681 = vunpack.c.l.b16 %v1105
    %v1682 = vunpack.c.l.b16 %v1106
    %v1683 = vunpack.c.h.b16 %v1106
    %v1684 = vunpack.c.l.b16 %v1107
    %v1685 = vunpack.c.l.b16 %v1108
    %v1686 = vunpack.c.h.b16 %v1108
    %v1687 = vunpack.c.l.b16 %v1109
    %v1688 = vunpack.c.l.b16 %v1110
    %v1689 = vunpack.c.h.b16 %v1110
    %v1690 = vunpack.c.l.b16 %v1111
    %v1691 = vunpack.c.l.b16 %v1112
    %v1692 = vunpack.c.h.b16 %v1112
    %v1693 = vunpack.c.l.b16 %v1113
    %v1694 = vunpack.c.l.b16 %v1114
    %v1695 = vunpack.c.h.b16 %v1114
    %v1696 = vunpack.c.l.b16 %v1115
    %v1697 = vunpack.c.l.b16 %v1116
    %v1698 = vunpack.c.h.b16 %v1116
    %v1699 = vunpack.c.l.b16 %v1117
    %v1700 = vunpack.c.l.b16 %v1118
    %v1701 = vunpack.c.h.b16 %v1118
    %v1702 = vunpack.c.l.b16 %v1119
    %v1703 = vunpack.c.l.b16 %v1120
    %v1704 = vunpack.c.h.b16 %v1120
    %v1705 = vunpack.c.l.b16 %v1121
    %v1706 = vunpack.c.l.b16 %v1122
    %v1707 = vunpack.c.h.b16 %v1122
    %v1708 = vunpack.c.l.b16 %v1123
    %v1709 = vunpack.c.l.b16 %v1124
    %v1710 = vunpack.c.h.b16 %v1124
    %v1711 = vunpack.c.l.b16 %v1125
    %v1712 = vunpack.c.l.b16 %v1126
    %v1713 = vunpack.c.h.b16 %v1126
    %v1714 = vunpack.c.l.b16 %v1127
    %v1715 = vunpack.c.l.b16 %v1128
    %v1716 = vunpack.c.h.b16 %v1128
    %v1717 = vunpack.c.l.b16 %v1129
    %v1718 = vunpack.c.l.b16 %v1130
    %v1719 = vunpack.c.h.b16 %v1130
    %v1720 = vunpack.c.l.b16 %v1131
    %v1721 = vunpack.c.l.b16 %v1132
    %v1722 = vunpack.c.h.b16 %v1132
    %v1723 = vunpack.c.l.b16 %v1133
    %v1724 = vunpack.c.l.b16 %v1134
    %v1725 = vunpack.c.h.b16 %v1134
    %v1726 = vunpack.c.l.b16 %v1135
    %v1727 = vunpack.c.l.b16 %v1136
    %v1728 = vunpack.c.h.b16 %v1136
    %v1729 = vunpack.c.l.b16 %v1137
    %v1730 = vunpack.c.l.b16 %v1138
    %v1731 = vunpack.c.h.b16 %v1138
    %v1732 = vunpack.c.l.b16 %v1139
    %v1733 = vunpack.c.l.b16 %v1140
    %v1734 = vunpack.c.h.b16 %v1140
    %v1735 = vunpack.c.l.b16 %v1141
    %v1736 = vunpack.c.l.b16 %v1142
    %v1737 = vunpack.c.h.b16 %v1142
    %v1738 = vunpack.c.l.b16 %v1143
    %v1739 = vunpack.c.l.b16 %v1144
    %v1740 = vunpack.c.h.b16 %v1144
    %v1741 = vunpack.c.l.b16 %v1145
    %v1742 = vunpack.c.l.b16 %v1146
    %v1743 = vunpack.c.h.b16 %v1146
    %v1744 = vunpack.c.l.b16 %v1147
    %v1745 = vunpack.c.l.b16 %v1148
    %v1746 = vunpack.c.h.b16 %v1148
    %v1747 = vunpack.c.l.b16 %v1149
    %v1748 = vunpack.c.l.b16 %v1150
    %v1749 = vunpack.c.h.b16 %v1150
    %v1750 = vunpack.c.l.b16 %v1151
    %v1751 = vunpack.c.l.b16 %v1152
    %v1752 = vunpack.c.h.b16 %v1152
    %v1753 = vunpack.c.l.b16 %v1153
    %v1754 = vunpack.c.l.b16 %v1154
    %v1755 = vunpack.c.h.b16 %v1154
    %v1756 = vunpack.c.l.b16 %v1155
    %v1757 = vunpack.c.l.b16 %v1156
    %v1758 = vunpack.c.h.b16 %v1156
    %v1759 = vunpack.c.l.b16 %v1157
    %v1760 = vunpack.c.l.b16 %v1158
    %v1761 = vunpack.c.h.b16 %v1158
    %v1762 = vunpack.c.l.b16 %v1159
    %v1763 = vunpack.c.l.b16 %v1160
    %v1764 = vunpack.c.h.b16 %v1160
    %v1765 = vunpack.c.l.b16 %v1161
    %v1766 = vunpack.c.l.b16 %v1162
    %v1767 = vunpack.c.h.b16 %v1162
    %v1768 = vunpack.c.l.b16 %v1163
    %v1769 = vunpack.c.l.b16 %v1164
    %v1770 = vunpack.c.h.b16 %v1164
    %v1771 = vunpack.c.l.b16 %v1165
    %v1772 = vunpack.c.l.b16 %v1166
    %v1773 = vunpack.c.h.b16 %v1166
    %v1774 = vunpack.c.l.b16 %v1167
    %v1775 = vunpack.c.l.b16 %v1168
    %v1776 = vunpack.c.h.b16 %v1168
    %v1777 = vunpack.c.l.b16 %v1169
    %v1778 = vunpack.c.l.b16 %v1170
    %v1779 = vunpack.c.h.b16 %v1170
    %v1780 = vunpack.c.l.b16 %v1171
    %v1781 = vunpack.c.l.b16 %v1172
    %v1782 = vunpack.c.h.b16 %v1172
    %v1783 = vunpack.c.l.b16 %v1173
    %v1784 = vunpack.c.l.b16 %v1174
    %v1785 = vunpack.c.h.b16 %v1174
    %v1786 = vunpack.c.l.b16 %v1175
    %v1787 = vunpack.c.l.b16 %v1176
    %v1788 = vunpack.c.h.b16 %v1176
    %v1789 = vunpack.c.l.b16 %v1177
    %v1790 = vunpack.c.l.b16 %v1178
    %v1791 = vunpack.c.h.b16 %v1178
    %v1792 = vunpack.c.l.b16 %v1179
    %v1793 = vunpack.c.l.b16 %v1180
    %v1794 = vunpack.c.h.b16 %v1180
    %v1795 = vunpack.c.l.b16 %v1181
    %v1796 = vunpack.c.l.b16 %v1182
    %v1797 = vunpack.c.h.b16 %v1182
    %v1798 = vunpack.c.l.b16 %v1183
    %v1799 = vunpack.c.l.b16 %v1184
    %v1800 = vunpack.c.h.b16 %v1184
    %v1801 = vunpack.c.l.b16 %v1185
    %v1802 = vunpack.c.l.b16 %v1186
    %v1803 = vunpack.c.h.b16 %v1186
    %v1804 = vunpack.c.l.b16 %v1187
    %v1805 = vunpack.c.l.b16 %v1188
    %v1806 = vunpack.c.h.b16 %v1188
    %v1807 = vunpack.c.l.b16 %v1189
    %v1808 = vunpack.c.l.b16 %v1190
    %v1809 = vunpack.c.h.b16 %v1190
    %v1810 = vunpack.c.l.b16 %v1191
    %v1811 = vunpack.c.l.b16 %v1192
    %v1812 = vunpack.c.h.b16 %v1192
    %v1813 = vunpack.c.l.b16 %v1193
    %v1814 = vunpack.c.l.b16 %v1194
    %v1815 = vunpack.c.h.b16 %v1194
    %v1816 = vunpack.c.l.b16 %v1195
    %v1817 = vunpack.c.l.b16 %v1196
    %v1818 = vunpack.c.h.b16 %v1196
    %v1819 = vunpack.c.l.b16 %v1197
    %v1820 = vunpack.c.l.b16 %v1198
    %v1821 = vunpack.c.h.b16 %v1198
    %v1822 = vunpack.c.l.b16 %v1199
    %v1823 = vunpack.c.l.b16 %v1200
    %v1824 = vunpack.c.h.b16 %v1200
    %v1825 = vunpack.c.l.b16 %v1201
    %v1826 = vunpack.c.l.b16 %v1202
    %v1827 = vunpack.c.h.b16 %v1202
    %v1828 = vunpack.c.l.b16 %v1203
    %v1829 = vunpack.c.l.b16 %v1204
    %v1830 = vunpack.c.h.b16 %v1204
    %v1831 = vunpack.c.l.b16 %v1205
    %v1832 = vunpack.c.l.b16 %v1206
    %v1833 = vunpack.c.h.b16 %v1206
    %v1834 = vunpack.c.l.b16 %v1207
    %v1835 = vunpack.c.l.b16 %v1208
    %v1836 = vunpack.c.h.b16 %v1208
    %v1837 = vunpack.c.l.b16 %v1209
    %v1838 = vunpack.c.l.b16 %v1210
    %v1839 = vunpack.c.h.b16 %v1210
    %v1840 = vunpack.c.l.b16 %v1211
    %v1841 = vunpack.c.l.b16 %v1212
    %v1842 = vunpack.c.h.b16 %v1212
    %v1843 = vunpack.c.l.b16 %v1213
    %v1844 = vunpack.c.l.b16 %v1214
    %v1845 = vunpack.c.h.b16 %v1214
    %v1846 = vunpack.c.l.b16 %v1215
    %v1847 = vunpack.c.l.b16 %v1216
    %v1848 = vunpack.c.h.b16 %v1216
    %v1849 = vunpack.c.l.b16 %v1217
    %v1850 = vunpack.c.l.b16 %v1218
    %v1851 = vunpack.c.h.b16 %v1218
    %v1852 = vunpack.c.l.b16 %v1219
    %v1853 = vunpack.c.l.b16 %v1220
    %v1854 = vunpack.c.h.b16 %v1220
    %v1855 = vunpack.c.l.b16 %v1221
    %v1856 = vunpack.c.l.b16 %v1222
    %v1857 = vunpack.c.h.b16 %v1222
    %v1858 = vunpack.c.l.b16 %v1223
    %v1859 = vunpack.c.l.b16 %v1224
    %v1860 = vunpack.c.h.b16 %v1224
    %v1861 = vunpack.c.l.b16 %v1225
    %v1862 = vunpack.c.l.b16 %v1226
    %v1863 = vunpack.c.h.b16 %v1226
    %v1864 = vunpack.c.l.b16 %v1227
    %v1865 = vunpack.c.l.b16 %v1228
    %v1866 = vunpack.c.h.b16 %v1228
    %v1867 = vunpack.c.l.b16 %v1229
    %v1868 = vunpack.c.l.b16 %v1230
    %v1869 = vunpack.c.h.b16 %v1230
    %v1870 = vunpack.c.l.b16 %v1231
    %v1871 = vunpack.c.l.b16 %v1232
    %v1872 = vunpack.c.h.b16 %v1232
    %v1873 = vunpack.c.l.b16 %v1233
    %v1874 = vunpack.c.l.b16 %v1234
    %v1875 = vunpack.c.h.b16 %v1234
    %v1876 = vunpack.c.l.b16 %v1235
    %v1877 = vunpack.c.l.b16 %v1236
    %v1878 = vunpack.c.h.b16 %v1236
    %v1879 = vunpack.c.l.b16 %v1237
    %v1880 = vunpack.c.l.b16 %v1238
    %v1881 = vunpack.c.h.b16 %v1238
    %v1882 = vunpack.c.l.b16 %v1239
    %v1883 = vunpack.c.l.b16 %v1240
    %v1884 = vunpack.c.h.b16 %v1240
    %v1885 = vunpack.c.l.b16 %v1241
    %v1886 = vunpack.c.l.b16 %v1242
    %v1887 = vunpack.c.h.b16 %v1242
    %v1888 = vunpack.c.l.b16 %v1243
    %v1889 = vunpack.c.l.b16 %v1244
    %v1890 = vunpack.c.h.b16 %v1244
    %v1891 = vunpack.c.l.b16 %v1245
    %v1892 = vunpack.c.l.b16 %v1246
    %v1893 = vunpack.c.h.b16 %v1246
    %v1894 = vunpack.c.l.b16 %v1247
    %v1895 = vunpack.c.l.b16 %v1248
    %v1896 = vunpack.c.h.b16 %v1248
    %v1897 = vunpack.c.l.b16 %v1249
    %v1898 = vunpack.c.l.b16 %v1250
    %v1899 = vunpack.c.h.b16 %v1250
    %v1900 = vunpack.c.l.b16 %v1251
    %v1901 = vunpack.c.l.b16 %v1252
    %v1902 = vunpack.c.h.b16 %v1252
    %v1903 = vunpack.c.l.b16 %v1253
    %v1904 = vunpack.c.l.b16 %v1254
    %v1905 = vunpack.c.h.b16 %v1254
    %v1906 = vunpack.c.l.b16 %v1255
    %v1907 = vunpack.c.l.b16 %v1256
    %v1908 = vunpack.c.h.b16 %v1256
    %v1909 = vunpack.c.l.b16 %v1257
    %v1910 = vunpack.c.l.b16 %v1258
    %v1911 = vunpack.c.h.b16 %v1258
    %v1912 = vunpack.c.l.b16 %v1259
    %v1913 = vunpack.c.l.b16 %v1260
    %v1914 = vunpack.c.h.b16 %v1260
    %v1915 = vunpack.c.l.b16 %v1261
    %v1916 = vunpack.c.l.b16 %v1262
    %v1917 = vunpack.c.h.b16 %v1262
    %v1918 = vunpack.c.l.b16 %v1263
    %v1919 = vunpack.c.l.b16 %v1264
    %v1920 = vunpack.c.h.b16 %v1264
    %v1921 = vunpack.c.l.b16 %v1265
    %v1922 = vunpack.c.l.b16 %v1266
    %v1923 = vunpack.c.h.b16 %v1266
    %v1924 = vunpack.c.l.b16 %v1267
    %v1925 = vpack.c.b16 %v1544, %v1541
    %v1926 = vpack.c.b16 %v1545, %v1542
    %v1927 = vpack.c.b16 %v1546, %v1543
    %v1928 = vpack.c.b16 %v1550, %v1547
    %v1929 = vpack.c.b16 %v1551, %v1548
    %v1930 = vpack.c.b16 %v1552, %v1549
    %v1931 = vpack.c.b16 %v1556, %v1553
    %v1932 = vpack.c.b16 %v1557, %v1554
    %v1933 = vpack.c.b16 %v1558, %v1555
    %v1934 = vpack.c.b16 %v1562, %v1559
    %v1935 = vpack.c.b16 %v1563, %v1560
    %v1936 = vpack.c.b16 %v1564, %v1561
    %v1937 = vpack.c.b16 %v1568, %v1565
    %v1938 = vpack.c.b16 %v1569, %v1566
    %v1939 = vpack.c.b16 %v1570, %v1567
    %v1940 = vpack.c.b16 %v1574, %v1571
    %v1941 = vpack.c.b16 %v1575, %v1572
    %v1942 = vpack.c.b16 %v1576, %v1573
    %v1943 = vpack.c.b16 %v1580, %v1577
    %v1944 = vpack.c.b16 %v1581, %v1578
    %v1945 = vpack.c.b16 %v1582, %v1579
    %v1946 = vpack.c.b16 %v1586, %v1583
    %v1947 = vpack.c.b16 %v1587, %v1584
    %v1948 = vpack.c.b16 %v1588, %v1585
    %v1949 = vpack.c.b16 %v1592, %v1589
    %v1950 = vpack.c.b16 %v1593, %v1590
    %v1951 = vpack.c.b16 %v1594, %v1591
    %v1952 = vpack.c.b16 %v1598, %v1595
    %v1953 = vpack.c.b16 %v1599, %v1596
    %v1954 = vpack.c.b16 %v1600, %v1597
    %v1955 = vpack.c.b16 %v1604, %v1601
    %v1956 = vpack.c.b16 %v1605, %v1602
    %v1957 = vpack.c.b16 %v1606, %v1603
    %v1958 = vpack.c.b16 %v1610, %v1607
    %v1959 = vpack.c.b16 %v1611, %v1608
    %v1960 = vpack.c.b16 %v1612, %v1609
    %v1961 = vpack.c.b16 %v1616, %v1613
    %v1962 = vpack.c.b16 %v1617, %v1614
    %v1963 = vpack.c.b16 %v1618, %v1615
    %v1964 = vpack.c.b16 %v1622, %v1619
    %v1965 = vpack.c.b16 %v1623, %v1620
    %v1966 = vpack.c.b16 %v1624, %v1621
    %v1967 = vpack.c.b16 %v1628, %v1625
    %v1968 = vpack.c.b16 %v1629, %v1626
    %v1969 = vpack.c.b16 %v1630, %v1627
    %v1970 = vpack.c.b16 %v1634, %v1631
    %v1971 = vpack.c.b16 %v1635, %v1632
    %v1972 = vpack.c.b16 %v1636, %v1633
    %v1973 = vpack.c.b16 %v1640, %v1637
    %v1974 = vpack.c.b16 %v1641, %v1638
    %v1975 = vpack.c.b16 %v1642, %v1639
    %v1976 = vpack.c.b16 %v1646, %v1643
    %v1977 = vpack.c.b16 %v1647, %v1644
    %v1978 = vpack.c.b16 %v1648, %v1645
    %v1979 = vpack.c.b16 %v1652, %v1649
    %v1980 = vpack.c.b16 %v1653, %v1650
    %v1981 = vpack.c.b16 %v1654, %v1651
    %v1982 = vpack.c.b16 %v1658, %v1655
    %v1983 = vpack.c.b16 %v1659, %v1656
    %v1984 = vpack.c.b16 %v1660, %v1657
    %v1985 = vpack.c.b16 %v1664, %v1661
    %v1986 = vpack.c.b16 %v1665, %v1662
    %v1987 = vpack.c.b16 %v1666, %v1663
    %v1988 = vpack.c.b16 %v1670, %v1667
    %v1989 = vpack.c.b16 %v1671, %v1668
    %v1990 = vpack.c.b16 %v1672, %v1669
    %v1991 = vpack.c.b16 %v1676, %v1673
    %v1992 = vpack.c.b16 %v1677, %v1674
    %v1993 = vpack.c.b16 %v1678, %v1675
    %v1994 = vpack.c.b16 %v1682, %v1679
    %v1995 = vpack.c.b16 %v1683, %v1680
    %v1996 = vpack.c.b16 %v1684, %v1681
    %v1997 = vpack.c.b16 %v1688, %v1685
    %v1998 = vpack.c.b16 %v1689, %v1686
    %v1999 = vpack.c.b16 %v1690, %v1687
    %v2000 = vpack.c.b16 %v1694, %v1691
    %v2001 = vpack.c.b16 %v1695, %v1692
    %v2002 = vpack.c.b16 %v1696, %v1693
    %v2003 = vpack.c.b16 %v1700, %v1697
    %v2004 = vpack.c.b16 %v1701, %v1698
    %v2005 = vpack.c.b16 %v1702, %v1699
    %v2006 = vpack.c.b16 %v1706, %v1703
    %v2007 = vpack.c.b16 %v1707, %v1704
    %v2008 = vpack.c.b16 %v1708, %v1705
    %v2009 = vpack.c.b16 %v1712, %v1709
    %v2010 = vpack.c.b16 %v1713, %v1710
    %v2011 = vpack.c.b16 %v1714, %v1711
    %v2012 = vpack.c.b16 %v1718, %v1715
    %v2013 = vpack.c.b16 %v1719, %v1716
    %v2014 = vpack.c.b16 %v1720, %v1717
    %v2015 = vpack.c.b16 %v1724, %v1721
    %v2016 = vpack.c.b16 %v1725, %v1722
    %v2017 = vpack.c.b16 %v1726, %v1723
    %v2018 = vpack.c.b16 %v1730, %v1727
    %v2019 = vpack.c.b16 %v1731, %v1728
    %v2020 = vpack.c.b16 %v1732, %v1729
    %v2021 = vpack.c.b16 %v1736, %v1733
    %v2022 = vpack.c.b16 %v1737, %v1734
    %v2023 = vpack.c.b16 %v1738, %v1735
    %v2024 = vpack.c.b16 %v1742, %v1739
    %v2025 = vpack.c.b16 %v1743, %v1740
    %v2026 = vpack.c.b16 %v1744, %v1741
    %v2027 = vpack.c.b16 %v1748, %v1745
    %v2028 = vpack.c.b16 %v1749, %v1746
    %v2029 = vpack.c.b16 %v1750, %v1747
    %v2030 = vpack.c.b16 %v1754, %v1751
    %v2031 = vpack.c.b16 %v1755, %v1752
    %v2032 = vpack.c.b16 %v1756, %v1753
    %v2033 = vpack.c.b16 %v1760, %v1757
    %v2034 = vpack.c.b16 %v1761, %v1758
    %v2035 = vpack.c.b16 %v1762, %v1759
    %v2036 = vpack.c.b16 %v1766, %v1763
    %v2037 = vpack.c.b16 %v1767, %v1764
    %v2038 = vpack.c.b16 %v1768, %v1765
    %v2039 = vpack.c.b16 %v1772, %v1769
    %v2040 = vpack.c.b16 %v1773, %v1770
    %v2041 = vpack.c.b16 %v1774, %v1771
    %v2042 = vpack.c.b16 %v1778, %v1775
    %v2043 = vpack.c.b16 %v1779, %v1776
    %v2044 = vpack.c.b16 %v1780, %v1777
    %v2045 = vpack.c.b16 %v1784, %v1781
    %v2046 = vpack.c.b16 %v1785, %v1782
    %v2047 = vpack.c.b16 %v1786, %v1783
    %v2048 = vpack.c.b16 %v1790, %v1787
    %v2049 = vpack.c.b16 %v1791, %v1788
    %v2050 = vpack.c.b16 %v1792, %v1789
    %v2051 = vpack.c.b16 %v1796, %v1793
    %v2052 = vpack.c.b16 %v1797, %v1794
    %v2053 = vpack.c.b16 %v1798, %v1795
    %v2054 = vpack.c.b16 %v1802, %v1799
    %v2055 = vpack.c.b16 %v1803, %v1800
    %v2056 = vpack.c.b16 %v1804, %v1801
    %v2057 = vpack.c.b16 %v1808, %v1805
    %v2058 = vpack.c.b16 %v1809, %v1806
    %v2059 = vpack.c.b16 %v1810, %v1807
    %v2060 = vpack.c.b16 %v1814, %v1811
    %v2061 = vpack.c.b16 %v1815, %v1812
    %v2062 = vpack.c.b16 %v1816, %v1813
    %v2063 = vpack.c.b16 %v1820, %v1817
    %v2064 = vpack.c.b16 %v1821, %v1818
    %v2065 = vpack.c.b16 %v1822, %v1819
    %v2066 = vpack.c.b16 %v1826, %v1823
    %v2067 = vpack.c.b16 %v1827, %v1824
    %v2068 = vpack.c.b16 %v1828, %v1825
    %v2069 = vpack.c.b16 %v1832, %v1829
    %v2070 = vpack.c.b16 %v1833, %v1830
    %v2071 = vpack.c.b16 %v1834, %v1831
    %v2072 = vpack.c.b16 %v1838, %v1835
    %v2073 = vpack.c.b16 %v1839, %v1836
    %v2074 = vpack.c.b16 %v1840, %v1837
    %v2075 = vpack.c.b16 %v1844, %v1841
    %v2076 = vpack.c.b16 %v1845, %v1842
    %v2077 = vpack.c.b16 %v1846, %v1843
    %v2078 = vpack.c.b16 %v1850, %v1847
    %v2079 = vpack.c.b16 %v1851, %v1848
    %v2080 = vpack.c.b16 %v1852, %v1849
    %v2081 = vpack.c.b16 %v1856, %v1853
    %v2082 = vpack.c.b16 %v1857, %v1854
    %v2083 = vpack.c.b16 %v1858, %v1855
    %v2084 = vpack.c.b16 %v1862, %v1859
    %v2085 = vpack.c.b16 %v1863, %v1860
    %v2086 = vpack.c.b16 %v1864, %v1861
    %v2087 = vpack.c.b16 %v1868, %v1865
    %v2088 = vpack.c.b16 %v1869, %v1866
    %v2089 = vpack.c.b16 %v1870, %v1867
    %v2090 = vpack.c.b16 %v1874, %v1871
    %v2091 = vpack.c.b16 %v1875, %v1872
    %v2092 = vpack.c.b16 %v1876, %v1873
    %v2093 = vpack.c.b16 %v1880, %v1877
    %v2094 = vpack.c.b16 %v1881, %v1878
    %v2095 = vpack.c.b16 %v1882, %v1879
    %v2096 = vpack.c.b16 %v1886, %v1883
    %v2097 = vpack.c.b16 %v1887, %v1884
    %v2098 = vpack.c.b16 %v1888, %v1885
    %v2099 = vpack.c.b16 %v1892, %v1889
    %v2100 = vpack.c.b16 %v1893, %v1890
    %v2101 = vpack.c.b16 %v1894, %v1891
    %v2102 = vpack.c.b16 %v1898, %v1895
    %v2103 = vpack.c.b16 %v1899, %v1896
    %v2104 = vpack.c.b16 %v1900, %v1897
    %v2105 = vpack.c.b16 %v1904, %v1901
    %v2106 = vpack.c.b16 %v1905, %v1902
    %v2107 = vpack.c.b16 %v1906, %v1903
    %v2108 = vpack.c.b16 %v1910, %v1907
    %v2109 = vpack.c.b16 %v1911, %v1908
    %v2110 = vpack.c.b16 %v1912, %v1909
    %v2111 = vpack.c.b16 %v1916, %v1913
    %v2112 = vpack.c.b16 %v1917, %v1914
    %v2113 = vpack.c.b16 %v1918, %v1915
    %v2114 = vpack.c.b16 %v1922, %v1919
    %v2115 = vpack.c.b16 %v1923, %v1920
    %v2116 = vpack.c.b16 %v1924, %v1921
    %2309 = vmatprep.subr.bf16.mxu0 %v1947
    %2310 = vmatpush1.bf16.msra.mxu0 %v1946
    %2311 = vmatprep.subr.bf16.mxu0 %v1944
    %2312 = vmatpush1.bf16.msra.mxu0 %v1943
    %2313 = vmatprep.subr.bf16.mxu0 %v1941
    %2314 = vmatpush1.bf16.msra.mxu0 %v1940
    %2315 = vmatprep.subr.bf16.mxu0 %v1938
    %2316 = vmatpush1.bf16.msra.mxu0 %v1937
    %2317 = vmatprep.subr.bf16.mxu0 %v1935
    %2318 = vmatpush1.bf16.msra.mxu0 %v1934
    %2319 = vmatprep.subr.bf16.mxu0 %v1932
    %2320 = vmatpush1.bf16.msra.mxu0 %v1931
    %2321 = vmatprep.subr.bf16.mxu0 %v1929
    %2322 = vmatpush1.bf16.msra.mxu0 %v1928
    %2323 = vmatprep.subr.bf16.mxu0 %v1926
    %2324 = vmatpush1.bf16.msra.mxu0 %v1925
    %2325 = vmatprep.subr.bf16.mxu0 %v1971
    %2326 = vmatpush2.bf16.msra.mxu0 %v1970
    %2327 = vmatprep.subr.bf16.mxu0 %v1968
    %2328 = vmatpush2.bf16.msra.mxu0 %v1967
    %2329 = vmatprep.subr.bf16.mxu0 %v1965
    %2330 = vmatpush2.bf16.msra.mxu0 %v1964
    %2331 = vmatprep.subr.bf16.mxu0 %v1962
    %2332 = vmatpush2.bf16.msra.mxu0 %v1961
    %2333 = vmatprep.subr.bf16.mxu0 %v1959
    %2334 = vmatpush2.bf16.msra.mxu0 %v1958
    %2335 = vmatprep.subr.bf16.mxu0 %v1956
    %2336 = vmatpush2.bf16.msra.mxu0 %v1955
    %2337 = vmatprep.subr.bf16.mxu0 %v1953
    %2338 = vmatpush2.bf16.msra.mxu0 %v1952
    %2339 = vmatprep.subr.bf16.mxu0 %v1950
    %2340 = vmatpush2.bf16.msra.mxu0 %v1949
    %2341 = vmatprep.mubr.bf16.mxu0 %v1005
    %2342 = vmatmul.mubr.bf16.gmra.mxu0 %v1004
    %v2343 = vpop.f32.mrf.mxu0
    %v2344 = vadd.f32 %v1273, %v2343
    %v2345 = vpop.f32.mrf.mxu0
    %v2346 = vadd.f32 %v1277, %v2345
    %v2347 = vpop.f32.mrf.mxu0
    %v2348 = vadd.f32 %v1273, %v2347
    %v2349 = vpop.f32.mrf.mxu0
    %v2350 = vadd.f32 %v1277, %v2349
    %2351 = vdwg.mxu0
    %2352 = vmatprep.subr.bf16.mxu0 %v1995
    %2353 = vmatpush1.bf16.msra.mxu0 %v1994
    %2354 = vmatprep.subr.bf16.mxu0 %v1992
    %2355 = vmatpush1.bf16.msra.mxu0 %v1991
    %2356 = vmatprep.subr.bf16.mxu0 %v1989
    %2357 = vmatpush1.bf16.msra.mxu0 %v1988
    %2358 = vmatprep.subr.bf16.mxu0 %v1986
    %2359 = vmatpush1.bf16.msra.mxu0 %v1985
    %2360 = vmatprep.subr.bf16.mxu0 %v1983
    %2361 = vmatpush1.bf16.msra.mxu0 %v1982
    %2362 = vmatprep.subr.bf16.mxu0 %v1980
    %2363 = vmatpush1.bf16.msra.mxu0 %v1979
    %2364 = vmatprep.subr.bf16.mxu0 %v1977
    %2365 = vmatpush1.bf16.msra.mxu0 %v1976
    %2366 = vmatprep.subr.bf16.mxu0 %v1974
    %2367 = vmatpush1.bf16.msra.mxu0 %v1973
    %2368 = vmatprep.subr.bf16.mxu0 %v2019
    %2369 = vmatpush2.bf16.msra.mxu0 %v2018
    %2370 = vmatprep.subr.bf16.mxu0 %v2016
    %2371 = vmatpush2.bf16.msra.mxu0 %v2015
    %2372 = vmatprep.subr.bf16.mxu0 %v2013
    %2373 = vmatpush2.bf16.msra.mxu0 %v2012
    %2374 = vmatprep.subr.bf16.mxu0 %v2010
    %2375 = vmatpush2.bf16.msra.mxu0 %v2009
    %2376 = vmatprep.subr.bf16.mxu0 %v2007
    %2377 = vmatpush2.bf16.msra.mxu0 %v2006
    %2378 = vmatprep.subr.bf16.mxu0 %v2004
    %2379 = vmatpush2.bf16.msra.mxu0 %v2003
    %2380 = vmatprep.subr.bf16.mxu0 %v2001
    %2381 = vmatpush2.bf16.msra.mxu0 %v2000
    %2382 = vmatprep.subr.bf16.mxu0 %v1998
    %2383 = vmatpush2.bf16.msra.mxu0 %v1997
    %2384 = vmatprep.mubr.bf16.mxu0 %v1007
    %2385 = vmatmul.mubr.bf16.gmra.mxu0 %v1006
    %v2386 = vpop.f32.mrf.mxu0
    %v2387 = vadd.f32 %v2344, %v2386
    %v2388 = vpop.f32.mrf.mxu0
    %v2389 = vadd.f32 %v2346, %v2388
    %v2390 = vpop.f32.mrf.mxu0
    %v2391 = vadd.f32 %v2348, %v2390
    %v2392 = vpop.f32.mrf.mxu0
    %v2393 = vadd.f32 %v2350, %v2392
    %2394 = vdwg.mxu0
    %2395 = vmatprep.subr.bf16.mxu0 %v2043
    %2396 = vmatpush1.bf16.msra.mxu0 %v2042
    %2397 = vmatprep.subr.bf16.mxu0 %v2040
    %2398 = vmatpush1.bf16.msra.mxu0 %v2039
    %2399 = vmatprep.subr.bf16.mxu0 %v2037
    %2400 = vmatpush1.bf16.msra.mxu0 %v2036
    %2401 = vmatprep.subr.bf16.mxu0 %v2034
    %2402 = vmatpush1.bf16.msra.mxu0 %v2033
    %2403 = vmatprep.subr.bf16.mxu0 %v2031
    %2404 = vmatpush1.bf16.msra.mxu0 %v2030
    %2405 = vmatprep.subr.bf16.mxu0 %v2028
    %2406 = vmatpush1.bf16.msra.mxu0 %v2027
    %2407 = vmatprep.subr.bf16.mxu0 %v2025
    %2408 = vmatpush1.bf16.msra.mxu0 %v2024
    %2409 = vmatprep.subr.bf16.mxu0 %v2022
    %2410 = vmatpush1.bf16.msra.mxu0 %v2021
    %2411 = vmatprep.subr.bf16.mxu0 %v2067
    %2412 = vmatpush2.bf16.msra.mxu0 %v2066
    %2413 = vmatprep.subr.bf16.mxu0 %v2064
    %2414 = vmatpush2.bf16.msra.mxu0 %v2063
    %2415 = vmatprep.subr.bf16.mxu0 %v2061
    %2416 = vmatpush2.bf16.msra.mxu0 %v2060
    %2417 = vmatprep.subr.bf16.mxu0 %v2058
    %2418 = vmatpush2.bf16.msra.mxu0 %v2057
    %2419 = vmatprep.subr.bf16.mxu0 %v2055
    %2420 = vmatpush2.bf16.msra.mxu0 %v2054
    %2421 = vmatprep.subr.bf16.mxu0 %v2052
    %2422 = vmatpush2.bf16.msra.mxu0 %v2051
    %2423 = vmatprep.subr.bf16.mxu0 %v2049
    %2424 = vmatpush2.bf16.msra.mxu0 %v2048
    %2425 = vmatprep.subr.bf16.mxu0 %v2046
    %2426 = vmatpush2.bf16.msra.mxu0 %v2045
    %2427 = vmatprep.mubr.bf16.mxu0 %v1009
    %2428 = vmatmul.mubr.bf16.gmra.mxu0 %v1008
    %v2429 = vpop.f32.mrf.mxu0
    %v2430 = vadd.f32 %v2387, %v2429
    %v2431 = vpop.f32.mrf.mxu0
    %v2432 = vadd.f32 %v2389, %v2431
    %v2433 = vpop.f32.mrf.mxu0
    %v2434 = vadd.f32 %v2391, %v2433
    %v2435 = vpop.f32.mrf.mxu0
    %v2436 = vadd.f32 %v2393, %v2435
    %2437 = vdwg.mxu0
    %2438 = vmatprep.subr.bf16.mxu0 %v2091
    %2439 = vmatpush1.bf16.msra.mxu0 %v2090
    %2440 = vmatprep.subr.bf16.mxu0 %v2088
    %2441 = vmatpush1.bf16.msra.mxu0 %v2087
    %2442 = vmatprep.subr.bf16.mxu0 %v2085
    %2443 = vmatpush1.bf16.msra.mxu0 %v2084
    %2444 = vmatprep.subr.bf16.mxu0 %v2082
    %2445 = vmatpush1.bf16.msra.mxu0 %v2081
    %2446 = vmatprep.subr.bf16.mxu0 %v2079
    %2447 = vmatpush1.bf16.msra.mxu0 %v2078
    %2448 = vmatprep.subr.bf16.mxu0 %v2076
    %2449 = vmatpush1.bf16.msra.mxu0 %v2075
    %2450 = vmatprep.subr.bf16.mxu0 %v2073
    %2451 = vmatpush1.bf16.msra.mxu0 %v2072
    %2452 = vmatprep.subr.bf16.mxu0 %v2070
    %2453 = vmatpush1.bf16.msra.mxu0 %v2069
    %2454 = vmatprep.subr.bf16.mxu0 %v2115
    %2455 = vmatpush2.bf16.msra.mxu0 %v2114
    %2456 = vmatprep.subr.bf16.mxu0 %v2112
    %2457 = vmatpush2.bf16.msra.mxu0 %v2111
    %2458 = vmatprep.subr.bf16.mxu0 %v2109
    %2459 = vmatpush2.bf16.msra.mxu0 %v2108
    %2460 = vmatprep.subr.bf16.mxu0 %v2106
    %2461 = vmatpush2.bf16.msra.mxu0 %v2105
    %2462 = vmatprep.subr.bf16.mxu0 %v2103
    %2463 = vmatpush2.bf16.msra.mxu0 %v2102
    %2464 = vmatprep.subr.bf16.mxu0 %v2100
    %2465 = vmatpush2.bf16.msra.mxu0 %v2099
    %2466 = vmatprep.subr.bf16.mxu0 %v2097
    %2467 = vmatpush2.bf16.msra.mxu0 %v2096
    %2468 = vmatprep.subr.bf16.mxu0 %v2094
    %2469 = vmatpush2.bf16.msra.mxu0 %v2093
    %2470 = vmatprep.mubr.bf16.mxu0 %v1011
    %2471 = vmatmul.mubr.bf16.gmra.mxu0 %v1010
    %v2472 = vpop.f32.mrf.mxu0
    %v2473 = vadd.f32 %v2430, %v2472
    %v2474 = vpop.f32.mrf.mxu0
    %v2475 = vadd.f32 %v2432, %v2474
    %v2476 = vpop.f32.mrf.mxu0
    %v2477 = vadd.f32 %v2434, %v2476
    %v2478 = vpop.f32.mrf.mxu0
    %v2479 = vadd.f32 %v2436, %v2478
    %2480 = vdwg.mxu0
    %2481 = vmatprep.subr.bf16.mxu0 0
    %2482 = vmatpush1.bf16.msra.mxu0 %v1948
    %2483 = vmatprep.subr.bf16.mxu0 0
    %2484 = vmatpush1.bf16.msra.mxu0 %v1945
    %2485 = vmatprep.subr.bf16.mxu0 0
    %2486 = vmatpush1.bf16.msra.mxu0 %v1942
    %2487 = vmatprep.subr.bf16.mxu0 0
    %2488 = vmatpush1.bf16.msra.mxu0 %v1939
    %2489 = vmatprep.subr.bf16.mxu0 0
    %2490 = vmatpush1.bf16.msra.mxu0 %v1936
    %2491 = vmatprep.subr.bf16.mxu0 0
    %2492 = vmatpush1.bf16.msra.mxu0 %v1933
    %2493 = vmatprep.subr.bf16.mxu0 0
    %2494 = vmatpush1.bf16.msra.mxu0 %v1930
    %2495 = vmatprep.subr.bf16.mxu0 0
    %2496 = vmatpush1.bf16.msra.mxu0 %v1927
    %2497 = vmatprep.subr.bf16.mxu0 0
    %2498 = vmatpush2.bf16.msra.mxu0 %v1972
    %2499 = vmatprep.subr.bf16.mxu0 0
    %2500 = vmatpush2.bf16.msra.mxu0 %v1969
    %2501 = vmatprep.subr.bf16.mxu0 0
    %2502 = vmatpush2.bf16.msra.mxu0 %v1966
    %2503 = vmatprep.subr.bf16.mxu0 0
    %2504 = vmatpush2.bf16.msra.mxu0 %v1963
    %2505 = vmatprep.subr.bf16.mxu0 0
    %2506 = vmatpush2.bf16.msra.mxu0 %v1960
    %2507 = vmatprep.subr.bf16.mxu0 0
    %2508 = vmatpush2.bf16.msra.mxu0 %v1957
    %2509 = vmatprep.subr.bf16.mxu0 0
    %2510 = vmatpush2.bf16.msra.mxu0 %v1954
    %2511 = vmatprep.subr.bf16.mxu0 0
    %2512 = vmatpush2.bf16.msra.mxu0 %v1951
    %2513 = vmatprep.mubr.bf16.mxu0 %v1005
    %2514 = vmatmul.mubr.bf16.gmra.mxu0 %v1004
    %v2515 = vpop.f32.mrf.mxu0
    %v2516 = vadd.f32 %v1281, %v2515
    %v2517 = vpop.f32.mrf.mxu0
    %v2518 = vpop.f32.mrf.mxu0
    %v2519 = vadd.f32 %v1281, %v2518
    %v2520 = vpop.f32.mrf.mxu0
    %2521 = vdwg.mxu0
    %2522 = vmatprep.subr.bf16.mxu0 0
    %2523 = vmatpush1.bf16.msra.mxu0 %v1996
    %2524 = vmatprep.subr.bf16.mxu0 0
    %2525 = vmatpush1.bf16.msra.mxu0 %v1993
    %2526 = vmatprep.subr.bf16.mxu0 0
    %2527 = vmatpush1.bf16.msra.mxu0 %v1990
    %2528 = vmatprep.subr.bf16.mxu0 0
    %2529 = vmatpush1.bf16.msra.mxu0 %v1987
    %2530 = vmatprep.subr.bf16.mxu0 0
    %2531 = vmatpush1.bf16.msra.mxu0 %v1984
    %2532 = vmatprep.subr.bf16.mxu0 0
    %2533 = vmatpush1.bf16.msra.mxu0 %v1981
    %2534 = vmatprep.subr.bf16.mxu0 0
    %2535 = vmatpush1.bf16.msra.mxu0 %v1978
    %2536 = vmatprep.subr.bf16.mxu0 0
    %2537 = vmatpush1.bf16.msra.mxu0 %v1975
    %2538 = vmatprep.subr.bf16.mxu0 0
    %2539 = vmatpush2.bf16.msra.mxu0 %v2020
    %2540 = vmatprep.subr.bf16.mxu0 0
    %2541 = vmatpush2.bf16.msra.mxu0 %v2017
    %2542 = vmatprep.subr.bf16.mxu0 0
    %2543 = vmatpush2.bf16.msra.mxu0 %v2014
    %2544 = vmatprep.subr.bf16.mxu0 0
    %2545 = vmatpush2.bf16.msra.mxu0 %v2011
    %2546 = vmatprep.subr.bf16.mxu0 0
    %2547 = vmatpush2.bf16.msra.mxu0 %v2008
    %2548 = vmatprep.subr.bf16.mxu0 0
    %2549 = vmatpush2.bf16.msra.mxu0 %v2005
    %2550 = vmatprep.subr.bf16.mxu0 0
    %2551 = vmatpush2.bf16.msra.mxu0 %v2002
    %2552 = vmatprep.subr.bf16.mxu0 0
    %2553 = vmatpush2.bf16.msra.mxu0 %v1999
    %2554 = vmatprep.mubr.bf16.mxu0 %v1007
    %2555 = vmatmul.mubr.bf16.gmra.mxu0 %v1006
    %v2556 = vpop.f32.mrf.mxu0
    %v2557 = vadd.f32 %v2516, %v2556
    %v2558 = vpop.f32.mrf.mxu0
    %v2559 = vpop.f32.mrf.mxu0
    %v2560 = vadd.f32 %v2519, %v2559
    %v2561 = vpop.f32.mrf.mxu0
    %2562 = vdwg.mxu0
    %2563 = vmatprep.subr.bf16.mxu0 0
    %2564 = vmatpush1.bf16.msra.mxu0 %v2044
    %2565 = vmatprep.subr.bf16.mxu0 0
    %2566 = vmatpush1.bf16.msra.mxu0 %v2041
    %2567 = vmatprep.subr.bf16.mxu0 0
    %2568 = vmatpush1.bf16.msra.mxu0 %v2038
    %2569 = vmatprep.subr.bf16.mxu0 0
    %2570 = vmatpush1.bf16.msra.mxu0 %v2035
    %2571 = vmatprep.subr.bf16.mxu0 0
    %2572 = vmatpush1.bf16.msra.mxu0 %v2032
    %2573 = vmatprep.subr.bf16.mxu0 0
    %2574 = vmatpush1.bf16.msra.mxu0 %v2029
    %2575 = vmatprep.subr.bf16.mxu0 0
    %2576 = vmatpush1.bf16.msra.mxu0 %v2026
    %2577 = vmatprep.subr.bf16.mxu0 0
    %2578 = vmatpush1.bf16.msra.mxu0 %v2023
    %2579 = vmatprep.subr.bf16.mxu0 0
    %2580 = vmatpush2.bf16.msra.mxu0 %v2068
    %2581 = vmatprep.subr.bf16.mxu0 0
    %2582 = vmatpush2.bf16.msra.mxu0 %v2065
    %2583 = vmatprep.subr.bf16.mxu0 0
    %2584 = vmatpush2.bf16.msra.mxu0 %v2062
    %2585 = vmatprep.subr.bf16.mxu0 0
    %2586 = vmatpush2.bf16.msra.mxu0 %v2059
    %2587 = vmatprep.subr.bf16.mxu0 0
    %2588 = vmatpush2.bf16.msra.mxu0 %v2056
    %2589 = vmatprep.subr.bf16.mxu0 0
    %2590 = vmatpush2.bf16.msra.mxu0 %v2053
    %2591 = vmatprep.subr.bf16.mxu0 0
    %2592 = vmatpush2.bf16.msra.mxu0 %v2050
    %2593 = vmatprep.subr.bf16.mxu0 0
    %2594 = vmatpush2.bf16.msra.mxu0 %v2047
    %2595 = vmatprep.mubr.bf16.mxu0 %v1009
    %2596 = vmatmul.mubr.bf16.gmra.mxu0 %v1008
    %v2597 = vpop.f32.mrf.mxu0
    %v2598 = vadd.f32 %v2557, %v2597
    %v2599 = vpop.f32.mrf.mxu0
    %v2600 = vpop.f32.mrf.mxu0
    %v2601 = vadd.f32 %v2560, %v2600
    %v2602 = vpop.f32.mrf.mxu0
    %2603 = vdwg.mxu0
    %2604 = vmatprep.subr.bf16.mxu0 0
    %2605 = vmatpush1.bf16.msra.mxu0 %v2092
    %2606 = vmatprep.subr.bf16.mxu0 0
    %2607 = vmatpush1.bf16.msra.mxu0 %v2089
    %2608 = vmatprep.subr.bf16.mxu0 0
    %2609 = vmatpush1.bf16.msra.mxu0 %v2086
    %2610 = vmatprep.subr.bf16.mxu0 0
    %2611 = vmatpush1.bf16.msra.mxu0 %v2083
    %2612 = vmatprep.subr.bf16.mxu0 0
    %2613 = vmatpush1.bf16.msra.mxu0 %v2080
    %2614 = vmatprep.subr.bf16.mxu0 0
    %2615 = vmatpush1.bf16.msra.mxu0 %v2077
    %2616 = vmatprep.subr.bf16.mxu0 0
    %2617 = vmatpush1.bf16.msra.mxu0 %v2074
    %2618 = vmatprep.subr.bf16.mxu0 0
    %2619 = vmatpush1.bf16.msra.mxu0 %v2071
    %2620 = vmatprep.subr.bf16.mxu0 0
    %2621 = vmatpush2.bf16.msra.mxu0 %v2116
    %2622 = vmatprep.subr.bf16.mxu0 0
    %2623 = vmatpush2.bf16.msra.mxu0 %v2113
    %2624 = vmatprep.subr.bf16.mxu0 0
    %2625 = vmatpush2.bf16.msra.mxu0 %v2110
    %2626 = vmatprep.subr.bf16.mxu0 0
    %2627 = vmatpush2.bf16.msra.mxu0 %v2107
    %2628 = vmatprep.subr.bf16.mxu0 0
    %2629 = vmatpush2.bf16.msra.mxu0 %v2104
    %2630 = vmatprep.subr.bf16.mxu0 0
    %2631 = vmatpush2.bf16.msra.mxu0 %v2101
    %2632 = vmatprep.subr.bf16.mxu0 0
    %2633 = vmatpush2.bf16.msra.mxu0 %v2098
    %2634 = vmatprep.subr.bf16.mxu0 0
    %2635 = vmatpush2.bf16.msra.mxu0 %v2095
    %2636 = vmatprep.mubr.bf16.mxu0 %v1011
    %2637 = vmatmul.mubr.bf16.gmra.mxu0 %v1010
    %v2638 = vpop.f32.mrf.mxu0
    %v2639 = vadd.f32 %v2598, %v2638
    %v2640 = vpop.f32.mrf.mxu0
    %v2641 = vpop.f32.mrf.mxu0
    %v2642 = vadd.f32 %v2601, %v2641
    %v2643 = vpop.f32.mrf.mxu0
    %2644 = vdwg.mxu0
    %2645 = vst [vmem:[#allocation14] sm:$0xff] %v2473
    %2646 = vst [vmem:[#allocation14 + $0x8] sm:$0xff] %v2475
    %2647 = vst [vmem:[#allocation14 + $0x10] sm:$0xff] %v2639
    %2648 = vst [vmem:[#allocation14 + $0x18] sm:$0xff] %v2477
    %2649 = vst [vmem:[#allocation14 + $0x20] sm:$0xff] %v2479
    %2650 = vst [vmem:[#allocation14 + $0x28] sm:$0xff] %v2642
    %v2651 = vpack.c.bf16 %v2477, %v2473
    %v2652 = vpack.c.bf16 %v2479, %v2475
    %v2653 = vpack.c.bf16 %v2642, %v2639
    %v2654 = vld [vmem:[#allocation13] sm:$0xff]
    %v2655 = vld [vmem:[#allocation13 + $0x8] sm:$0xff]
    %v2656 = vld [vmem:[#allocation13 + $0x10] sm:$0xff]
    %v2657 = vld [vmem:[#allocation13 + $0x18] sm:$0xff]
    %v2658 = vld [vmem:[#allocation13 + $0x20] sm:$0xff]
    %v2659 = vld [vmem:[#allocation13 + $0x28] sm:$0xff]
    %v2660 = vld [vmem:[#allocation13 + $0x30] sm:$0xff]
    %v2661 = vld [vmem:[#allocation13 + $0x38] sm:$0xff]
    %v2662 = vld [vmem:[#allocation13 + $0x40] sm:$0xff]
    %v2663 = vld [vmem:[#allocation13 + $0x48] sm:$0xff]
    %v2664 = vld [vmem:[#allocation13 + $0x50] sm:$0xff]
    %v2665 = vld [vmem:[#allocation13 + $0x58] sm:$0xff]
    %v2666 = vld [vmem:[#allocation13 + $0x60] sm:$0xff]
    %v2667 = vld [vmem:[#allocation13 + $0x68] sm:$0xff]
    %v2668 = vld [vmem:[#allocation13 + $0x70] sm:$0xff]
    %v2669 = vld [vmem:[#allocation13 + $0x78] sm:$0xff]
    %v2670 = vld [vmem:[#allocation13 + $0x80] sm:$0xff]
    %v2671 = vld [vmem:[#allocation13 + $0x88] sm:$0xff]
    %v2672 = vld [vmem:[#allocation13 + $0x90] sm:$0xff]
    %v2673 = vld [vmem:[#allocation13 + $0x98] sm:$0xff]
    %v2674 = vld [vmem:[#allocation13 + $0xa0] sm:$0xff]
    %v2675 = vld [vmem:[#allocation13 + $0xa8] sm:$0xff]
    %v2676 = vld [vmem:[#allocation13 + $0xb0] sm:$0xff]
    %v2677 = vld [vmem:[#allocation13 + $0xb8] sm:$0xff]
    %v2678 = vld [vmem:[#allocation13 + $0xc0] sm:$0xff]
    %v2679 = vld [vmem:[#allocation13 + $0xc8] sm:$0xff]
    %v2680 = vld [vmem:[#allocation13 + $0xd0] sm:$0xff]
    %v2681 = vld [vmem:[#allocation13 + $0xd8] sm:$0xff]
    %v2682 = vld [vmem:[#allocation13 + $0xe0] sm:$0xff]
    %v2683 = vld [vmem:[#allocation13 + $0xe8] sm:$0xff]
    %v2684 = vld [vmem:[#allocation13 + $0xf0] sm:$0xff]
    %v2685 = vld [vmem:[#allocation13 + $0xf8] sm:$0xff]
    %v2686 = vld [vmem:[#allocation13 + $0x100] sm:$0xff]
    %v2687 = vld [vmem:[#allocation13 + $0x108] sm:$0xff]
    %v2688 = vld [vmem:[#allocation13 + $0x110] sm:$0xff]
    %v2689 = vld [vmem:[#allocation13 + $0x118] sm:$0xff]
    %v2690 = vld [vmem:[#allocation13 + $0x120] sm:$0xff]
    %v2691 = vld [vmem:[#allocation13 + $0x128] sm:$0xff]
    %v2692 = vld [vmem:[#allocation13 + $0x130] sm:$0xff]
    %v2693 = vld [vmem:[#allocation13 + $0x138] sm:$0xff]
    %v2694 = vld [vmem:[#allocation13 + $0x140] sm:$0xff]
    %v2695 = vld [vmem:[#allocation13 + $0x148] sm:$0xff]
    %v2696 = vld [vmem:[#allocation13 + $0x150] sm:$0xff]
    %v2697 = vld [vmem:[#allocation13 + $0x158] sm:$0xff]
    %v2698 = vld [vmem:[#allocation13 + $0x160] sm:$0xff]
    %v2699 = vld [vmem:[#allocation13 + $0x168] sm:$0xff]
    %v2700 = vld [vmem:[#allocation13 + $0x170] sm:$0xff]
    %v2701 = vld [vmem:[#allocation13 + $0x178] sm:$0xff]
    %v2702 = vld [vmem:[%s10] sm:$0x3]
    %v2704 = vlaneseq
    %v2705 = vshrl.u32 %v2704, 7
    %v2706 = vsub.s32 0, %v2705
    %v2707 = vrot.slane %v2702, %v2706
    %v2708 = vlaneseq
    %v2709 = vshrl.u32 %v2708, 7
    %v2710 = vsub.s32 1, %v2709
    %v2711 = vrot.slane %v2702, %v2710
    %v2762 = vunpack.c.l.b16 %v2654
    %v2763 = vunpack.c.h.b16 %v2654
    %v2764 = vunpack.c.l.b16 %v2655
    %v2765 = vunpack.c.h.b16 %v2655
    %v2766 = vunpack.c.l.b16 %v2656
    %v2767 = vunpack.c.h.b16 %v2656
    %v2768 = vunpack.c.l.b16 %v2657
    %v2769 = vunpack.c.h.b16 %v2657
    %v2770 = vunpack.c.l.b16 %v2658
    %v2771 = vunpack.c.h.b16 %v2658
    %v2772 = vunpack.c.l.b16 %v2659
    %v2773 = vunpack.c.h.b16 %v2659
    %v2774 = vunpack.c.l.b16 %v2660
    %v2775 = vunpack.c.h.b16 %v2660
    %v2776 = vunpack.c.l.b16 %v2661
    %v2777 = vunpack.c.h.b16 %v2661
    %v2778 = vunpack.c.l.b16 %v2662
    %v2779 = vunpack.c.h.b16 %v2662
    %v2780 = vunpack.c.l.b16 %v2663
    %v2781 = vunpack.c.h.b16 %v2663
    %v2782 = vunpack.c.l.b16 %v2664
    %v2783 = vunpack.c.h.b16 %v2664
    %v2784 = vunpack.c.l.b16 %v2665
    %v2785 = vunpack.c.h.b16 %v2665
    %v2786 = vunpack.c.l.b16 %v2666
    %v2787 = vunpack.c.h.b16 %v2666
    %v2788 = vunpack.c.l.b16 %v2667
    %v2789 = vunpack.c.h.b16 %v2667
    %v2790 = vunpack.c.l.b16 %v2668
    %v2791 = vunpack.c.h.b16 %v2668
    %v2792 = vunpack.c.l.b16 %v2669
    %v2793 = vunpack.c.h.b16 %v2669
    %v2794 = vunpack.c.l.b16 %v2670
    %v2795 = vunpack.c.h.b16 %v2670
    %v2796 = vunpack.c.l.b16 %v2671
    %v2797 = vunpack.c.h.b16 %v2671
    %v2798 = vunpack.c.l.b16 %v2672
    %v2799 = vunpack.c.h.b16 %v2672
    %v2800 = vunpack.c.l.b16 %v2673
    %v2801 = vunpack.c.h.b16 %v2673
    %v2802 = vunpack.c.l.b16 %v2674
    %v2803 = vunpack.c.h.b16 %v2674
    %v2804 = vunpack.c.l.b16 %v2675
    %v2805 = vunpack.c.h.b16 %v2675
    %v2806 = vunpack.c.l.b16 %v2676
    %v2807 = vunpack.c.h.b16 %v2676
    %v2808 = vunpack.c.l.b16 %v2677
    %v2809 = vunpack.c.h.b16 %v2677
    %v2810 = vunpack.c.l.b16 %v2678
    %v2811 = vunpack.c.h.b16 %v2678
    %v2812 = vunpack.c.l.b16 %v2679
    %v2813 = vunpack.c.h.b16 %v2679
    %v2814 = vunpack.c.l.b16 %v2680
    %v2815 = vunpack.c.h.b16 %v2680
    %v2816 = vunpack.c.l.b16 %v2681
    %v2817 = vunpack.c.h.b16 %v2681
    %v2818 = vunpack.c.l.b16 %v2682
    %v2819 = vunpack.c.h.b16 %v2682
    %v2820 = vunpack.c.l.b16 %v2683
    %v2821 = vunpack.c.h.b16 %v2683
    %v2822 = vunpack.c.l.b16 %v2684
    %v2823 = vunpack.c.h.b16 %v2684
    %v2824 = vunpack.c.l.b16 %v2685
    %v2825 = vunpack.c.h.b16 %v2685
    %v2826 = vunpack.c.l.b16 %v2686
    %v2827 = vunpack.c.h.b16 %v2686
    %v2828 = vunpack.c.l.b16 %v2687
    %v2829 = vunpack.c.h.b16 %v2687
    %v2830 = vunpack.c.l.b16 %v2688
    %v2831 = vunpack.c.h.b16 %v2688
    %v2832 = vunpack.c.l.b16 %v2689
    %v2833 = vunpack.c.h.b16 %v2689
    %v2834 = vunpack.c.l.b16 %v2690
    %v2835 = vunpack.c.h.b16 %v2690
    %v2836 = vunpack.c.l.b16 %v2691
    %v2837 = vunpack.c.h.b16 %v2691
    %v2838 = vunpack.c.l.b16 %v2692
    %v2839 = vunpack.c.h.b16 %v2692
    %v2840 = vunpack.c.l.b16 %v2693
    %v2841 = vunpack.c.h.b16 %v2693
    %v2842 = vunpack.c.l.b16 %v2694
    %v2843 = vunpack.c.h.b16 %v2694
    %v2844 = vunpack.c.l.b16 %v2695
    %v2845 = vunpack.c.h.b16 %v2695
    %v2846 = vunpack.c.l.b16 %v2696
    %v2847 = vunpack.c.h.b16 %v2696
    %v2848 = vunpack.c.l.b16 %v2697
    %v2849 = vunpack.c.h.b16 %v2697
    %v2850 = vunpack.c.l.b16 %v2698
    %v2851 = vunpack.c.h.b16 %v2698
    %v2852 = vunpack.c.l.b16 %v2699
    %v2853 = vunpack.c.h.b16 %v2699
    %v2854 = vunpack.c.l.b16 %v2700
    %v2855 = vunpack.c.h.b16 %v2700
    %v2856 = vunpack.c.l.b16 %v2701
    %v2857 = vunpack.c.h.b16 %v2701
    %v2858 = vpack.c.b16 %v2764, %v2762
    %v2859 = vpack.c.b16 %v2765, %v2763
    %v2860 = vpack.c.b16 %v2768, %v2766
    %v2861 = vpack.c.b16 %v2769, %v2767
    %v2862 = vpack.c.b16 %v2772, %v2770
    %v2863 = vpack.c.b16 %v2773, %v2771
    %v2864 = vpack.c.b16 %v2776, %v2774
    %v2865 = vpack.c.b16 %v2777, %v2775
    %v2866 = vpack.c.b16 %v2780, %v2778
    %v2867 = vpack.c.b16 %v2781, %v2779
    %v2868 = vpack.c.b16 %v2784, %v2782
    %v2869 = vpack.c.b16 %v2785, %v2783
    %v2870 = vpack.c.b16 %v2788, %v2786
    %v2871 = vpack.c.b16 %v2789, %v2787
    %v2872 = vpack.c.b16 %v2792, %v2790
    %v2873 = vpack.c.b16 %v2793, %v2791
    %v2874 = vpack.c.b16 %v2796, %v2794
    %v2875 = vpack.c.b16 %v2797, %v2795
    %v2876 = vpack.c.b16 %v2800, %v2798
    %v2877 = vpack.c.b16 %v2801, %v2799
    %v2878 = vpack.c.b16 %v2804, %v2802
    %v2879 = vpack.c.b16 %v2805, %v2803
    %v2880 = vpack.c.b16 %v2808, %v2806
    %v2881 = vpack.c.b16 %v2809, %v2807
    %v2882 = vpack.c.b16 %v2812, %v2810
    %v2883 = vpack.c.b16 %v2813, %v2811
    %v2884 = vpack.c.b16 %v2816, %v2814
    %v2885 = vpack.c.b16 %v2817, %v2815
    %v2886 = vpack.c.b16 %v2820, %v2818
    %v2887 = vpack.c.b16 %v2821, %v2819
    %v2888 = vpack.c.b16 %v2824, %v2822
    %v2889 = vpack.c.b16 %v2825, %v2823
    %v2890 = vpack.c.b16 %v2828, %v2826
    %v2891 = vpack.c.b16 %v2829, %v2827
    %v2892 = vpack.c.b16 %v2832, %v2830
    %v2893 = vpack.c.b16 %v2833, %v2831
    %v2894 = vpack.c.b16 %v2836, %v2834
    %v2895 = vpack.c.b16 %v2837, %v2835
    %v2896 = vpack.c.b16 %v2840, %v2838
    %v2897 = vpack.c.b16 %v2841, %v2839
    %v2898 = vpack.c.b16 %v2844, %v2842
    %v2899 = vpack.c.b16 %v2845, %v2843
    %v2900 = vpack.c.b16 %v2848, %v2846
    %v2901 = vpack.c.b16 %v2849, %v2847
    %v2902 = vpack.c.b16 %v2852, %v2850
    %v2903 = vpack.c.b16 %v2853, %v2851
    %v2904 = vpack.c.b16 %v2856, %v2854
    %v2905 = vpack.c.b16 %v2857, %v2855
    %2954 = vmatprep.subr.bf16.mxu0 %v2873
    %2955 = vmatpush1.bf16.msra.mxu0 %v2872
    %2956 = vmatprep.subr.bf16.mxu0 %v2871
    %2957 = vmatpush1.bf16.msra.mxu0 %v2870
    %2958 = vmatprep.subr.bf16.mxu0 %v2869
    %2959 = vmatpush1.bf16.msra.mxu0 %v2868
    %2960 = vmatprep.subr.bf16.mxu0 %v2867
    %2961 = vmatpush1.bf16.msra.mxu0 %v2866
    %2962 = vmatprep.subr.bf16.mxu0 %v2865
    %2963 = vmatpush1.bf16.msra.mxu0 %v2864
    %2964 = vmatprep.subr.bf16.mxu0 %v2863
    %2965 = vmatpush1.bf16.msra.mxu0 %v2862
    %2966 = vmatprep.subr.bf16.mxu0 %v2861
    %2967 = vmatpush1.bf16.msra.mxu0 %v2860
    %2968 = vmatprep.subr.bf16.mxu0 %v2859
    %2969 = vmatpush1.bf16.msra.mxu0 %v2858
    %2970 = vmatprep.subr.bf16.mxu0 %v2889
    %2971 = vmatpush2.bf16.msra.mxu0 %v2888
    %2972 = vmatprep.subr.bf16.mxu0 %v2887
    %2973 = vmatpush2.bf16.msra.mxu0 %v2886
    %2974 = vmatprep.subr.bf16.mxu0 %v2885
    %2975 = vmatpush2.bf16.msra.mxu0 %v2884
    %2976 = vmatprep.subr.bf16.mxu0 %v2883
    %2977 = vmatpush2.bf16.msra.mxu0 %v2882
    %2978 = vmatprep.subr.bf16.mxu0 %v2881
    %2979 = vmatpush2.bf16.msra.mxu0 %v2880
    %2980 = vmatprep.subr.bf16.mxu0 %v2879
    %2981 = vmatpush2.bf16.msra.mxu0 %v2878
    %2982 = vmatprep.subr.bf16.mxu0 %v2877
    %2983 = vmatpush2.bf16.msra.mxu0 %v2876
    %2984 = vmatprep.subr.bf16.mxu0 %v2875
    %2985 = vmatpush2.bf16.msra.mxu0 %v2874
    %2986 = vmatprep.mubr.bf16.mxu0 %v2652
    %2987 = vmatmul.mubr.bf16.gmra.mxu0 %v2651
    %v2988 = vpop.f32.mrf.mxu0
    %v2989 = vadd.f32 %v2707, %v2988
    %v2990 = vpop.f32.mrf.mxu0
    %v2991 = vadd.f32 %v2711, %v2990
    %v2992 = vpop.f32.mrf.mxu0
    %v2993 = vadd.f32 %v2707, %v2992
    %v2994 = vpop.f32.mrf.mxu0
    %v2995 = vadd.f32 %v2711, %v2994
    %2996 = vdwg.mxu0
    %2997 = vmatprep.subr.bf16.mxu0 %v2905
    %2998 = vmatpush1.bf16.msra.mxu0 %v2904
    %2999 = vmatprep.subr.bf16.mxu0 %v2903
    %3000 = vmatpush1.bf16.msra.mxu0 %v2902
    %3001 = vmatprep.subr.bf16.mxu0 %v2901
    %3002 = vmatpush1.bf16.msra.mxu0 %v2900
    %3003 = vmatprep.subr.bf16.mxu0 %v2899
    %3004 = vmatpush1.bf16.msra.mxu0 %v2898
    %3005 = vmatprep.subr.bf16.mxu0 %v2897
    %3006 = vmatpush1.bf16.msra.mxu0 %v2896
    %3007 = vmatprep.subr.bf16.mxu0 %v2895
    %3008 = vmatpush1.bf16.msra.mxu0 %v2894
    %3009 = vmatprep.subr.bf16.mxu0 %v2893
    %3010 = vmatpush1.bf16.msra.mxu0 %v2892
    %3011 = vmatprep.subr.bf16.mxu0 %v2891
    %3012 = vmatpush1.bf16.msra.mxu0 %v2890
    %3013 = vmatprep.subr.bf16.mxu0 0
    %3014 = vmatpush2.bf16.msra.mxu0 0
    %3015 = vmatprep.subr.bf16.mxu0 0
    %3016 = vmatpush2.bf16.msra.mxu0 0
    %3017 = vmatprep.subr.bf16.mxu0 0
    %3018 = vmatpush2.bf16.msra.mxu0 0
    %3019 = vmatprep.subr.bf16.mxu0 0
    %3020 = vmatpush2.bf16.msra.mxu0 0
    %3021 = vmatprep.subr.bf16.mxu0 0
    %3022 = vmatpush2.bf16.msra.mxu0 0
    %3023 = vmatprep.subr.bf16.mxu0 0
    %3024 = vmatpush2.bf16.msra.mxu0 0
    %3025 = vmatprep.subr.bf16.mxu0 0
    %3026 = vmatpush2.bf16.msra.mxu0 0
    %3027 = vmatprep.subr.bf16.mxu0 0
    %3028 = vmatpush2.bf16.msra.mxu0 0
    %3029 = vmatprep.mubr.bf16.mxu0 0
    %3030 = vmatmul.mubr.bf16.gmra.mxu0 %v2653
    %v3031 = vpop.f32.mrf.mxu0
    %v3032 = vadd.f32 %v2989, %v3031
    %v3033 = vpop.f32.mrf.mxu0
    %v3034 = vadd.f32 %v2991, %v3033
    %v3035 = vpop.f32.mrf.mxu0
    %v3036 = vadd.f32 %v2993, %v3035
    %v3037 = vpop.f32.mrf.mxu0
    %v3038 = vadd.f32 %v2995, %v3037
    %3039 = vdwg.mxu0
    %v3040 = vmax.f32 %v3032, %v3034
    %3041 = vmax.xlane.f32.xlu0 %v3040
    %v3042 = vpop.xlane.xlu0 %3041
    %v3043 = vmax.f32 %v3036, %v3038
    %3044 = vmax.xlane.f32.xlu0 %v3043
    %v3045 = vpop.xlane.xlu0 %3044
    %v3046 = vsub.f32 %v3032, %v3042
    %v3047 = vsub.f32 %v3034, %v3042
    %v3048 = vsub.f32 %v3036, %v3045
    %v3049 = vsub.f32 %v3038, %v3045
    %v3050 = vmul.f32 %v3046, 1.442695
    %v3051 = vpow.pop %v3050
    %v3052 = vmul.f32 %v3047, 1.442695
    %v3053 = vpow.pop %v3052
    %v3054 = vmul.f32 %v3048, 1.442695
    %v3055 = vpow.pop %v3054
    %v3056 = vmul.f32 %v3049, 1.442695
    %v3057 = vpow.pop %v3056
    %v3058 = vadd.f32 %v3051, %v3053
    %3059 = vadd.xlane.f32.xlu0 %v3058
    %v3060 = vpop.xlane.xlu0 %3059
    %v3061 = vadd.f32 %v3055, %v3057
    %3062 = vadd.xlane.f32.xlu0 %v3061
    %v3063 = vpop.xlane.xlu0 %3062
    %v3064 = vrcp.pop %v3060
    %v3065 = vrcp.pop %v3063
    %v3066 = vmul.f32 %v3051, %v3064
    %v3067 = vmul.f32 %v3053, %v3064
    %v3068 = vmul.f32 %v3055, %v3065
    %v3069 = vmul.f32 %v3057, %v3065
    %3070 = vst [vmem:[#allocation15] sm:$0xff] %v3066
    %3071 = vst [vmem:[#allocation15 + $0x8] sm:$0xff] %v3067
    %3072 = vst [vmem:[#allocation15 + $0x10] sm:$0xff] %v3068
    %3073 = vst [vmem:[#allocation15 + $0x18] sm:$0xff] %v3069
    // Predicated region
    $region74: #{tpu_custom_call.1} parent=1 // pred_check
      _
    $region75: #{tpu_custom_call.1} parent=1 // pred_check_branch
      %3075 = sbr.rel (0) target = $region77
    $region76: #{tpu_custom_call.1} parent=1 // pred_region
      %s3077 = ssub.s32 768, 768
      %3078 = vsyncadd [#allocation4], %s3077
      %s3079 = sshll.u32 [#allocation14], 4
      %s3080 = int_to_ptr.vmem [resolvable:$true] %s3079
      %3085 = dma.vmem_to_hbm [thread:$0]  %s3080, 768, %s11, [#allocation4], 384, 384, 24
    $region77: #{tpu_custom_call.1} parent=1 // pred_fallthru
      _
    // Predicated region
    $region78: #{tpu_custom_call.1} parent=1 // pred_check
      _
    $region79: #{tpu_custom_call.1} parent=1 // pred_check_branch
      %3087 = sbr.rel (0) target = $region81
    $region80: #{tpu_custom_call.1} parent=1 // pred_region
      %s3089 = ssub.s32 512, 512
      %3090 = vsyncadd [#allocation16], %s3089
      %s3091 = sshll.u32 [#allocation15], 4
      %s3092 = int_to_ptr.vmem [resolvable:$true] %s3091
      %3097 = dma.vmem_to_hbm [thread:$0]  %s3092, 512, %s12, [#allocation16], 256, 256, 16
    $region81: #{tpu_custom_call.1} parent=1 // pred_fallthru
      _
    // Predicated region
    $region82: #{tpu_custom_call.1} parent=1 // pred_check
      _
    $region83: #{tpu_custom_call.1} parent=1 // pred_check_branch
      %3099 = sbr.rel (0) target = $region85
    $region84: #{tpu_custom_call.1} parent=1 // pred_region
      %3100 = dma.done [#allocation4], 768
    $region85: #{tpu_custom_call.1} parent=1 // pred_fallthru
      _
    // Predicated region
    $region86: #{tpu_custom_call.1} parent=1 // pred_check
      _
    $region87: #{tpu_custom_call.1} parent=1 // pred_check_branch
      %3102 = sbr.rel (0) target = $region89
    $region88: #{tpu_custom_call.1} parent=1 // pred_region
      %3103 = dma.done [#allocation16], 512
    $region89: #{tpu_custom_call.1} parent=1 // pred_fallthru
      _
    %3104 = vsyncpa [#allocation3], 1
    %3105 = vsyncpa [#allocation6], 1
    %3106 = vsyncpa [#allocation9], 1
    %3107 = vsyncpa [#allocation12], 1
    %3108 = vsyncpa [#allocation4], 1
    %3109 = vsyncpa [#allocation16], 1

</llo_original>
